<compile_context>
chip_gen: v6e
topology: v6e:2x2x1
jax: 0.10.0
libtpu: 0.0.40
codegen_flags: <defaults>
</compile_context>

<pallas_src>
import functools
import math

import jax
import jax.numpy as jnp
from jax.experimental import pallas as pl
from jax.experimental.pallas import tpu as pltpu

LN_EPS = 1e-5  # nn.LayerNorm default (the module's layer_norm_eps arg is unused)


def _layer_norm(z, g, b):
    mu = jnp.mean(z, axis=-1, keepdims=True)
    d = z - mu
    var = jnp.mean(d * d, axis=-1, keepdims=True)
    return d * jax.lax.rsqrt(var + LN_EPS) * g + b


# --------------------------------------------------------------------------
# Fused ViViT kernel: grid axis = transformer layer index.
# --------------------------------------------------------------------------
def _vivit_kernel(
    # constant-block inputs
    patches_ref, convw_ref, pebias_ref,
    # per-layer stacked weights (block = one layer slice)
    wq_ref, bq_ref, wk_ref, bk_ref, wv_ref, bv_ref, wo_ref, bo_ref,
    ln1g_ref, ln1b_ref, w1_ref, b1_ref, w2_ref, b2_ref, ln2g_ref, ln2b_ref,
    # classifier head (constant blocks)
    clsg_ref, clsb_ref, headw_ref, headb_ref,
    # output
    out_ref,
    # scratch: resident token activations
    tok_ref,
    *, batch, num_patches, num_heads):
  l = pl.program_id(0)
  B, N, H = batch, num_patches, num_heads
  BN, E = tok_ref.shape
  Dh = E // H

  # ---- grid step 0: tubelet projection with fused (pos-encoding + bias) ----
  @pl.when(l == 0)
  def _():
    tok_ref[...] = (
        jnp.dot(patches_ref[...], convw_ref[...],
                preferred_element_type=jnp.float32)
        + pebias_ref[...])

  x = tok_ref[...]                                     # (BN, E) float32

  # ---- multi-head self-attention (sequence axis = original batch axis) ----
  q = jnp.dot(x, wq_ref[0], preferred_element_type=jnp.float32) + bq_ref[0]
  k = jnp.dot(x, wk_ref[0], preferred_element_type=jnp.float32) + bk_ref[0]
  v = jnp.dot(x, wv_ref[0], preferred_element_type=jnp.float32) + bv_ref[0]

  # group axis g = n * num_heads + h  (matches PyTorch's bsz*num_heads flatten)
  def to_gqd(t):
    t = t.reshape(B, N, H, Dh)
    return jnp.transpose(t, (1, 2, 0, 3)).reshape(N * H, B, Dh)

  qg = to_gqd(q) * (1.0 / math.sqrt(Dh))
  kg = to_gqd(k)
  vg = to_gqd(v)

  s = jnp.einsum("gqd,gkd->gqk", qg, kg, preferred_element_type=jnp.float32)
  s = s - jnp.max(s, axis=-1, keepdims=True)
  p = jnp.exp(s)
  p = p * pl.reciprocal(jnp.sum(p, axis=-1, keepdims=True), approx=True)
  ctx = jnp.einsum("gqk,gkd->gqd", p, vg, preferred_element_type=jnp.float32)
  ctx = jnp.transpose(ctx.reshape(N, H, B, Dh), (2, 0, 1, 3)).reshape(BN, E)

  attn = jnp.dot(ctx, wo_ref[0], preferred_element_type=jnp.float32) + bo_ref[0]

  y = _layer_norm(x + attn, ln1g_ref[0], ln1b_ref[0])

  # ---- feed-forward: Linear -> exact GELU -> Linear ----
  h = jnp.dot(y, w1_ref[0], preferred_element_type=jnp.float32) + b1_ref[0]
  h = 0.5 * h * (1.0 + jax.lax.erf(h * (1.0 / math.sqrt(2.0))))
  ff = jnp.dot(h, w2_ref[0], preferred_element_type=jnp.float32) + b2_ref[0]

  new_tok = _layer_norm(y + ff, ln2g_ref[0], ln2b_ref[0])
  tok_ref[...] = new_tok

  # ---- last grid step: mean over patches -> LayerNorm -> classifier ----
  @pl.when(l == pl.num_programs(0) - 1)
  def _():
    m = jnp.mean(new_tok.reshape(B, N, E), axis=1)     # (B, E)
    hc = _layer_norm(m, clsg_ref[...], clsb_ref[...])
    out_ref[...] = (
        jnp.dot(hc, headw_ref[...], preferred_element_type=jnp.float32)
        + headb_ref[...])


# --------------------------------------------------------------------------
# Parameters (PyTorch layout) + host-side packing into kernel layout.
# --------------------------------------------------------------------------
def positional_encoding(num_patches, embed_dim):
    position = jnp.arange(num_patches, dtype=jnp.float32)[:, None]
    div_term = jnp.exp(
        jnp.arange(0, embed_dim, 2, dtype=jnp.float32)
        * (-math.log(10000.0) / embed_dim))
    pe = jnp.zeros((num_patches, embed_dim), jnp.float32)
    pe = pe.at[:, 0::2].set(jnp.sin(position * div_term))
    pe = pe.at[:, 1::2].set(jnp.cos(position * div_term))
    return pe                                           # (N, E)


def init_params(key, input_shape, embed_dim, num_layers, num_classes,
                patch_size):
    """Parameters in PyTorch nn.Module layout."""
    C_in = input_shape[0]
    pt, ph, pw = patch_size
    keys = iter(jax.random.split(key, 4 + 4 * num_layers))

    def w(shape, scale=0.02):
        return scale * jax.random.normal(next(keys), shape, dtype=jnp.float32)

    params = {
        "conv_w": w((embed_dim, C_in, pt, ph, pw)),
        "conv_b": w((embed_dim,)),
        "layers": [],
        "cls_ln_g": jnp.ones((embed_dim,), jnp.float32),
        "cls_ln_b": jnp.zeros((embed_dim,), jnp.float32),
        "head_w": w((num_classes, embed_dim)),
        "head_b": jnp.zeros((num_classes,), jnp.float32),
    }
    for _ in range(num_layers):
        params["layers"].append({
            "in_proj_w": w((3 * embed_dim, embed_dim)),
            "in_proj_b": jnp.zeros((3 * embed_dim,), jnp.float32),
            "out_w": w((embed_dim, embed_dim)),
            "out_b": jnp.zeros((embed_dim,), jnp.float32),
            "ln1_g": jnp.ones((embed_dim,), jnp.float32),
            "ln1_b": jnp.zeros((embed_dim,), jnp.float32),
            "ff1_w": w((4 * embed_dim, embed_dim)),
            "ff1_b": jnp.zeros((4 * embed_dim,), jnp.float32),
            "ff2_w": w((embed_dim, 4 * embed_dim)),
            "ff2_b": jnp.zeros((embed_dim,), jnp.float32),
            "ln2_g": jnp.ones((embed_dim,), jnp.float32),
            "ln2_b": jnp.zeros((embed_dim,), jnp.float32),
        })
    return params


def pack_params(params, batch, num_patches):
    """Pre-transpose / stack weights so all kernel matmuls are (M,K)x(K,N)."""
    E = params["conv_w"].shape[0]
    conv_w = params["conv_w"].reshape(E, -1).T                     # (P, E)

    # Positional encoding is hoisted out of the forward and folded with the
    # conv bias into a single per-token additive term.
    pe = positional_encoding(num_patches, E)                       # (N, E)
    pe_bias = jnp.tile(pe + params["conv_b"][None, :], (batch, 1))  # (B*N, E)

    def stack(fn):
        return jnp.stack([fn(lp) for lp in params["layers"]])

    return {
        "conv_w": conv_w,
        "pe_bias": pe_bias,
        "wq": stack(lambda lp: lp["in_proj_w"][0 * E:1 * E].T),    # (L, E, E)
        "wk": stack(lambda lp: lp["in_proj_w"][1 * E:2 * E].T),
        "wv": stack(lambda lp: lp["in_proj_w"][2 * E:3 * E].T),
        "bq": stack(lambda lp: lp["in_proj_b"][0 * E:1 * E][None]),  # (L,1,E)
        "bk": stack(lambda lp: lp["in_proj_b"][1 * E:2 * E][None]),
        "bv": stack(lambda lp: lp["in_proj_b"][2 * E:3 * E][None]),
        "wo": stack(lambda lp: lp["out_w"].T),                     # (L, E, E)
        "bo": stack(lambda lp: lp["out_b"][None]),                 # (L, 1, E)
        "ln1_g": stack(lambda lp: lp["ln1_g"][None]),
        "ln1_b": stack(lambda lp: lp["ln1_b"][None]),
        "w1": stack(lambda lp: lp["ff1_w"].T),                     # (L, E, 4E)
        "b1": stack(lambda lp: lp["ff1_b"][None]),                 # (L, 1, 4E)
        "w2": stack(lambda lp: lp["ff2_w"].T),                     # (L, 4E, E)
        "b2": stack(lambda lp: lp["ff2_b"][None]),
        "ln2_g": stack(lambda lp: lp["ln2_g"][None]),
        "ln2_b": stack(lambda lp: lp["ln2_b"][None]),
        "cls_g": params["cls_ln_g"][None],                         # (1, E)
        "cls_b": params["cls_ln_b"][None],
        "head_w": params["head_w"].T,                              # (E, C)
        "head_b": params["head_b"][None],                          # (1, C)
    }


# --------------------------------------------------------------------------
# Forward: patch extraction (glue) + ONE fused pallas_call.
# --------------------------------------------------------------------------
def vivit_forward(videos, packed, *, patch_size, num_heads):
    B, C_in, T, H, W = videos.shape
    pt, ph, pw = patch_size
    Tn, Hn, Wn = T // pt, H // ph, W // pw
    N = Tn * Hn * Wn
    BN = B * N
    P = C_in * pt * ph * pw
    E = packed["conv_w"].shape[1]
    F = packed["w1"].shape[2]
    C = packed["head_w"].shape[1]
    L = packed["wq"].shape[0]

    # Tubelet (non-overlapping Conv3d) == patch extraction; matmul is in-kernel.
    x = videos.reshape(B, C_in, Tn, pt, Hn, ph, Wn, pw)
    patches = jnp.transpose(x, (0, 2, 4, 6, 1, 3, 5, 7)).reshape(BN, P)

    const2 = lambda l: (0, 0)
    lay3 = lambda l: (l, 0, 0)

    in_specs = [
        pl.BlockSpec((BN, P), const2),        # patches
        pl.BlockSpec((P, E), const2),         # conv_w (pre-transposed)
        pl.BlockSpec((BN, E), const2),        # pos-enc + conv bias
        pl.BlockSpec((1, E, E), lay3),        # wq
        pl.BlockSpec((1, 1, E), lay3),        # bq
        pl.BlockSpec((1, E, E), lay3),        # wk
        pl.BlockSpec((1, 1, E), lay3),        # bk
        pl.BlockSpec((1, E, E), lay3),        # wv
        pl.BlockSpec((1, 1, E), lay3),        # bv
        pl.BlockSpec((1, E, E), lay3),        # wo
        pl.BlockSpec((1, 1, E), lay3),        # bo
        pl.BlockSpec((1, 1, E), lay3),        # ln1_g
        pl.BlockSpec((1, 1, E), lay3),        # ln1_b
        pl.BlockSpec((1, E, F), lay3),        # w1
        pl.BlockSpec((1, 1, F), lay3),        # b1
        pl.BlockSpec((1, F, E), lay3),        # w2
        pl.BlockSpec((1, 1, E), lay3),        # b2
        pl.BlockSpec((1, 1, E), lay3),        # ln2_g
        pl.BlockSpec((1, 1, E), lay3),        # ln2_b
        pl.BlockSpec((1, E), const2),         # cls_g
        pl.BlockSpec((1, E), const2),         # cls_b
        pl.BlockSpec((E, C), const2),         # head_w (pre-transposed)
        pl.BlockSpec((1, C), const2),         # head_b
    ]

    grid_spec = pltpu.PrefetchScalarGridSpec(
        num_scalar_prefetch=0,
        grid=(L,),                            # layer loop, state carried in VMEM
        in_specs=in_specs,
        out_specs=pl.BlockSpec((B, C), const2),
        scratch_shapes=[pltpu.VMEM((BN, E), jnp.float32)],
    )

    kernel = functools.partial(
        _vivit_kernel, batch=B, num_patches=N, num_heads=num_heads)

    # TODO(synk): at real ViViT sizes, add a token-tile grid axis marked
    # "parallel" (v7x: 2 TCs, 64 MiB VMEM) and feed bf16 MXU operands on
    # v6e/v7x (keep LN/softmax stats in f32).
    return pl.pallas_call(
        kernel,
        out_shape=jax.ShapeDtypeStruct((B, C), jnp.float32),
        grid_spec=grid_spec,
        compiler_params=pltpu.CompilerParams(
            dimension_semantics=("arbitrary",)),
    )(patches, packed["conv_w"], packed["pe_bias"],
      packed["wq"], packed["bq"], packed["wk"], packed["bk"],
      packed["wv"], packed["bv"], packed["wo"], packed["bo"],
      packed["ln1_g"], packed["ln1_b"],
      packed["w1"], packed["b1"], packed["w2"], packed["b2"],
      packed["ln2_g"], packed["ln2_b"],
      packed["cls_g"], packed["cls_b"], packed["head_w"], packed["head_b"])


# --------------------------------------------------------------------------
if __name__ == "__main__":
    key = jax.random.PRNGKey(0)

    # Small, module-consistent config.
    input_shape = (1, 8, 16, 16)       # (C, T, H, W)
    patch_size = (4, 8, 8)             # -> num_patches = 2 * 2 * 2 = 8
    embed_dim = 32
    num_heads = 2
    num_layers = 2
    num_classes = 10
    batch = 2

    num_patches = (input_shape[1] // patch_size[0]
                   * (input_shape[2] // patch_size[1])
                   * (input_shape[3] // patch_size[2]))

    params = init_params(key, input_shape, embed_dim, num_layers,
                         num_classes, patch_size)
    packed = pack_params(params, batch, num_patches)

    videos = jax.random.normal(jax.random.fold_in(key, 123),
                               (batch,) + input_shape, dtype=jnp.float32)

    logits = vivit_forward(videos, packed,
                           patch_size=patch_size, num_heads=num_heads)
    logits = jax.block_until_ready(logits)
    assert logits.shape == (batch, num_classes)
    assert bool(jnp.all(jnp.isfinite(logits)))
    print("KERNEL_OK")
</pallas_src>

<mosaic_0001>
module attributes {stable_mosaic.version = 11 : i64} {
  func.func @_vivit_kernel(%arg0: i32, %arg1: memref<16x256xf32, #tpu.memory_space<vmem>>, %arg2: memref<256x32xf32, #tpu.memory_space<vmem>>, %arg3: memref<16x32xf32, #tpu.memory_space<vmem>>, %arg4: memref<1x32x32xf32, #tpu.memory_space<vmem>>, %arg5: memref<1x1x32xf32, #tpu.memory_space<vmem>>, %arg6: memref<1x32x32xf32, #tpu.memory_space<vmem>>, %arg7: memref<1x1x32xf32, #tpu.memory_space<vmem>>, %arg8: memref<1x32x32xf32, #tpu.memory_space<vmem>>, %arg9: memref<1x1x32xf32, #tpu.memory_space<vmem>>, %arg10: memref<1x32x32xf32, #tpu.memory_space<vmem>>, %arg11: memref<1x1x32xf32, #tpu.memory_space<vmem>>, %arg12: memref<1x1x32xf32, #tpu.memory_space<vmem>>, %arg13: memref<1x1x32xf32, #tpu.memory_space<vmem>>, %arg14: memref<1x32x128xf32, #tpu.memory_space<vmem>>, %arg15: memref<1x1x128xf32, #tpu.memory_space<vmem>>, %arg16: memref<1x128x32xf32, #tpu.memory_space<vmem>>, %arg17: memref<1x1x32xf32, #tpu.memory_space<vmem>>, %arg18: memref<1x1x32xf32, #tpu.memory_space<vmem>>, %arg19: memref<1x1x32xf32, #tpu.memory_space<vmem>>, %arg20: memref<1x32xf32, #tpu.memory_space<vmem>>, %arg21: memref<1x32xf32, #tpu.memory_space<vmem>>, %arg22: memref<32x10xf32, #tpu.memory_space<vmem>>, %arg23: memref<1x10xf32, #tpu.memory_space<vmem>>, %arg24: memref<2x10xf32, #tpu.memory_space<vmem>>, %arg25: memref<16x32xf32, #tpu.memory_space<vmem>>) attributes {dimension_semantics = [#tpu.dimension_semantics<arbitrary>], iteration_bounds = array<i64: 2>, scalar_prefetch = 0 : i64, scratch_operands = 1 : i64, tpu.core_type = #tpu.core_type<tc>, window_params = [{pipeline_mode = #tpu.pipeline_mode<synchronous>, transform_indices = @transform_0, window_bounds = array<i64: 16, 256>}, {pipeline_mode = #tpu.pipeline_mode<synchronous>, transform_indices = @transform_1, window_bounds = array<i64: 256, 32>}, {pipeline_mode = #tpu.pipeline_mode<synchronous>, transform_indices = @transform_2, window_bounds = array<i64: 16, 32>}, {transform_indices = @transform_3, window_bounds = array<i64: 1, 32, 32>}, {transform_indices = @transform_4, window_bounds = array<i64: 1, 1, 32>}, {transform_indices = @transform_5, window_bounds = array<i64: 1, 32, 32>}, {transform_indices = @transform_6, window_bounds = array<i64: 1, 1, 32>}, {transform_indices = @transform_7, window_bounds = array<i64: 1, 32, 32>}, {transform_indices = @transform_8, window_bounds = array<i64: 1, 1, 32>}, {transform_indices = @transform_9, window_bounds = array<i64: 1, 32, 32>}, {transform_indices = @transform_10, window_bounds = array<i64: 1, 1, 32>}, {transform_indices = @transform_11, window_bounds = array<i64: 1, 1, 32>}, {transform_indices = @transform_12, window_bounds = array<i64: 1, 1, 32>}, {transform_indices = @transform_13, window_bounds = array<i64: 1, 32, 128>}, {transform_indices = @transform_14, window_bounds = array<i64: 1, 1, 128>}, {transform_indices = @transform_15, window_bounds = array<i64: 1, 128, 32>}, {transform_indices = @transform_16, window_bounds = array<i64: 1, 1, 32>}, {transform_indices = @transform_17, window_bounds = array<i64: 1, 1, 32>}, {transform_indices = @transform_18, window_bounds = array<i64: 1, 1, 32>}, {pipeline_mode = #tpu.pipeline_mode<synchronous>, transform_indices = @transform_19, window_bounds = array<i64: 1, 32>}, {pipeline_mode = #tpu.pipeline_mode<synchronous>, transform_indices = @transform_20, window_bounds = array<i64: 1, 32>}, {pipeline_mode = #tpu.pipeline_mode<synchronous>, transform_indices = @transform_21, window_bounds = array<i64: 32, 10>}, {pipeline_mode = #tpu.pipeline_mode<synchronous>, transform_indices = @transform_22, window_bounds = array<i64: 1, 10>}, {pipeline_mode = #tpu.pipeline_mode<synchronous>, transform_indices = @transform_23, window_bounds = array<i64: 2, 10>}]} {
    %c0_i32 = arith.constant 0 : i32
    %0 = arith.cmpi eq, %arg0, %c0_i32 : i32
    %1 = arith.extui %0 : i1 to i32
    %c0_i32_0 = arith.constant 0 : i32
    %2 = arith.cmpi ne, %1, %c0_i32_0 : i32
    scf.if %2 {
      %c0_76 = arith.constant 0 : index
      %c0_77 = arith.constant 0 : index
      %134 = vector.load %arg1[%c0_76, %c0_77] : memref<16x256xf32, #tpu.memory_space<vmem>>, vector<16x256xf32>
      %c0_78 = arith.constant 0 : index
      %c0_79 = arith.constant 0 : index
      %135 = vector.load %arg2[%c0_78, %c0_79] : memref<256x32xf32, #tpu.memory_space<vmem>>, vector<256x32xf32>
      %cst_80 = arith.constant dense<0.000000e+00> : vector<16x32xf32>
      %136 = tpu.matmul %134, %135, %cst_80 {dimension_numbers = #tpu.dot_dimension_numbers<[1], [0], [0], [1], [0, 0, 1, 1], [], []>} : vector<16x256xf32>, vector<256x32xf32>, vector<16x32xf32> -> vector<16x32xf32>
      %c0_81 = arith.constant 0 : index
      %c0_82 = arith.constant 0 : index
      %137 = vector.load %arg3[%c0_81, %c0_82] : memref<16x32xf32, #tpu.memory_space<vmem>>, vector<16x32xf32>
      %138 = arith.addf %136, %137 : vector<16x32xf32>
      %c0_83 = arith.constant 0 : index
      %c0_84 = arith.constant 0 : index
      %139 = vector.load %arg25[%c0_83, %c0_84] : memref<16x32xf32, #tpu.memory_space<vmem>>, vector<16x32xf32>
      tpu.vector_store %arg25[%c0_83, %c0_84], %138 {strides = array<i32>} : memref<16x32xf32, #tpu.memory_space<vmem>>, vector<16x32xf32>,
    } else {
    }
    %c0 = arith.constant 0 : index
    %c0_1 = arith.constant 0 : index
    %3 = vector.load %arg25[%c0, %c0_1] : memref<16x32xf32, #tpu.memory_space<vmem>>, vector<16x32xf32>
    %c0_2 = arith.constant 0 : index
    %c0_3 = arith.constant 0 : index
    %c0_4 = arith.constant 0 : index
    %4 = vector.load %arg4[%c0_2, %c0_3, %c0_4] : memref<1x32x32xf32, #tpu.memory_space<vmem>>, vector<1x32x32xf32>
    %5 = vector.shape_cast %4 : vector<1x32x32xf32> to vector<32x32xf32>
    %cst = arith.constant dense<0.000000e+00> : vector<16x32xf32>
    %6 = tpu.matmul %3, %5, %cst {dimension_numbers = #tpu.dot_dimension_numbers<[1], [0], [0], [1], [0, 0, 1, 1], [], []>} : vector<16x32xf32>, vector<32x32xf32>, vector<16x32xf32> -> vector<16x32xf32>
    %c0_5 = arith.constant 0 : index
    %c0_6 = arith.constant 0 : index
    %c0_7 = arith.constant 0 : index
    %7 = vector.load %arg5[%c0_5, %c0_6, %c0_7] : memref<1x1x32xf32, #tpu.memory_space<vmem>>, vector<1x1x32xf32>
    %8 = vector.shape_cast %7 : vector<1x1x32xf32> to vector<1x32xf32>
    %9 = vector.broadcast %8 : vector<1x32xf32> to vector<16x32xf32>
    %10 = arith.addf %6, %9 : vector<16x32xf32>
    %c0_8 = arith.constant 0 : index
    %c0_9 = arith.constant 0 : index
    %c0_10 = arith.constant 0 : index
    %11 = vector.load %arg6[%c0_8, %c0_9, %c0_10] : memref<1x32x32xf32, #tpu.memory_space<vmem>>, vector<1x32x32xf32>
    %12 = vector.shape_cast %11 : vector<1x32x32xf32> to vector<32x32xf32>
    %cst_11 = arith.constant dense<0.000000e+00> : vector<16x32xf32>
    %13 = tpu.matmul %3, %12, %cst_11 {dimension_numbers = #tpu.dot_dimension_numbers<[1], [0], [0], [1], [0, 0, 1, 1], [], []>} : vector<16x32xf32>, vector<32x32xf32>, vector<16x32xf32> -> vector<16x32xf32>
    %c0_12 = arith.constant 0 : index
    %c0_13 = arith.constant 0 : index
    %c0_14 = arith.constant 0 : index
    %14 = vector.load %arg7[%c0_12, %c0_13, %c0_14] : memref<1x1x32xf32, #tpu.memory_space<vmem>>, vector<1x1x32xf32>
    %15 = vector.shape_cast %14 : vector<1x1x32xf32> to vector<1x32xf32>
    %16 = vector.broadcast %15 : vector<1x32xf32> to vector<16x32xf32>
    %17 = arith.addf %13, %16 : vector<16x32xf32>
    %c0_15 = arith.constant 0 : index
    %c0_16 = arith.constant 0 : index
    %c0_17 = arith.constant 0 : index
    %18 = vector.load %arg8[%c0_15, %c0_16, %c0_17] : memref<1x32x32xf32, #tpu.memory_space<vmem>>, vector<1x32x32xf32>
    %19 = vector.shape_cast %18 : vector<1x32x32xf32> to vector<32x32xf32>
    %cst_18 = arith.constant dense<0.000000e+00> : vector<16x32xf32>
    %20 = tpu.matmul %3, %19, %cst_18 {dimension_numbers = #tpu.dot_dimension_numbers<[1], [0], [0], [1], [0, 0, 1, 1], [], []>} : vector<16x32xf32>, vector<32x32xf32>, vector<16x32xf32> -> vector<16x32xf32>
    %c0_19 = arith.constant 0 : index
    %c0_20 = arith.constant 0 : index
    %c0_21 = arith.constant 0 : index
    %21 = vector.load %arg9[%c0_19, %c0_20, %c0_21] : memref<1x1x32xf32, #tpu.memory_space<vmem>>, vector<1x1x32xf32>
    %22 = vector.shape_cast %21 : vector<1x1x32xf32> to vector<1x32xf32>
    %23 = vector.broadcast %22 : vector<1x32xf32> to vector<16x32xf32>
    %24 = arith.addf %20, %23 : vector<16x32xf32>
    %25 = vector.shape_cast %10 : vector<16x32xf32> to vector<2x8x2x16xf32>
    %26 = tpu.transpose %25, [1, 2, 0, 3] : vector<2x8x2x16xf32> -> vector<8x2x2x16xf32>
    %27 = vector.shape_cast %26 : vector<8x2x2x16xf32> to vector<16x2x16xf32>
    %cst_22 = arith.constant 2.500000e-01 : f32
    %28 = vector.broadcast %cst_22 : f32 to vector<16x2x16xf32>
    %29 = arith.mulf %27, %28 : vector<16x2x16xf32>
    %30 = vector.shape_cast %17 : vector<16x32xf32> to vector<2x8x2x16xf32>
    %31 = tpu.transpose %30, [1, 2, 0, 3] : vector<2x8x2x16xf32> -> vector<8x2x2x16xf32>
    %32 = vector.shape_cast %31 : vector<8x2x2x16xf32> to vector<16x2x16xf32>
    %33 = vector.shape_cast %24 : vector<16x32xf32> to vector<2x8x2x16xf32>
    %34 = tpu.transpose %33, [1, 2, 0, 3] : vector<2x8x2x16xf32> -> vector<8x2x2x16xf32>
    %35 = vector.shape_cast %34 : vector<8x2x2x16xf32> to vector<16x2x16xf32>
    "tpu.trace_start"() <{level = 10 : i32, message = "gqd,gkd->gqk"}> : () -> ()
    %cst_23 = arith.constant dense<0.000000e+00> : vector<16x2x2xf32>
    %36 = tpu.matmul %29, %32, %cst_23 {dimension_numbers = #tpu.dot_dimension_numbers<[2], [2], [1], [1], [0, 0, 0, 1, 1, 1], [0], [0]>} : vector<16x2x16xf32>, vector<16x2x16xf32>, vector<16x2x2xf32> -> vector<16x2x2xf32>
    "tpu.trace_stop"() : () -> ()
    %cst_24 = arith.constant dense<0xFF800000> : vector<16x2xf32>
    %37 = vector.multi_reduction <maximumf>, %36, %cst_24 [2] : vector<16x2x2xf32> to vector<16x2xf32>
    %38 = vector.shape_cast %37 : vector<16x2xf32> to vector<16x2x1xf32>
    %39 = vector.broadcast %38 : vector<16x2x1xf32> to vector<16x2x2xf32>
    %40 = arith.subf %36, %39 : vector<16x2x2xf32>
    %41 = math.exp %40 : vector<16x2x2xf32>
    %cst_25 = arith.constant dense<0.000000e+00> : vector<16x2xf32>
    %42 = vector.multi_reduction <add>, %41, %cst_25 [2] : vector<16x2x2xf32> to vector<16x2xf32>
    %43 = vector.shape_cast %42 : vector<16x2xf32> to vector<16x2x1xf32>
    %44 = tpu.reciprocal %43 {approx = true} : vector<16x2x1xf32> -> vector<16x2x1xf32>
    %45 = vector.broadcast %44 : vector<16x2x1xf32> to vector<16x2x2xf32>
    %46 = arith.mulf %41, %45 : vector<16x2x2xf32>
    "tpu.trace_start"() <{level = 10 : i32, message = "gqk,gkd->gqd"}> : () -> ()
    %cst_26 = arith.constant dense<0.000000e+00> : vector<16x2x16xf32>
    %47 = tpu.matmul %46, %35, %cst_26 {dimension_numbers = #tpu.dot_dimension_numbers<[2], [1], [1], [2], [0, 0, 0, 1, 1, 2], [0], [0]>} : vector<16x2x2xf32>, vector<16x2x16xf32>, vector<16x2x16xf32> -> vector<16x2x16xf32>
    "tpu.trace_stop"() : () -> ()
    %48 = vector.shape_cast %47 : vector<16x2x16xf32> to vector<8x2x2x16xf32>
    %49 = tpu.transpose %48, [2, 0, 1, 3] : vector<8x2x2x16xf32> -> vector<2x8x2x16xf32>
    %50 = vector.shape_cast %49 : vector<2x8x2x16xf32> to vector<16x32xf32>
    %c0_27 = arith.constant 0 : index
    %c0_28 = arith.constant 0 : index
    %c0_29 = arith.constant 0 : index
    %51 = vector.load %arg10[%c0_27, %c0_28, %c0_29] : memref<1x32x32xf32, #tpu.memory_space<vmem>>, vector<1x32x32xf32>
    %52 = vector.shape_cast %51 : vector<1x32x32xf32> to vector<32x32xf32>
    %cst_30 = arith.constant dense<0.000000e+00> : vector<16x32xf32>
    %53 = tpu.matmul %50, %52, %cst_30 {dimension_numbers = #tpu.dot_dimension_numbers<[1], [0], [0], [1], [0, 0, 1, 1], [], []>} : vector<16x32xf32>, vector<32x32xf32>, vector<16x32xf32> -> vector<16x32xf32>
    %c0_31 = arith.constant 0 : index
    %c0_32 = arith.constant 0 : index
    %c0_33 = arith.constant 0 : index
    %54 = vector.load %arg11[%c0_31, %c0_32, %c0_33] : memref<1x1x32xf32, #tpu.memory_space<vmem>>, vector<1x1x32xf32>
    %55 = vector.shape_cast %54 : vector<1x1x32xf32> to vector<1x32xf32>
    %56 = vector.broadcast %55 : vector<1x32xf32> to vector<16x32xf32>
    %57 = arith.addf %53, %56 : vector<16x32xf32>
    %58 = arith.addf %3, %57 : vector<16x32xf32>
    %c0_34 = arith.constant 0 : index
    %c0_35 = arith.constant 0 : index
    %c0_36 = arith.constant 0 : index
    %59 = vector.load %arg12[%c0_34, %c0_35, %c0_36] : memref<1x1x32xf32, #tpu.memory_space<vmem>>, vector<1x1x32xf32>
    %60 = vector.shape_cast %59 : vector<1x1x32xf32> to vector<1x32xf32>
    %c0_37 = arith.constant 0 : index
    %c0_38 = arith.constant 0 : index
    %c0_39 = arith.constant 0 : index
    %61 = vector.load %arg13[%c0_37, %c0_38, %c0_39] : memref<1x1x32xf32, #tpu.memory_space<vmem>>, vector<1x1x32xf32>
    %62 = vector.shape_cast %61 : vector<1x1x32xf32> to vector<1x32xf32>
    %cst_40 = arith.constant dense<0.000000e+00> : vector<16xf32>
    %63 = vector.multi_reduction <add>, %58, %cst_40 [1] : vector<16x32xf32> to vector<16xf32>
    %64 = vector.shape_cast %63 : vector<16xf32> to vector<16x1xf32>
    %cst_41 = arith.constant 3.200000e+01 : f32
    %65 = vector.broadcast %cst_41 : f32 to vector<16x1xf32>
    %66 = arith.divf %64, %65 : vector<16x1xf32>
    %67 = vector.broadcast %66 : vector<16x1xf32> to vector<16x32xf32>
    %68 = arith.subf %58, %67 : vector<16x32xf32>
    %69 = arith.mulf %68, %68 : vector<16x32xf32>
    %cst_42 = arith.constant dense<0.000000e+00> : vector<16xf32>
    %70 = vector.multi_reduction <add>, %69, %cst_42 [1] : vector<16x32xf32> to vector<16xf32>
    %71 = vector.shape_cast %70 : vector<16xf32> to vector<16x1xf32>
    %cst_43 = arith.constant 3.200000e+01 : f32
    %72 = vector.broadcast %cst_43 : f32 to vector<16x1xf32>
    %73 = arith.divf %71, %72 : vector<16x1xf32>
    %cst_44 = arith.constant 9.99999974E-6 : f32
    %74 = vector.broadcast %cst_44 : f32 to vector<16x1xf32>
    %75 = arith.addf %73, %74 : vector<16x1xf32>
    %76 = math.rsqrt %75 : vector<16x1xf32>
    %77 = vector.broadcast %76 : vector<16x1xf32> to vector<16x32xf32>
    %78 = arith.mulf %68, %77 : vector<16x32xf32>
    %79 = vector.broadcast %60 : vector<1x32xf32> to vector<16x32xf32>
    %80 = arith.mulf %78, %79 : vector<16x32xf32>
    %81 = vector.broadcast %62 : vector<1x32xf32> to vector<16x32xf32>
    %82 = arith.addf %80, %81 : vector<16x32xf32>
    %c0_45 = arith.constant 0 : index
    %c0_46 = arith.constant 0 : index
    %c0_47 = arith.constant 0 : index
    %83 = vector.load %arg14[%c0_45, %c0_46, %c0_47] : memref<1x32x128xf32, #tpu.memory_space<vmem>>, vector<1x32x128xf32>
    %84 = vector.shape_cast %83 : vector<1x32x128xf32> to vector<32x128xf32>
    %cst_48 = arith.constant dense<0.000000e+00> : vector<16x128xf32>
    %85 = tpu.matmul %82, %84, %cst_48 {dimension_numbers = #tpu.dot_dimension_numbers<[1], [0], [0], [1], [0, 0, 1, 1], [], []>} : vector<16x32xf32>, vector<32x128xf32>, vector<16x128xf32> -> vector<16x128xf32>
    %c0_49 = arith.constant 0 : index
    %c0_50 = arith.constant 0 : index
    %c0_51 = arith.constant 0 : index
    %86 = vector.load %arg15[%c0_49, %c0_50, %c0_51] : memref<1x1x128xf32, #tpu.memory_space<vmem>>, vector<1x1x128xf32>
    %87 = vector.shape_cast %86 : vector<1x1x128xf32> to vector<1x128xf32>
    %88 = vector.broadcast %87 : vector<1x128xf32> to vector<16x128xf32>
    %89 = arith.addf %85, %88 : vector<16x128xf32>
    %cst_52 = arith.constant 5.000000e-01 : f32
    %90 = vector.broadcast %cst_52 : f32 to vector<16x128xf32>
    %91 = arith.mulf %90, %89 : vector<16x128xf32>
    %cst_53 = arith.constant 0.707106769 : f32
    %92 = vector.broadcast %cst_53 : f32 to vector<16x128xf32>
    %93 = arith.mulf %89, %92 : vector<16x128xf32>
    %94 = math.erf %93 : vector<16x128xf32>
    %cst_54 = arith.constant 1.000000e+00 : f32
    %95 = vector.broadcast %cst_54 : f32 to vector<16x128xf32>
    %96 = arith.addf %95, %94 : vector<16x128xf32>
    %97 = arith.mulf %91, %96 : vector<16x128xf32>
    %c0_55 = arith.constant 0 : index
    %c0_56 = arith.constant 0 : index
    %c0_57 = arith.constant 0 : index
    %98 = vector.load %arg16[%c0_55, %c0_56, %c0_57] : memref<1x128x32xf32, #tpu.memory_space<vmem>>, vector<1x128x32xf32>
    %99 = vector.shape_cast %98 : vector<1x128x32xf32> to vector<128x32xf32>
    %cst_58 = arith.constant dense<0.000000e+00> : vector<16x32xf32>
    %100 = tpu.matmul %97, %99, %cst_58 {dimension_numbers = #tpu.dot_dimension_numbers<[1], [0], [0], [1], [0, 0, 1, 1], [], []>} : vector<16x128xf32>, vector<128x32xf32>, vector<16x32xf32> -> vector<16x32xf32>
    %c0_59 = arith.constant 0 : index
    %c0_60 = arith.constant 0 : index
    %c0_61 = arith.constant 0 : index
    %101 = vector.load %arg17[%c0_59, %c0_60, %c0_61] : memref<1x1x32xf32, #tpu.memory_space<vmem>>, vector<1x1x32xf32>
    %102 = vector.shape_cast %101 : vector<1x1x32xf32> to vector<1x32xf32>
    %103 = vector.broadcast %102 : vector<1x32xf32> to vector<16x32xf32>
    %104 = arith.addf %100, %103 : vector<16x32xf32>
    %105 = arith.addf %82, %104 : vector<16x32xf32>
    %c0_62 = arith.constant 0 : index
    %c0_63 = arith.constant 0 : index
    %c0_64 = arith.constant 0 : index
    %106 = vector.load %arg18[%c0_62, %c0_63, %c0_64] : memref<1x1x32xf32, #tpu.memory_space<vmem>>, vector<1x1x32xf32>
    %107 = vector.shape_cast %106 : vector<1x1x32xf32> to vector<1x32xf32>
    %c0_65 = arith.constant 0 : index
    %c0_66 = arith.constant 0 : index
    %c0_67 = arith.constant 0 : index
    %108 = vector.load %arg19[%c0_65, %c0_66, %c0_67] : memref<1x1x32xf32, #tpu.memory_space<vmem>>, vector<1x1x32xf32>
    %109 = vector.shape_cast %108 : vector<1x1x32xf32> to vector<1x32xf32>
    %cst_68 = arith.constant dense<0.000000e+00> : vector<16xf32>
    %110 = vector.multi_reduction <add>, %105, %cst_68 [1] : vector<16x32xf32> to vector<16xf32>
    %111 = vector.shape_cast %110 : vector<16xf32> to vector<16x1xf32>
    %cst_69 = arith.constant 3.200000e+01 : f32
    %112 = vector.broadcast %cst_69 : f32 to vector<16x1xf32>
    %113 = arith.divf %111, %112 : vector<16x1xf32>
    %114 = vector.broadcast %113 : vector<16x1xf32> to vector<16x32xf32>
    %115 = arith.subf %105, %114 : vector<16x32xf32>
    %116 = arith.mulf %115, %115 : vector<16x32xf32>
    %cst_70 = arith.constant dense<0.000000e+00> : vector<16xf32>
    %117 = vector.multi_reduction <add>, %116, %cst_70 [1] : vector<16x32xf32> to vector<16xf32>
    %118 = vector.shape_cast %117 : vector<16xf32> to vector<16x1xf32>
    %cst_71 = arith.constant 3.200000e+01 : f32
    %119 = vector.broadcast %cst_71 : f32 to vector<16x1xf32>
    %120 = arith.divf %118, %119 : vector<16x1xf32>
    %cst_72 = arith.constant 9.99999974E-6 : f32
    %121 = vector.broadcast %cst_72 : f32 to vector<16x1xf32>
    %122 = arith.addf %120, %121 : vector<16x1xf32>
    %123 = math.rsqrt %122 : vector<16x1xf32>
    %124 = vector.broadcast %123 : vector<16x1xf32> to vector<16x32xf32>
    %125 = arith.mulf %115, %124 : vector<16x32xf32>
    %126 = vector.broadcast %107 : vector<1x32xf32> to vector<16x32xf32>
    %127 = arith.mulf %125, %126 : vector<16x32xf32>
    %128 = vector.broadcast %109 : vector<1x32xf32> to vector<16x32xf32>
    %129 = arith.addf %127, %128 : vector<16x32xf32>
    %c0_73 = arith.constant 0 : index
    %c0_74 = arith.constant 0 : index
    %130 = vector.load %arg25[%c0_73, %c0_74] : memref<16x32xf32, #tpu.memory_space<vmem>>, vector<16x32xf32>
    tpu.vector_store %arg25[%c0_73, %c0_74], %129 {strides = array<i32>} : memref<16x32xf32, #tpu.memory_space<vmem>>, vector<16x32xf32>,
    %c1_i32 = arith.constant 1 : i32
    %131 = arith.cmpi eq, %arg0, %c1_i32 : i32
    %132 = arith.extui %131 : i1 to i32
    %c0_i32_75 = arith.constant 0 : i32
    %133 = arith.cmpi ne, %132, %c0_i32_75 : i32
    scf.if %133 {
      %134 = vector.shape_cast %129 : vector<16x32xf32> to vector<2x8x32xf32>
      %cst_76 = arith.constant dense<0.000000e+00> : vector<2x32xf32>
      %135 = vector.multi_reduction <add>, %134, %cst_76 [1] : vector<2x8x32xf32> to vector<2x32xf32>
      %cst_77 = arith.constant 8.000000e+00 : f32
      %136 = vector.broadcast %cst_77 : f32 to vector<2x32xf32>
      %137 = arith.divf %135, %136 : vector<2x32xf32>
      %c0_78 = arith.constant 0 : index
      %c0_79 = arith.constant 0 : index
      %138 = vector.load %arg20[%c0_78, %c0_79] : memref<1x32xf32, #tpu.memory_space<vmem>>, vector<1x32xf32>
      %c0_80 = arith.constant 0 : index
      %c0_81 = arith.constant 0 : index
      %139 = vector.load %arg21[%c0_80, %c0_81] : memref<1x32xf32, #tpu.memory_space<vmem>>, vector<1x32xf32>
      %cst_82 = arith.constant dense<0.000000e+00> : vector<2xf32>
      %140 = vector.multi_reduction <add>, %137, %cst_82 [1] : vector<2x32xf32> to vector<2xf32>
      %141 = vector.shape_cast %140 : vector<2xf32> to vector<2x1xf32>
      %cst_83 = arith.constant 3.200000e+01 : f32
      %142 = vector.broadcast %cst_83 : f32 to vector<2x1xf32>
      %143 = arith.divf %141, %142 : vector<2x1xf32>
      %144 = vector.broadcast %143 : vector<2x1xf32> to vector<2x32xf32>
      %145 = arith.subf %137, %144 : vector<2x32xf32>
      %146 = arith.mulf %145, %145 : vector<2x32xf32>
      %cst_84 = arith.constant dense<0.000000e+00> : vector<2xf32>
      %147 = vector.multi_reduction <add>, %146, %cst_84 [1] : vector<2x32xf32> to vector<2xf32>
      %148 = vector.shape_cast %147 : vector<2xf32> to vector<2x1xf32>
      %cst_85 = arith.constant 3.200000e+01 : f32
      %149 = vector.broadcast %cst_85 : f32 to vector<2x1xf32>
      %150 = arith.divf %148, %149 : vector<2x1xf32>
      %cst_86 = arith.constant 9.99999974E-6 : f32
      %151 = vector.broadcast %cst_86 : f32 to vector<2x1xf32>
      %152 = arith.addf %150, %151 : vector<2x1xf32>
      %153 = math.rsqrt %152 : vector<2x1xf32>
      %154 = vector.broadcast %153 : vector<2x1xf32> to vector<2x32xf32>
      %155 = arith.mulf %145, %154 : vector<2x32xf32>
      %156 = vector.broadcast %138 : vector<1x32xf32> to vector<2x32xf32>
      %157 = arith.mulf %155, %156 : vector<2x32xf32>
      %158 = vector.broadcast %139 : vector<1x32xf32> to vector<2x32xf32>
      %159 = arith.addf %157, %158 : vector<2x32xf32>
      %c0_87 = arith.constant 0 : index
      %c0_88 = arith.constant 0 : index
      %160 = vector.load %arg22[%c0_87, %c0_88] : memref<32x10xf32, #tpu.memory_space<vmem>>, vector<32x10xf32>
      %cst_89 = arith.constant dense<0.000000e+00> : vector<2x10xf32>
      %161 = tpu.matmul %159, %160, %cst_89 {dimension_numbers = #tpu.dot_dimension_numbers<[1], [0], [0], [1], [0, 0, 1, 1], [], []>} : vector<2x32xf32>, vector<32x10xf32>, vector<2x10xf32> -> vector<2x10xf32>
      %c0_90 = arith.constant 0 : index
      %c0_91 = arith.constant 0 : index
      %162 = vector.load %arg23[%c0_90, %c0_91] : memref<1x10xf32, #tpu.memory_space<vmem>>, vector<1x10xf32>
      %163 = vector.broadcast %162 : vector<1x10xf32> to vector<2x10xf32>
      %164 = arith.addf %161, %163 : vector<2x10xf32>
      %c0_92 = arith.constant 0 : index
      %c0_93 = arith.constant 0 : index
      %165 = vector.load %arg24[%c0_92, %c0_93] : memref<2x10xf32, #tpu.memory_space<vmem>>, vector<2x10xf32>
      tpu.vector_store %arg24[%c0_92, %c0_93], %164 {strides = array<i32>} : memref<2x10xf32, #tpu.memory_space<vmem>>, vector<2x10xf32>,
    } else {
    }
    return
  }
  func.func @transform_0(%arg0: i32) -> (i32, i32) {
    %c0_i32 = arith.constant 0 : i32
    %c0_i32_0 = arith.constant 0 : i32
    %c0_i32_1 = arith.constant 0 : i32
    return %c0_i32, %c0_i32_0 : i32, i32
  }
  func.func @transform_1(%arg0: i32) -> (i32, i32) {
    %c0_i32 = arith.constant 0 : i32
    %c0_i32_0 = arith.constant 0 : i32
    %c0_i32_1 = arith.constant 0 : i32
    return %c0_i32, %c0_i32_0 : i32, i32
  }
  func.func @transform_2(%arg0: i32) -> (i32, i32) {
    %c0_i32 = arith.constant 0 : i32
    %c0_i32_0 = arith.constant 0 : i32
    %c0_i32_1 = arith.constant 0 : i32
    return %c0_i32, %c0_i32_0 : i32, i32
  }
  func.func @transform_3(%arg0: i32) -> (i32, i32, i32) {
    %c0_i32 = arith.constant 0 : i32
    %c0_i32_0 = arith.constant 0 : i32
    %c0_i32_1 = arith.constant 0 : i32
    return %arg0, %c0_i32, %c0_i32_0 : i32, i32, i32
  }
  func.func @transform_4(%arg0: i32) -> (i32, i32, i32) {
    %c0_i32 = arith.constant 0 : i32
    %c0_i32_0 = arith.constant 0 : i32
    %c0_i32_1 = arith.constant 0 : i32
    return %arg0, %c0_i32, %c0_i32_0 : i32, i32, i32
  }
  func.func @transform_5(%arg0: i32) -> (i32, i32, i32) {
    %c0_i32 = arith.constant 0 : i32
    %c0_i32_0 = arith.constant 0 : i32
    %c0_i32_1 = arith.constant 0 : i32
    return %arg0, %c0_i32, %c0_i32_0 : i32, i32, i32
  }
  func.func @transform_6(%arg0: i32) -> (i32, i32, i32) {
    %c0_i32 = arith.constant 0 : i32
    %c0_i32_0 = arith.constant 0 : i32
    %c0_i32_1 = arith.constant 0 : i32
    return %arg0, %c0_i32, %c0_i32_0 : i32, i32, i32
  }
  func.func @transform_7(%arg0: i32) -> (i32, i32, i32) {
    %c0_i32 = arith.constant 0 : i32
    %c0_i32_0 = arith.constant 0 : i32
    %c0_i32_1 = arith.constant 0 : i32
    return %arg0, %c0_i32, %c0_i32_0 : i32, i32, i32
  }
  func.func @transform_8(%arg0: i32) -> (i32, i32, i32) {
    %c0_i32 = arith.constant 0 : i32
    %c0_i32_0 = arith.constant 0 : i32
    %c0_i32_1 = arith.constant 0 : i32
    return %arg0, %c0_i32, %c0_i32_0 : i32, i32, i32
  }
  func.func @transform_9(%arg0: i32) -> (i32, i32, i32) {
    %c0_i32 = arith.constant 0 : i32
    %c0_i32_0 = arith.constant 0 : i32
    %c0_i32_1 = arith.constant 0 : i32
    return %arg0, %c0_i32, %c0_i32_0 : i32, i32, i32
  }
  func.func @transform_10(%arg0: i32) -> (i32, i32, i32) {
    %c0_i32 = arith.constant 0 : i32
    %c0_i32_0 = arith.constant 0 : i32
    %c0_i32_1 = arith.constant 0 : i32
    return %arg0, %c0_i32, %c0_i32_0 : i32, i32, i32
  }
  func.func @transform_11(%arg0: i32) -> (i32, i32, i32) {
    %c0_i32 = arith.constant 0 : i32
    %c0_i32_0 = arith.constant 0 : i32
    %c0_i32_1 = arith.constant 0 : i32
    return %arg0, %c0_i32, %c0_i32_0 : i32, i32, i32
  }
  func.func @transform_12(%arg0: i32) -> (i32, i32, i32) {
    %c0_i32 = arith.constant 0 : i32
    %c0_i32_0 = arith.constant 0 : i32
    %c0_i32_1 = arith.constant 0 : i32
    return %arg0, %c0_i32, %c0_i32_0 : i32, i32, i32
  }
  func.func @transform_13(%arg0: i32) -> (i32, i32, i32) {
    %c0_i32 = arith.constant 0 : i32
    %c0_i32_0 = arith.constant 0 : i32
    %c0_i32_1 = arith.constant 0 : i32
    return %arg0, %c0_i32, %c0_i32_0 : i32, i32, i32
  }
  func.func @transform_14(%arg0: i32) -> (i32, i32, i32) {
    %c0_i32 = arith.constant 0 : i32
    %c0_i32_0 = arith.constant 0 : i32
    %c0_i32_1 = arith.constant 0 : i32
    return %arg0, %c0_i32, %c0_i32_0 : i32, i32, i32
  }
  func.func @transform_15(%arg0: i32) -> (i32, i32, i32) {
    %c0_i32 = arith.constant 0 : i32
    %c0_i32_0 = arith.constant 0 : i32
    %c0_i32_1 = arith.constant 0 : i32
    return %arg0, %c0_i32, %c0_i32_0 : i32, i32, i32
  }
  func.func @transform_16(%arg0: i32) -> (i32, i32, i32) {
    %c0_i32 = arith.constant 0 : i32
    %c0_i32_0 = arith.constant 0 : i32
    %c0_i32_1 = arith.constant 0 : i32
    return %arg0, %c0_i32, %c0_i32_0 : i32, i32, i32
  }
  func.func @transform_17(%arg0: i32) -> (i32, i32, i32) {
    %c0_i32 = arith.constant 0 : i32
    %c0_i32_0 = arith.constant 0 : i32
    %c0_i32_1 = arith.constant 0 : i32
    return %arg0, %c0_i32, %c0_i32_0 : i32, i32, i32
  }
  func.func @transform_18(%arg0: i32) -> (i32, i32, i32) {
    %c0_i32 = arith.constant 0 : i32
    %c0_i32_0 = arith.constant 0 : i32
    %c0_i32_1 = arith.constant 0 : i32
    return %arg0, %c0_i32, %c0_i32_0 : i32, i32, i32
  }
  func.func @transform_19(%arg0: i32) -> (i32, i32) {
    %c0_i32 = arith.constant 0 : i32
    %c0_i32_0 = arith.constant 0 : i32
    %c0_i32_1 = arith.constant 0 : i32
    return %c0_i32, %c0_i32_0 : i32, i32
  }
  func.func @transform_20(%arg0: i32) -> (i32, i32) {
    %c0_i32 = arith.constant 0 : i32
    %c0_i32_0 = arith.constant 0 : i32
    %c0_i32_1 = arith.constant 0 : i32
    return %c0_i32, %c0_i32_0 : i32, i32
  }
  func.func @transform_21(%arg0: i32) -> (i32, i32) {
    %c0_i32 = arith.constant 0 : i32
    %c0_i32_0 = arith.constant 0 : i32
    %c0_i32_1 = arith.constant 0 : i32
    return %c0_i32, %c0_i32_0 : i32, i32
  }
  func.func @transform_22(%arg0: i32) -> (i32, i32) {
    %c0_i32 = arith.constant 0 : i32
    %c0_i32_0 = arith.constant 0 : i32
    %c0_i32_1 = arith.constant 0 : i32
    return %c0_i32, %c0_i32_0 : i32, i32
  }
  func.func @transform_23(%arg0: i32) -> (i32, i32) {
    %c0_i32 = arith.constant 0 : i32
    %c0_i32_0 = arith.constant 0 : i32
    %c0_i32_1 = arith.constant 0 : i32
    return %c0_i32, %c0_i32_0 : i32, i32
  }
}

</mosaic_0001>

<llo_original>
// kernel: tpu_custom_call.1
$region0: #{tpu_custom_call.1}
  #allocation0 [shape = 'u32[]', space=smem, size = 0x4, offset = 0x4, fixed_abs, tag = 'smem constant byte address 0x4 - core index']
  #allocation1 [shape = 'u32[144,128]{1,0:T(1,128)}', space=vmem, size = 0x12000, scoped, tag = 'internal scratch']
  #allocation2 [shape = 'f32[16,32]{1,0:T(8,128)}', space=vmem, size = 0x2000, scoped, tag = 'scratch operand']
  %s0 = inlined_call_operand.vmem [shape: f32[16,256], index: 0, kind: input, shape index: {}]
  %s1 = inlined_call_operand.vmem [shape: f32[256,32], index: 1, kind: input, shape index: {}]
  %s2 = inlined_call_operand.vmem [shape: f32[16,32], index: 2, kind: input, shape index: {}]
  %s3 = inlined_call_operand.vmem [shape: f32[2,32,32], index: 3, kind: input, shape index: {}]
  %s4 = inlined_call_operand.vmem [shape: f32[2,1,32], index: 4, kind: input, shape index: {}]
  %s5 = inlined_call_operand.vmem [shape: f32[2,32,32], index: 5, kind: input, shape index: {}]
  %s6 = inlined_call_operand.vmem [shape: f32[2,1,32], index: 6, kind: input, shape index: {}]
  %s7 = inlined_call_operand.vmem [shape: f32[2,32,32], index: 7, kind: input, shape index: {}]
  %s8 = inlined_call_operand.vmem [shape: f32[2,1,32], index: 8, kind: input, shape index: {}]
  %s9 = inlined_call_operand.vmem [shape: f32[2,32,32], index: 9, kind: input, shape index: {}]
  %s10 = inlined_call_operand.vmem [shape: f32[2,1,32], index: 10, kind: input, shape index: {}]
  %s11 = inlined_call_operand.vmem [shape: f32[2,1,32], index: 11, kind: input, shape index: {}]
  %s12 = inlined_call_operand.vmem [shape: f32[2,1,32], index: 12, kind: input, shape index: {}]
  %s13 = inlined_call_operand.vmem [shape: f32[2,32,128], index: 13, kind: input, shape index: {}]
  %s14 = inlined_call_operand.vmem [shape: f32[2,1,128], index: 14, kind: input, shape index: {}]
  %s15 = inlined_call_operand.vmem [shape: f32[2,128,32], index: 15, kind: input, shape index: {}]
  %s16 = inlined_call_operand.vmem [shape: f32[2,1,32], index: 16, kind: input, shape index: {}]
  %s17 = inlined_call_operand.vmem [shape: f32[2,1,32], index: 17, kind: input, shape index: {}]
  %s18 = inlined_call_operand.vmem [shape: f32[2,1,32], index: 18, kind: input, shape index: {}]
  %s19 = inlined_call_operand.vmem [shape: f32[1,32], index: 19, kind: input, shape index: {}]
  %s20 = inlined_call_operand.vmem [shape: f32[1,32], index: 20, kind: input, shape index: {}]
  %s21 = inlined_call_operand.vmem [shape: f32[32,10], index: 21, kind: input, shape index: {}]
  %s22 = inlined_call_operand.vmem [shape: f32[1,10], index: 22, kind: input, shape index: {}]
  %s23 = inlined_call_operand.hbm [shape: f32[2,10], index: 23, kind: output, shape index: {}]
  %s24 = sld [smem:[#allocation0]]
  $region133: #{tpu_custom_call.1} parent=0
    _
  %s26 = ssub.s32 1, %s24
  %s27 = scalar_select 0, %s26, %s24
  $region1: #{tpu_custom_call.1} parent=0
    #allocation3 [shape = 'u8[1024]{0}', space=vmem, size = 0x400, scoped, tag = 'output window, operand 0, single buffered']
    #allocation4 [shape = 's32[2]{0}', space=sflag, size = 0x8, scoped, tag = 'scoped memory for tpu_custom_call.1']
    %28 = vsyncpa [#allocation4], 0
    loop: start=0, step=1, limit=4
    $region2: #{tpu_custom_call.1} parent=1 // loop_pre_header
      _
    $region3: #{tpu_custom_call.1} parent=1 // loop_header
      %s30 = sphi 0, %s34
      %p31 = scmp.ge.s32.totalorder %s30, 4
      %s38 = sphi 0, %s38
      %s40 = sphi 0, %s38
      %s41 = sphi 0, %s40
      %s55 = sphi 0, %s41
      %s59 = sphi 0, %s59
      %s61 = sphi 0, %s59
      %s62 = sphi 0, %s61
      %s76 = sphi 0, %s62
      %s80 = sphi 0, %s80
      %s82 = sphi 0, %s80
      %s83 = sphi 0, %s82
      %s97 = sphi 0, %s83
      %s103 = sphi 0, %s105
      %s106 = sphi 0, %s103
      %s107 = sphi 0, %s106
      %s123 = sphi 0, %s107
      %s129 = sphi 0, %s131
      %s132 = sphi 0, %s129
      %s133 = sphi 0, %s132
      %s149 = sphi 0, %s133
      %s155 = sphi 0, %s157
      %s158 = sphi 0, %s155
      %s159 = sphi 0, %s158
      %s175 = sphi 0, %s159
      %s181 = sphi 0, %s183
      %s184 = sphi 0, %s181
      %s185 = sphi 0, %s184
      %s201 = sphi 0, %s185
      %s207 = sphi 0, %s209
      %s210 = sphi 0, %s207
      %s211 = sphi 0, %s210
      %s227 = sphi 0, %s211
      %s233 = sphi 0, %s235
      %s236 = sphi 0, %s233
      %s237 = sphi 0, %s236
      %s253 = sphi 0, %s237
      %s259 = sphi 0, %s261
      %s262 = sphi 0, %s259
      %s263 = sphi 0, %s262
      %s279 = sphi 0, %s263
      %s285 = sphi 0, %s287
      %s288 = sphi 0, %s285
      %s289 = sphi 0, %s288
      %s305 = sphi 0, %s289
      %s311 = sphi 0, %s313
      %s314 = sphi 0, %s311
      %s315 = sphi 0, %s314
      %s331 = sphi 0, %s315
      %s337 = sphi 0, %s339
      %s340 = sphi 0, %s337
      %s341 = sphi 0, %s340
      %s357 = sphi 0, %s341
      %s363 = sphi 0, %s365
      %s366 = sphi 0, %s363
      %s367 = sphi 0, %s366
      %s383 = sphi 0, %s367
      %s389 = sphi 0, %s391
      %s392 = sphi 0, %s389
      %s393 = sphi 0, %s392
      %s409 = sphi 0, %s393
      %s415 = sphi 0, %s417
      %s418 = sphi 0, %s415
      %s419 = sphi 0, %s418
      %s435 = sphi 0, %s419
      %s441 = sphi 0, %s443
      %s444 = sphi 0, %s441
      %s445 = sphi 0, %s444
      %s461 = sphi 0, %s445
      %s467 = sphi 0, %s469
      %s470 = sphi 0, %s467
      %s471 = sphi 0, %s470
      %s487 = sphi 0, %s471
      %s493 = sphi 0, %s495
      %s496 = sphi 0, %s493
      %s497 = sphi 0, %s496
      %s513 = sphi 0, %s497
      %s517 = sphi 0, %s517
      %s519 = sphi 0, %s517
      %s520 = sphi 0, %s519
      %s534 = sphi 0, %s520
      %s538 = sphi 0, %s538
      %s540 = sphi 0, %s538
      %s541 = sphi 0, %s540
      %s555 = sphi 0, %s541
      %s559 = sphi 0, %s559
      %s561 = sphi 0, %s559
      %s562 = sphi 0, %s561
      %s576 = sphi 0, %s562
      %s580 = sphi 0, %s580
      %s582 = sphi 0, %s580
      %s583 = sphi 0, %s582
      %s597 = sphi 0, %s583
      %s601 = sphi 0, %s601
      %s603 = sphi 0, %s601
      %s604 = sphi 0, %s603
      %s618 = sphi 0, %s604
    $region4: #{tpu_custom_call.1} parent=1 // loop_header_branch
      %33 = sbr.rel (%p31) target = $region8
    $region5: #{tpu_custom_call.1} parent=1 // loop_body
      %s35 = ssub.s32 %s30, 1
      %s36 = ssub.s32 %s30, 2
      %s37 = sadd.s32 %s30, 1
      %s39 = sadd.s32 %s38, 1
      %p42 = scmp.eq.s32.totalorder %s30, 1
      %p43 = scmp.ne.s32.totalorder %s38, %s40
      %p44 = scmp.eq.s32.totalorder %s30, 0
      %p45 = por %p43, %p44
      %p46 = scmp.ne.s32.totalorder %s38, %s40
      %p47 = scmp.eq.s32.totalorder %s35, 1
      %p48 = por %p46, %p47
      %p49 = scmp.ne.s32.totalorder %s40, %s41
      %p50 = scmp.eq.s32.totalorder %s35, 0
      %p51 = por %p49, %p50
      %p52 = scmp.ne.s32.totalorder %s40, %s41
      %p53 = scmp.eq.s32.totalorder %s36, 1
      %p54 = por %p52, %p53
      %p56 = scmp.ne.s32.totalorder %s41, %s55
      %p57 = scmp.eq.s32.totalorder %s36, 0
      %p58 = por %p56, %p57
      %s60 = sadd.s32 %s59, 1
      %p63 = scmp.eq.s32.totalorder %s30, 1
      %p64 = scmp.ne.s32.totalorder %s59, %s61
      %p65 = scmp.eq.s32.totalorder %s30, 0
      %p66 = por %p64, %p65
      %p67 = scmp.ne.s32.totalorder %s59, %s61
      %p68 = scmp.eq.s32.totalorder %s35, 1
      %p69 = por %p67, %p68
      %p70 = scmp.ne.s32.totalorder %s61, %s62
      %p71 = scmp.eq.s32.totalorder %s35, 0
      %p72 = por %p70, %p71
      %p73 = scmp.ne.s32.totalorder %s61, %s62
      %p74 = scmp.eq.s32.totalorder %s36, 1
      %p75 = por %p73, %p74
      %p77 = scmp.ne.s32.totalorder %s62, %s76
      %p78 = scmp.eq.s32.totalorder %s36, 0
      %p79 = por %p77, %p78
      %s81 = sadd.s32 %s80, 1
      %p84 = scmp.eq.s32.totalorder %s30, 1
      %p85 = scmp.ne.s32.totalorder %s80, %s82
      %p86 = scmp.eq.s32.totalorder %s30, 0
      %p87 = por %p85, %p86
      %p88 = scmp.ne.s32.totalorder %s80, %s82
      %p89 = scmp.eq.s32.totalorder %s35, 1
      %p90 = por %p88, %p89
      %p91 = scmp.ne.s32.totalorder %s82, %s83
      %p92 = scmp.eq.s32.totalorder %s35, 0
      %p93 = por %p91, %p92
      %p94 = scmp.ne.s32.totalorder %s82, %s83
      %p95 = scmp.eq.s32.totalorder %s36, 1
      %p96 = por %p94, %p95
      %p98 = scmp.ne.s32.totalorder %s83, %s97
      %p99 = scmp.eq.s32.totalorder %s36, 0
      %p100 = por %p98, %p99
      %s101 = ssub.s32 %s30, %s37
      %p102 = scmp.eq.s32.totalorder %s101, 0
      %s104 = sadd.s32 %s103, 1
      %s105 = scalar_select %p102, %s103, %s104
      %p108 = pneg %p102
      %p109 = scmp.eq.s32.totalorder %s30, 1
      %p110 = por %p108, %p109
      %p111 = scmp.ne.s32.totalorder %s103, %s106
      %p112 = scmp.eq.s32.totalorder %s30, 0
      %p113 = por %p111, %p112
      %p114 = scmp.ne.s32.totalorder %s103, %s106
      %p115 = scmp.eq.s32.totalorder %s35, 1
      %p116 = por %p114, %p115
      %p117 = scmp.ne.s32.totalorder %s106, %s107
      %p118 = scmp.eq.s32.totalorder %s35, 0
      %p119 = por %p117, %p118
      %p120 = scmp.ne.s32.totalorder %s106, %s107
      %p121 = scmp.eq.s32.totalorder %s36, 1
      %p122 = por %p120, %p121
      %p124 = scmp.ne.s32.totalorder %s107, %s123
      %p125 = scmp.eq.s32.totalorder %s36, 0
      %p126 = por %p124, %p125
      %s127 = ssub.s32 %s30, %s37
      %p128 = scmp.eq.s32.totalorder %s127, 0
      %s130 = sadd.s32 %s129, 1
      %s131 = scalar_select %p128, %s129, %s130
      %p134 = pneg %p128
      %p135 = scmp.eq.s32.totalorder %s30, 1
      %p136 = por %p134, %p135
      %p137 = scmp.ne.s32.totalorder %s129, %s132
      %p138 = scmp.eq.s32.totalorder %s30, 0
      %p139 = por %p137, %p138
      %p140 = scmp.ne.s32.totalorder %s129, %s132
      %p141 = scmp.eq.s32.totalorder %s35, 1
      %p142 = por %p140, %p141
      %p143 = scmp.ne.s32.totalorder %s132, %s133
      %p144 = scmp.eq.s32.totalorder %s35, 0
      %p145 = por %p143, %p144
      %p146 = scmp.ne.s32.totalorder %s132, %s133
      %p147 = scmp.eq.s32.totalorder %s36, 1
      %p148 = por %p146, %p147
      %p150 = scmp.ne.s32.totalorder %s133, %s149
      %p151 = scmp.eq.s32.totalorder %s36, 0
      %p152 = por %p150, %p151
      %s153 = ssub.s32 %s30, %s37
      %p154 = scmp.eq.s32.totalorder %s153, 0
      %s156 = sadd.s32 %s155, 1
      %s157 = scalar_select %p154, %s155, %s156
      %p160 = pneg %p154
      %p161 = scmp.eq.s32.totalorder %s30, 1
      %p162 = por %p160, %p161
      %p163 = scmp.ne.s32.totalorder %s155, %s158
      %p164 = scmp.eq.s32.totalorder %s30, 0
      %p165 = por %p163, %p164
      %p166 = scmp.ne.s32.totalorder %s155, %s158
      %p167 = scmp.eq.s32.totalorder %s35, 1
      %p168 = por %p166, %p167
      %p169 = scmp.ne.s32.totalorder %s158, %s159
      %p170 = scmp.eq.s32.totalorder %s35, 0
      %p171 = por %p169, %p170
      %p172 = scmp.ne.s32.totalorder %s158, %s159
      %p173 = scmp.eq.s32.totalorder %s36, 1
      %p174 = por %p172, %p173
      %p176 = scmp.ne.s32.totalorder %s159, %s175
      %p177 = scmp.eq.s32.totalorder %s36, 0
      %p178 = por %p176, %p177
      %s179 = ssub.s32 %s30, %s37
      %p180 = scmp.eq.s32.totalorder %s179, 0
      %s182 = sadd.s32 %s181, 1
      %s183 = scalar_select %p180, %s181, %s182
      %p186 = pneg %p180
      %p187 = scmp.eq.s32.totalorder %s30, 1
      %p188 = por %p186, %p187
      %p189 = scmp.ne.s32.totalorder %s181, %s184
      %p190 = scmp.eq.s32.totalorder %s30, 0
      %p191 = por %p189, %p190
      %p192 = scmp.ne.s32.totalorder %s181, %s184
      %p193 = scmp.eq.s32.totalorder %s35, 1
      %p194 = por %p192, %p193
      %p195 = scmp.ne.s32.totalorder %s184, %s185
      %p196 = scmp.eq.s32.totalorder %s35, 0
      %p197 = por %p195, %p196
      %p198 = scmp.ne.s32.totalorder %s184, %s185
      %p199 = scmp.eq.s32.totalorder %s36, 1
      %p200 = por %p198, %p199
      %p202 = scmp.ne.s32.totalorder %s185, %s201
      %p203 = scmp.eq.s32.totalorder %s36, 0
      %p204 = por %p202, %p203
      %s205 = ssub.s32 %s30, %s37
      %p206 = scmp.eq.s32.totalorder %s205, 0
      %s208 = sadd.s32 %s207, 1
      %s209 = scalar_select %p206, %s207, %s208
      %p212 = pneg %p206
      %p213 = scmp.eq.s32.totalorder %s30, 1
      %p214 = por %p212, %p213
      %p215 = scmp.ne.s32.totalorder %s207, %s210
      %p216 = scmp.eq.s32.totalorder %s30, 0
      %p217 = por %p215, %p216
      %p218 = scmp.ne.s32.totalorder %s207, %s210
      %p219 = scmp.eq.s32.totalorder %s35, 1
      %p220 = por %p218, %p219
      %p221 = scmp.ne.s32.totalorder %s210, %s211
      %p222 = scmp.eq.s32.totalorder %s35, 0
      %p223 = por %p221, %p222
      %p224 = scmp.ne.s32.totalorder %s210, %s211
      %p225 = scmp.eq.s32.totalorder %s36, 1
      %p226 = por %p224, %p225
      %p228 = scmp.ne.s32.totalorder %s211, %s227
      %p229 = scmp.eq.s32.totalorder %s36, 0
      %p230 = por %p228, %p229
      %s231 = ssub.s32 %s30, %s37
      %p232 = scmp.eq.s32.totalorder %s231, 0
      %s234 = sadd.s32 %s233, 1
      %s235 = scalar_select %p232, %s233, %s234
      %p238 = pneg %p232
      %p239 = scmp.eq.s32.totalorder %s30, 1
      %p240 = por %p238, %p239
      %p241 = scmp.ne.s32.totalorder %s233, %s236
      %p242 = scmp.eq.s32.totalorder %s30, 0
      %p243 = por %p241, %p242
      %p244 = scmp.ne.s32.totalorder %s233, %s236
      %p245 = scmp.eq.s32.totalorder %s35, 1
      %p246 = por %p244, %p245
      %p247 = scmp.ne.s32.totalorder %s236, %s237
      %p248 = scmp.eq.s32.totalorder %s35, 0
      %p249 = por %p247, %p248
      %p250 = scmp.ne.s32.totalorder %s236, %s237
      %p251 = scmp.eq.s32.totalorder %s36, 1
      %p252 = por %p250, %p251
      %p254 = scmp.ne.s32.totalorder %s237, %s253
      %p255 = scmp.eq.s32.totalorder %s36, 0
      %p256 = por %p254, %p255
      %s257 = ssub.s32 %s30, %s37
      %p258 = scmp.eq.s32.totalorder %s257, 0
      %s260 = sadd.s32 %s259, 1
      %s261 = scalar_select %p258, %s259, %s260
      %p264 = pneg %p258
      %p265 = scmp.eq.s32.totalorder %s30, 1
      %p266 = por %p264, %p265
      %p267 = scmp.ne.s32.totalorder %s259, %s262
      %p268 = scmp.eq.s32.totalorder %s30, 0
      %p269 = por %p267, %p268
      %p270 = scmp.ne.s32.totalorder %s259, %s262
      %p271 = scmp.eq.s32.totalorder %s35, 1
      %p272 = por %p270, %p271
      %p273 = scmp.ne.s32.totalorder %s262, %s263
      %p274 = scmp.eq.s32.totalorder %s35, 0
      %p275 = por %p273, %p274
      %p276 = scmp.ne.s32.totalorder %s262, %s263
      %p277 = scmp.eq.s32.totalorder %s36, 1
      %p278 = por %p276, %p277
      %p280 = scmp.ne.s32.totalorder %s263, %s279
      %p281 = scmp.eq.s32.totalorder %s36, 0
      %p282 = por %p280, %p281
      %s283 = ssub.s32 %s30, %s37
      %p284 = scmp.eq.s32.totalorder %s283, 0
      %s286 = sadd.s32 %s285, 1
      %s287 = scalar_select %p284, %s285, %s286
      %p290 = pneg %p284
      %p291 = scmp.eq.s32.totalorder %s30, 1
      %p292 = por %p290, %p291
      %p293 = scmp.ne.s32.totalorder %s285, %s288
      %p294 = scmp.eq.s32.totalorder %s30, 0
      %p295 = por %p293, %p294
      %p296 = scmp.ne.s32.totalorder %s285, %s288
      %p297 = scmp.eq.s32.totalorder %s35, 1
      %p298 = por %p296, %p297
      %p299 = scmp.ne.s32.totalorder %s288, %s289
      %p300 = scmp.eq.s32.totalorder %s35, 0
      %p301 = por %p299, %p300
      %p302 = scmp.ne.s32.totalorder %s288, %s289
      %p303 = scmp.eq.s32.totalorder %s36, 1
      %p304 = por %p302, %p303
      %p306 = scmp.ne.s32.totalorder %s289, %s305
      %p307 = scmp.eq.s32.totalorder %s36, 0
      %p308 = por %p306, %p307
      %s309 = ssub.s32 %s30, %s37
      %p310 = scmp.eq.s32.totalorder %s309, 0
      %s312 = sadd.s32 %s311, 1
      %s313 = scalar_select %p310, %s311, %s312
      %p316 = pneg %p310
      %p317 = scmp.eq.s32.totalorder %s30, 1
      %p318 = por %p316, %p317
      %p319 = scmp.ne.s32.totalorder %s311, %s314
      %p320 = scmp.eq.s32.totalorder %s30, 0
      %p321 = por %p319, %p320
      %p322 = scmp.ne.s32.totalorder %s311, %s314
      %p323 = scmp.eq.s32.totalorder %s35, 1
      %p324 = por %p322, %p323
      %p325 = scmp.ne.s32.totalorder %s314, %s315
      %p326 = scmp.eq.s32.totalorder %s35, 0
      %p327 = por %p325, %p326
      %p328 = scmp.ne.s32.totalorder %s314, %s315
      %p329 = scmp.eq.s32.totalorder %s36, 1
      %p330 = por %p328, %p329
      %p332 = scmp.ne.s32.totalorder %s315, %s331
      %p333 = scmp.eq.s32.totalorder %s36, 0
      %p334 = por %p332, %p333
      %s335 = ssub.s32 %s30, %s37
      %p336 = scmp.eq.s32.totalorder %s335, 0
      %s338 = sadd.s32 %s337, 1
      %s339 = scalar_select %p336, %s337, %s338
      %p342 = pneg %p336
      %p343 = scmp.eq.s32.totalorder %s30, 1
      %p344 = por %p342, %p343
      %p345 = scmp.ne.s32.totalorder %s337, %s340
      %p346 = scmp.eq.s32.totalorder %s30, 0
      %p347 = por %p345, %p346
      %p348 = scmp.ne.s32.totalorder %s337, %s340
      %p349 = scmp.eq.s32.totalorder %s35, 1
      %p350 = por %p348, %p349
      %p351 = scmp.ne.s32.totalorder %s340, %s341
      %p352 = scmp.eq.s32.totalorder %s35, 0
      %p353 = por %p351, %p352
      %p354 = scmp.ne.s32.totalorder %s340, %s341
      %p355 = scmp.eq.s32.totalorder %s36, 1
      %p356 = por %p354, %p355
      %p358 = scmp.ne.s32.totalorder %s341, %s357
      %p359 = scmp.eq.s32.totalorder %s36, 0
      %p360 = por %p358, %p359
      %s361 = ssub.s32 %s30, %s37
      %p362 = scmp.eq.s32.totalorder %s361, 0
      %s364 = sadd.s32 %s363, 1
      %s365 = scalar_select %p362, %s363, %s364
      %p368 = pneg %p362
      %p369 = scmp.eq.s32.totalorder %s30, 1
      %p370 = por %p368, %p369
      %p371 = scmp.ne.s32.totalorder %s363, %s366
      %p372 = scmp.eq.s32.totalorder %s30, 0
      %p373 = por %p371, %p372
      %p374 = scmp.ne.s32.totalorder %s363, %s366
      %p375 = scmp.eq.s32.totalorder %s35, 1
      %p376 = por %p374, %p375
      %p377 = scmp.ne.s32.totalorder %s366, %s367
      %p378 = scmp.eq.s32.totalorder %s35, 0
      %p379 = por %p377, %p378
      %p380 = scmp.ne.s32.totalorder %s366, %s367
      %p381 = scmp.eq.s32.totalorder %s36, 1
      %p382 = por %p380, %p381
      %p384 = scmp.ne.s32.totalorder %s367, %s383
      %p385 = scmp.eq.s32.totalorder %s36, 0
      %p386 = por %p384, %p385
      %s387 = ssub.s32 %s30, %s37
      %p388 = scmp.eq.s32.totalorder %s387, 0
      %s390 = sadd.s32 %s389, 1
      %s391 = scalar_select %p388, %s389, %s390
      %p394 = pneg %p388
      %p395 = scmp.eq.s32.totalorder %s30, 1
      %p396 = por %p394, %p395
      %p397 = scmp.ne.s32.totalorder %s389, %s392
      %p398 = scmp.eq.s32.totalorder %s30, 0
      %p399 = por %p397, %p398
      %p400 = scmp.ne.s32.totalorder %s389, %s392
      %p401 = scmp.eq.s32.totalorder %s35, 1
      %p402 = por %p400, %p401
      %p403 = scmp.ne.s32.totalorder %s392, %s393
      %p404 = scmp.eq.s32.totalorder %s35, 0
      %p405 = por %p403, %p404
      %p406 = scmp.ne.s32.totalorder %s392, %s393
      %p407 = scmp.eq.s32.totalorder %s36, 1
      %p408 = por %p406, %p407
      %p410 = scmp.ne.s32.totalorder %s393, %s409
      %p411 = scmp.eq.s32.totalorder %s36, 0
      %p412 = por %p410, %p411
      %s413 = ssub.s32 %s30, %s37
      %p414 = scmp.eq.s32.totalorder %s413, 0
      %s416 = sadd.s32 %s415, 1
      %s417 = scalar_select %p414, %s415, %s416
      %p420 = pneg %p414
      %p421 = scmp.eq.s32.totalorder %s30, 1
      %p422 = por %p420, %p421
      %p423 = scmp.ne.s32.totalorder %s415, %s418
      %p424 = scmp.eq.s32.totalorder %s30, 0
      %p425 = por %p423, %p424
      %p426 = scmp.ne.s32.totalorder %s415, %s418
      %p427 = scmp.eq.s32.totalorder %s35, 1
      %p428 = por %p426, %p427
      %p429 = scmp.ne.s32.totalorder %s418, %s419
      %p430 = scmp.eq.s32.totalorder %s35, 0
      %p431 = por %p429, %p430
      %p432 = scmp.ne.s32.totalorder %s418, %s419
      %p433 = scmp.eq.s32.totalorder %s36, 1
      %p434 = por %p432, %p433
      %p436 = scmp.ne.s32.totalorder %s419, %s435
      %p437 = scmp.eq.s32.totalorder %s36, 0
      %p438 = por %p436, %p437
      %s439 = ssub.s32 %s30, %s37
      %p440 = scmp.eq.s32.totalorder %s439, 0
      %s442 = sadd.s32 %s441, 1
      %s443 = scalar_select %p440, %s441, %s442
      %p446 = pneg %p440
      %p447 = scmp.eq.s32.totalorder %s30, 1
      %p448 = por %p446, %p447
      %p449 = scmp.ne.s32.totalorder %s441, %s444
      %p450 = scmp.eq.s32.totalorder %s30, 0
      %p451 = por %p449, %p450
      %p452 = scmp.ne.s32.totalorder %s441, %s444
      %p453 = scmp.eq.s32.totalorder %s35, 1
      %p454 = por %p452, %p453
      %p455 = scmp.ne.s32.totalorder %s444, %s445
      %p456 = scmp.eq.s32.totalorder %s35, 0
      %p457 = por %p455, %p456
      %p458 = scmp.ne.s32.totalorder %s444, %s445
      %p459 = scmp.eq.s32.totalorder %s36, 1
      %p460 = por %p458, %p459
      %p462 = scmp.ne.s32.totalorder %s445, %s461
      %p463 = scmp.eq.s32.totalorder %s36, 0
      %p464 = por %p462, %p463
      %s465 = ssub.s32 %s30, %s37
      %p466 = scmp.eq.s32.totalorder %s465, 0
      %s468 = sadd.s32 %s467, 1
      %s469 = scalar_select %p466, %s467, %s468
      %p472 = pneg %p466
      %p473 = scmp.eq.s32.totalorder %s30, 1
      %p474 = por %p472, %p473
      %p475 = scmp.ne.s32.totalorder %s467, %s470
      %p476 = scmp.eq.s32.totalorder %s30, 0
      %p477 = por %p475, %p476
      %p478 = scmp.ne.s32.totalorder %s467, %s470
      %p479 = scmp.eq.s32.totalorder %s35, 1
      %p480 = por %p478, %p479
      %p481 = scmp.ne.s32.totalorder %s470, %s471
      %p482 = scmp.eq.s32.totalorder %s35, 0
      %p483 = por %p481, %p482
      %p484 = scmp.ne.s32.totalorder %s470, %s471
      %p485 = scmp.eq.s32.totalorder %s36, 1
      %p486 = por %p484, %p485
      %p488 = scmp.ne.s32.totalorder %s471, %s487
      %p489 = scmp.eq.s32.totalorder %s36, 0
      %p490 = por %p488, %p489
      %s491 = ssub.s32 %s30, %s37
      %p492 = scmp.eq.s32.totalorder %s491, 0
      %s494 = sadd.s32 %s493, 1
      %s495 = scalar_select %p492, %s493, %s494
      %p498 = pneg %p492
      %p499 = scmp.eq.s32.totalorder %s30, 1
      %p500 = por %p498, %p499
      %p501 = scmp.ne.s32.totalorder %s493, %s496
      %p502 = scmp.eq.s32.totalorder %s30, 0
      %p503 = por %p501, %p502
      %p504 = scmp.ne.s32.totalorder %s493, %s496
      %p505 = scmp.eq.s32.totalorder %s35, 1
      %p506 = por %p504, %p505
      %p507 = scmp.ne.s32.totalorder %s496, %s497
      %p508 = scmp.eq.s32.totalorder %s35, 0
      %p509 = por %p507, %p508
      %p510 = scmp.ne.s32.totalorder %s496, %s497
      %p511 = scmp.eq.s32.totalorder %s36, 1
      %p512 = por %p510, %p511
      %p514 = scmp.ne.s32.totalorder %s497, %s513
      %p515 = scmp.eq.s32.totalorder %s36, 0
      %p516 = por %p514, %p515
      %s518 = sadd.s32 %s517, 1
      %p521 = scmp.eq.s32.totalorder %s30, 1
      %p522 = scmp.ne.s32.totalorder %s517, %s519
      %p523 = scmp.eq.s32.totalorder %s30, 0
      %p524 = por %p522, %p523
      %p525 = scmp.ne.s32.totalorder %s517, %s519
      %p526 = scmp.eq.s32.totalorder %s35, 1
      %p527 = por %p525, %p526
      %p528 = scmp.ne.s32.totalorder %s519, %s520
      %p529 = scmp.eq.s32.totalorder %s35, 0
      %p530 = por %p528, %p529
      %p531 = scmp.ne.s32.totalorder %s519, %s520
      %p532 = scmp.eq.s32.totalorder %s36, 1
      %p533 = por %p531, %p532
      %p535 = scmp.ne.s32.totalorder %s520, %s534
      %p536 = scmp.eq.s32.totalorder %s36, 0
      %p537 = por %p535, %p536
      %s539 = sadd.s32 %s538, 1
      %p542 = scmp.eq.s32.totalorder %s30, 1
      %p543 = scmp.ne.s32.totalorder %s538, %s540
      %p544 = scmp.eq.s32.totalorder %s30, 0
      %p545 = por %p543, %p544
      %p546 = scmp.ne.s32.totalorder %s538, %s540
      %p547 = scmp.eq.s32.totalorder %s35, 1
      %p548 = por %p546, %p547
      %p549 = scmp.ne.s32.totalorder %s540, %s541
      %p550 = scmp.eq.s32.totalorder %s35, 0
      %p551 = por %p549, %p550
      %p552 = scmp.ne.s32.totalorder %s540, %s541
      %p553 = scmp.eq.s32.totalorder %s36, 1
      %p554 = por %p552, %p553
      %p556 = scmp.ne.s32.totalorder %s541, %s555
      %p557 = scmp.eq.s32.totalorder %s36, 0
      %p558 = por %p556, %p557
      %s560 = sadd.s32 %s559, 1
      %p563 = scmp.eq.s32.totalorder %s30, 1
      %p564 = scmp.ne.s32.totalorder %s559, %s561
      %p565 = scmp.eq.s32.totalorder %s30, 0
      %p566 = por %p564, %p565
      %p567 = scmp.ne.s32.totalorder %s559, %s561
      %p568 = scmp.eq.s32.totalorder %s35, 1
      %p569 = por %p567, %p568
      %p570 = scmp.ne.s32.totalorder %s561, %s562
      %p571 = scmp.eq.s32.totalorder %s35, 0
      %p572 = por %p570, %p571
      %p573 = scmp.ne.s32.totalorder %s561, %s562
      %p574 = scmp.eq.s32.totalorder %s36, 1
      %p575 = por %p573, %p574
      %p577 = scmp.ne.s32.totalorder %s562, %s576
      %p578 = scmp.eq.s32.totalorder %s36, 0
      %p579 = por %p577, %p578
      %s581 = sadd.s32 %s580, 1
      %p584 = scmp.eq.s32.totalorder %s30, 1
      %p585 = scmp.ne.s32.totalorder %s580, %s582
      %p586 = scmp.eq.s32.totalorder %s30, 0
      %p587 = por %p585, %p586
      %p588 = scmp.ne.s32.totalorder %s580, %s582
      %p589 = scmp.eq.s32.totalorder %s35, 1
      %p590 = por %p588, %p589
      %p591 = scmp.ne.s32.totalorder %s582, %s583
      %p592 = scmp.eq.s32.totalorder %s35, 0
      %p593 = por %p591, %p592
      %p594 = scmp.ne.s32.totalorder %s582, %s583
      %p595 = scmp.eq.s32.totalorder %s36, 1
      %p596 = por %p594, %p595
      %p598 = scmp.ne.s32.totalorder %s583, %s597
      %p599 = scmp.eq.s32.totalorder %s36, 0
      %p600 = por %p598, %p599
      %s602 = sadd.s32 %s601, 1
      %p605 = scmp.eq.s32.totalorder %s30, 1
      %p606 = scmp.ne.s32.totalorder %s601, %s603
      %p607 = scmp.eq.s32.totalorder %s30, 0
      %p608 = por %p606, %p607
      %p609 = scmp.ne.s32.totalorder %s601, %s603
      %p610 = scmp.eq.s32.totalorder %s35, 1
      %p611 = por %p609, %p610
      %p612 = scmp.ne.s32.totalorder %s603, %s604
      %p613 = scmp.eq.s32.totalorder %s35, 0
      %p614 = por %p612, %p613
      %p615 = scmp.ne.s32.totalorder %s603, %s604
      %p616 = scmp.eq.s32.totalorder %s36, 1
      %p617 = por %p615, %p616
      %p619 = scmp.ne.s32.totalorder %s604, %s618
      %p620 = scmp.eq.s32.totalorder %s36, 0
      %p621 = por %p619, %p620
      %p622 = scmp.le.s32.totalorder 1, %s30
      %p623 = scmp.lt.s32.totalorder %s30, 3
      %p624 = pnand %p622, %p623
      %p625 = pneg %p624
      // Predicated region
      $region9: #{tpu_custom_call.1} parent=5 // pred_check
        _
      $region10: #{tpu_custom_call.1} parent=5 // pred_check_branch
        %627 = sbr.rel (%p624) target = $region12
      $region11: #{tpu_custom_call.1} parent=5 // pred_region
        %s628 = ssub.s32 %s30, 1
        // Predicated region
        $region13: #{tpu_custom_call.1} parent=11 // pred_check
          %p629 = pneg %p51
        $region14: #{tpu_custom_call.1} parent=11 // pred_check_branch
          %631 = sbr.rel (%p629) target = $region16
        $region15: #{tpu_custom_call.1} parent=11 // pred_region
          _
        $region16: #{tpu_custom_call.1} parent=11 // pred_fallthru
          _
        // Predicated region
        $region17: #{tpu_custom_call.1} parent=11 // pred_check
          %p632 = pneg %p72
        $region18: #{tpu_custom_call.1} parent=11 // pred_check_branch
          %634 = sbr.rel (%p632) target = $region20
        $region19: #{tpu_custom_call.1} parent=11 // pred_region
          _
        $region20: #{tpu_custom_call.1} parent=11 // pred_fallthru
          _
        // Predicated region
        $region21: #{tpu_custom_call.1} parent=11 // pred_check
          %p635 = pneg %p93
        $region22: #{tpu_custom_call.1} parent=11 // pred_check_branch
          %637 = sbr.rel (%p635) target = $region24
        $region23: #{tpu_custom_call.1} parent=11 // pred_region
          _
        $region24: #{tpu_custom_call.1} parent=11 // pred_fallthru
          _
        // Predicated region
        $region25: #{tpu_custom_call.1} parent=11 // pred_check
          %p638 = pneg %p530
        $region26: #{tpu_custom_call.1} parent=11 // pred_check_branch
          %640 = sbr.rel (%p638) target = $region28
        $region27: #{tpu_custom_call.1} parent=11 // pred_region
          _
        $region28: #{tpu_custom_call.1} parent=11 // pred_fallthru
          _
        // Predicated region
        $region29: #{tpu_custom_call.1} parent=11 // pred_check
          %p641 = pneg %p551
        $region30: #{tpu_custom_call.1} parent=11 // pred_check_branch
          %643 = sbr.rel (%p641) target = $region32
        $region31: #{tpu_custom_call.1} parent=11 // pred_region
          _
        $region32: #{tpu_custom_call.1} parent=11 // pred_fallthru
          _
        // Predicated region
        $region33: #{tpu_custom_call.1} parent=11 // pred_check
          %p644 = pneg %p572
        $region34: #{tpu_custom_call.1} parent=11 // pred_check_branch
          %646 = sbr.rel (%p644) target = $region36
        $region35: #{tpu_custom_call.1} parent=11 // pred_region
          _
        $region36: #{tpu_custom_call.1} parent=11 // pred_fallthru
          _
        // Predicated region
        $region37: #{tpu_custom_call.1} parent=11 // pred_check
          %p647 = pneg %p593
        $region38: #{tpu_custom_call.1} parent=11 // pred_check_branch
          %649 = sbr.rel (%p647) target = $region40
        $region39: #{tpu_custom_call.1} parent=11 // pred_region
          _
        $region40: #{tpu_custom_call.1} parent=11 // pred_fallthru
          _
      $region12: #{tpu_custom_call.1} parent=5 // pred_fallthru
        _
      %p650 = scmp.lt.s32.totalorder %s30, 2
      // Predicated region
      $region41: #{tpu_custom_call.1} parent=5 // pred_check
        %p651 = pneg %p650
      $region42: #{tpu_custom_call.1} parent=5 // pred_check_branch
        %653 = sbr.rel (%p651) target = $region44
      $region43: #{tpu_custom_call.1} parent=5 // pred_region
        // Predicated region
        $region45: #{tpu_custom_call.1} parent=43 // pred_check
          %p654 = pneg %p113
        $region46: #{tpu_custom_call.1} parent=43 // pred_check_branch
          %656 = sbr.rel (%p654) target = $region48
        $region47: #{tpu_custom_call.1} parent=43 // pred_region
          %p657 = scmp.lt.s32.totalorder %s30, 1
          %s658 = scalar_select %p657, %s30, 1
          %s659 = smul.addr %s658, 4
          %s660 = smul.addr %s659, 8
          %s661 = scalar_lea.vmem %s3, %s660
        $region48: #{tpu_custom_call.1} parent=43 // pred_fallthru
          _
        // Predicated region
        $region49: #{tpu_custom_call.1} parent=43 // pred_check
          %p662 = pneg %p139
        $region50: #{tpu_custom_call.1} parent=43 // pred_check_branch
          %664 = sbr.rel (%p662) target = $region52
        $region51: #{tpu_custom_call.1} parent=43 // pred_region
          %p665 = scmp.lt.s32.totalorder %s30, 1
          %s666 = scalar_select %p665, %s30, 1
          %s667 = scalar_lea.vmem %s4, %s666
        $region52: #{tpu_custom_call.1} parent=43 // pred_fallthru
          _
        // Predicated region
        $region53: #{tpu_custom_call.1} parent=43 // pred_check
          %p668 = pneg %p165
        $region54: #{tpu_custom_call.1} parent=43 // pred_check_branch
          %670 = sbr.rel (%p668) target = $region56
        $region55: #{tpu_custom_call.1} parent=43 // pred_region
          %p671 = scmp.lt.s32.totalorder %s30, 1
          %s672 = scalar_select %p671, %s30, 1
          %s673 = smul.addr %s672, 4
          %s674 = smul.addr %s673, 8
          %s675 = scalar_lea.vmem %s5, %s674
        $region56: #{tpu_custom_call.1} parent=43 // pred_fallthru
          _
        // Predicated region
        $region57: #{tpu_custom_call.1} parent=43 // pred_check
          %p676 = pneg %p191
        $region58: #{tpu_custom_call.1} parent=43 // pred_check_branch
          %678 = sbr.rel (%p676) target = $region60
        $region59: #{tpu_custom_call.1} parent=43 // pred_region
          %p679 = scmp.lt.s32.totalorder %s30, 1
          %s680 = scalar_select %p679, %s30, 1
          %s681 = scalar_lea.vmem %s6, %s680
        $region60: #{tpu_custom_call.1} parent=43 // pred_fallthru
          _
        // Predicated region
        $region61: #{tpu_custom_call.1} parent=43 // pred_check
          %p682 = pneg %p217
        $region62: #{tpu_custom_call.1} parent=43 // pred_check_branch
          %684 = sbr.rel (%p682) target = $region64
        $region63: #{tpu_custom_call.1} parent=43 // pred_region
          %p685 = scmp.lt.s32.totalorder %s30, 1
          %s686 = scalar_select %p685, %s30, 1
          %s687 = smul.addr %s686, 4
          %s688 = smul.addr %s687, 8
          %s689 = scalar_lea.vmem %s7, %s688
        $region64: #{tpu_custom_call.1} parent=43 // pred_fallthru
          _
        // Predicated region
        $region65: #{tpu_custom_call.1} parent=43 // pred_check
          %p690 = pneg %p243
        $region66: #{tpu_custom_call.1} parent=43 // pred_check_branch
          %692 = sbr.rel (%p690) target = $region68
        $region67: #{tpu_custom_call.1} parent=43 // pred_region
          %p693 = scmp.lt.s32.totalorder %s30, 1
          %s694 = scalar_select %p693, %s30, 1
          %s695 = scalar_lea.vmem %s8, %s694
        $region68: #{tpu_custom_call.1} parent=43 // pred_fallthru
          _
        // Predicated region
        $region69: #{tpu_custom_call.1} parent=43 // pred_check
          %p696 = pneg %p269
        $region70: #{tpu_custom_call.1} parent=43 // pred_check_branch
          %698 = sbr.rel (%p696) target = $region72
        $region71: #{tpu_custom_call.1} parent=43 // pred_region
          %p699 = scmp.lt.s32.totalorder %s30, 1
          %s700 = scalar_select %p699, %s30, 1
          %s701 = smul.addr %s700, 4
          %s702 = smul.addr %s701, 8
          %s703 = scalar_lea.vmem %s9, %s702
        $region72: #{tpu_custom_call.1} parent=43 // pred_fallthru
          _
        // Predicated region
        $region73: #{tpu_custom_call.1} parent=43 // pred_check
          %p704 = pneg %p295
        $region74: #{tpu_custom_call.1} parent=43 // pred_check_branch
          %706 = sbr.rel (%p704) target = $region76
        $region75: #{tpu_custom_call.1} parent=43 // pred_region
          %p707 = scmp.lt.s32.totalorder %s30, 1
          %s708 = scalar_select %p707, %s30, 1
          %s709 = scalar_lea.vmem %s10, %s708
        $region76: #{tpu_custom_call.1} parent=43 // pred_fallthru
          _
        // Predicated region
        $region77: #{tpu_custom_call.1} parent=43 // pred_check
          %p710 = pneg %p321
        $region78: #{tpu_custom_call.1} parent=43 // pred_check_branch
          %712 = sbr.rel (%p710) target = $region80
        $region79: #{tpu_custom_call.1} parent=43 // pred_region
          %p713 = scmp.lt.s32.totalorder %s30, 1
          %s714 = scalar_select %p713, %s30, 1
          %s715 = scalar_lea.vmem %s11, %s714
        $region80: #{tpu_custom_call.1} parent=43 // pred_fallthru
          _
        // Predicated region
        $region81: #{tpu_custom_call.1} parent=43 // pred_check
          %p716 = pneg %p347
        $region82: #{tpu_custom_call.1} parent=43 // pred_check_branch
          %718 = sbr.rel (%p716) target = $region84
        $region83: #{tpu_custom_call.1} parent=43 // pred_region
          %p719 = scmp.lt.s32.totalorder %s30, 1
          %s720 = scalar_select %p719, %s30, 1
          %s721 = scalar_lea.vmem %s12, %s720
        $region84: #{tpu_custom_call.1} parent=43 // pred_fallthru
          _
        // Predicated region
        $region85: #{tpu_custom_call.1} parent=43 // pred_check
          %p722 = pneg %p373
        $region86: #{tpu_custom_call.1} parent=43 // pred_check_branch
          %724 = sbr.rel (%p722) target = $region88
        $region87: #{tpu_custom_call.1} parent=43 // pred_region
          %p725 = scmp.lt.s32.totalorder %s30, 1
          %s726 = scalar_select %p725, %s30, 1
          %s727 = smul.addr %s726, 4
          %s728 = smul.addr %s727, 8
          %s729 = scalar_lea.vmem %s13, %s728
        $region88: #{tpu_custom_call.1} parent=43 // pred_fallthru
          _
        // Predicated region
        $region89: #{tpu_custom_call.1} parent=43 // pred_check
          %p730 = pneg %p399
        $region90: #{tpu_custom_call.1} parent=43 // pred_check_branch
          %732 = sbr.rel (%p730) target = $region92
        $region91: #{tpu_custom_call.1} parent=43 // pred_region
          %p733 = scmp.lt.s32.totalorder %s30, 1
          %s734 = scalar_select %p733, %s30, 1
          %s735 = scalar_lea.vmem %s14, %s734
        $region92: #{tpu_custom_call.1} parent=43 // pred_fallthru
          _
        // Predicated region
        $region93: #{tpu_custom_call.1} parent=43 // pred_check
          %p736 = pneg %p425
        $region94: #{tpu_custom_call.1} parent=43 // pred_check_branch
          %738 = sbr.rel (%p736) target = $region96
        $region95: #{tpu_custom_call.1} parent=43 // pred_region
          %p739 = scmp.lt.s32.totalorder %s30, 1
          %s740 = scalar_select %p739, %s30, 1
          %s741 = smul.addr %s740, 16
          %s742 = smul.addr %s741, 8
          %s743 = scalar_lea.vmem %s15, %s742
        $region96: #{tpu_custom_call.1} parent=43 // pred_fallthru
          _
        // Predicated region
        $region97: #{tpu_custom_call.1} parent=43 // pred_check
          %p744 = pneg %p451
        $region98: #{tpu_custom_call.1} parent=43 // pred_check_branch
          %746 = sbr.rel (%p744) target = $region100
        $region99: #{tpu_custom_call.1} parent=43 // pred_region
          %p747 = scmp.lt.s32.totalorder %s30, 1
          %s748 = scalar_select %p747, %s30, 1
          %s749 = scalar_lea.vmem %s16, %s748
        $region100: #{tpu_custom_call.1} parent=43 // pred_fallthru
          _
        // Predicated region
        $region101: #{tpu_custom_call.1} parent=43 // pred_check
          %p750 = pneg %p477
        $region102: #{tpu_custom_call.1} parent=43 // pred_check_branch
          %752 = sbr.rel (%p750) target = $region104
        $region103: #{tpu_custom_call.1} parent=43 // pred_region
          %p753 = scmp.lt.s32.totalorder %s30, 1
          %s754 = scalar_select %p753, %s30, 1
          %s755 = scalar_lea.vmem %s17, %s754
        $region104: #{tpu_custom_call.1} parent=43 // pred_fallthru
          _
        // Predicated region
        $region105: #{tpu_custom_call.1} parent=43 // pred_check
          %p756 = pneg %p503
        $region106: #{tpu_custom_call.1} parent=43 // pred_check_branch
          %758 = sbr.rel (%p756) target = $region108
        $region107: #{tpu_custom_call.1} parent=43 // pred_region
          %p759 = scmp.lt.s32.totalorder %s30, 1
          %s760 = scalar_select %p759, %s30, 1
          %s761 = scalar_lea.vmem %s18, %s760
        $region108: #{tpu_custom_call.1} parent=43 // pred_fallthru
          _
      $region44: #{tpu_custom_call.1} parent=5 // pred_fallthru
        _
      %p762 = scmp.le.s32.totalorder 1, %s30
      %p763 = scmp.lt.s32.totalorder %s30, 3
      %p764 = pnand %p762, %p763
      %p765 = pneg %p764
      // Predicated region
      $region109: #{tpu_custom_call.1} parent=5 // pred_check
        _
      $region110: #{tpu_custom_call.1} parent=5 // pred_check_branch
        %767 = sbr.rel (%p764) target = $region112
      $region111: #{tpu_custom_call.1} parent=5 // pred_region
        %s768 = ssub.s32 %s30, 1
        %p769 = pneg %p51
        %p770 = pneg %p48
        %p771 = pneg %p72
        %p772 = pneg %p69
        %p773 = pneg %p93
        %p774 = pneg %p90
        %p775 = scmp.lt.s32.totalorder %s35, 1
        %s776 = scalar_select %p775, %s35, 1
        %s777 = smul.addr %s776, 4
        %s778 = smul.addr %s777, 8
        %s779 = scalar_lea.vmem %s3, %s778
        %p780 = pneg %p119
        %p781 = pneg %p116
        %p782 = scmp.lt.s32.totalorder %s35, 1
        %s783 = scalar_select %p782, %s35, 1
        %s784 = scalar_lea.vmem %s4, %s783
        %p785 = pneg %p145
        %p786 = pneg %p142
        %p787 = scmp.lt.s32.totalorder %s35, 1
        %s788 = scalar_select %p787, %s35, 1
        %s789 = smul.addr %s788, 4
        %s790 = smul.addr %s789, 8
        %s791 = scalar_lea.vmem %s5, %s790
        %p792 = pneg %p171
        %p793 = pneg %p168
        %p794 = scmp.lt.s32.totalorder %s35, 1
        %s795 = scalar_select %p794, %s35, 1
        %s796 = scalar_lea.vmem %s6, %s795
        %p797 = pneg %p197
        %p798 = pneg %p194
        %p799 = scmp.lt.s32.totalorder %s35, 1
        %s800 = scalar_select %p799, %s35, 1
        %s801 = smul.addr %s800, 4
        %s802 = smul.addr %s801, 8
        %s803 = scalar_lea.vmem %s7, %s802
        %p804 = pneg %p223
        %p805 = pneg %p220
        %p806 = scmp.lt.s32.totalorder %s35, 1
        %s807 = scalar_select %p806, %s35, 1
        %s808 = scalar_lea.vmem %s8, %s807
        %p809 = pneg %p249
        %p810 = pneg %p246
        %p811 = scmp.lt.s32.totalorder %s35, 1
        %s812 = scalar_select %p811, %s35, 1
        %s813 = smul.addr %s812, 4
        %s814 = smul.addr %s813, 8
        %s815 = scalar_lea.vmem %s9, %s814
        %p816 = pneg %p275
        %p817 = pneg %p272
        %p818 = scmp.lt.s32.totalorder %s35, 1
        %s819 = scalar_select %p818, %s35, 1
        %s820 = scalar_lea.vmem %s10, %s819
        %p821 = pneg %p301
        %p822 = pneg %p298
        %p823 = scmp.lt.s32.totalorder %s35, 1
        %s824 = scalar_select %p823, %s35, 1
        %s825 = scalar_lea.vmem %s11, %s824
        %p826 = pneg %p327
        %p827 = pneg %p324
        %p828 = scmp.lt.s32.totalorder %s35, 1
        %s829 = scalar_select %p828, %s35, 1
        %s830 = scalar_lea.vmem %s12, %s829
        %p831 = pneg %p353
        %p832 = pneg %p350
        %p833 = scmp.lt.s32.totalorder %s35, 1
        %s834 = scalar_select %p833, %s35, 1
        %s835 = smul.addr %s834, 4
        %s836 = smul.addr %s835, 8
        %s837 = scalar_lea.vmem %s13, %s836
        %p838 = pneg %p379
        %p839 = pneg %p376
        %p840 = scmp.lt.s32.totalorder %s35, 1
        %s841 = scalar_select %p840, %s35, 1
        %s842 = scalar_lea.vmem %s14, %s841
        %p843 = pneg %p405
        %p844 = pneg %p402
        %p845 = scmp.lt.s32.totalorder %s35, 1
        %s846 = scalar_select %p845, %s35, 1
        %s847 = smul.addr %s846, 16
        %s848 = smul.addr %s847, 8
        %s849 = scalar_lea.vmem %s15, %s848
        %p850 = pneg %p431
        %p851 = pneg %p428
        %p852 = scmp.lt.s32.totalorder %s35, 1
        %s853 = scalar_select %p852, %s35, 1
        %s854 = scalar_lea.vmem %s16, %s853
        %p855 = pneg %p457
        %p856 = pneg %p454
        %p857 = scmp.lt.s32.totalorder %s35, 1
        %s858 = scalar_select %p857, %s35, 1
        %s859 = scalar_lea.vmem %s17, %s858
        %p860 = pneg %p483
        %p861 = pneg %p480
        %p862 = scmp.lt.s32.totalorder %s35, 1
        %s863 = scalar_select %p862, %s35, 1
        %s864 = scalar_lea.vmem %s18, %s863
        %p865 = pneg %p509
        %p866 = pneg %p506
        %p867 = pneg %p530
        %p868 = pneg %p527
        %p869 = pneg %p551
        %p870 = pneg %p548
        %p871 = pneg %p572
        %p872 = pneg %p569
        %p873 = pneg %p593
        %p874 = pneg %p590
        %p875 = pneg %p614
        %p876 = pneg %p611
        %p877 = scmp.lt.s32.totalorder %s35, 1
        %s878 = scalar_select %p877, %s35, 1
        %s879 = smul.addr %s878, 4
        %s880 = smul.addr %s879, 8
        %s881 = scalar_lea.vmem %s3, %s880
        %p882 = scmp.lt.s32.totalorder %s35, 1
        %s883 = scalar_select %p882, %s35, 1
        %s884 = scalar_lea.vmem %s4, %s883
        %p885 = scmp.lt.s32.totalorder %s35, 1
        %s886 = scalar_select %p885, %s35, 1
        %s887 = smul.addr %s886, 4
        %s888 = smul.addr %s887, 8
        %s889 = scalar_lea.vmem %s5, %s888
        %p890 = scmp.lt.s32.totalorder %s35, 1
        %s891 = scalar_select %p890, %s35, 1
        %s892 = scalar_lea.vmem %s6, %s891
        %p893 = scmp.lt.s32.totalorder %s35, 1
        %s894 = scalar_select %p893, %s35, 1
        %s895 = smul.addr %s894, 4
        %s896 = smul.addr %s895, 8
        %s897 = scalar_lea.vmem %s7, %s896
        %p898 = scmp.lt.s32.totalorder %s35, 1
        %s899 = scalar_select %p898, %s35, 1
        %s900 = scalar_lea.vmem %s8, %s899
        %p901 = scmp.lt.s32.totalorder %s35, 1
        %s902 = scalar_select %p901, %s35, 1
        %s903 = smul.addr %s902, 4
        %s904 = smul.addr %s903, 8
        %s905 = scalar_lea.vmem %s9, %s904
        %p906 = scmp.lt.s32.totalorder %s35, 1
        %s907 = scalar_select %p906, %s35, 1
        %s908 = scalar_lea.vmem %s10, %s907
        %p909 = scmp.lt.s32.totalorder %s35, 1
        %s910 = scalar_select %p909, %s35, 1
        %s911 = scalar_lea.vmem %s11, %s910
        %p912 = scmp.lt.s32.totalorder %s35, 1
        %s913 = scalar_select %p912, %s35, 1
        %s914 = scalar_lea.vmem %s12, %s913
        %p915 = scmp.lt.s32.totalorder %s35, 1
        %s916 = scalar_select %p915, %s35, 1
        %s917 = smul.addr %s916, 4
        %s918 = smul.addr %s917, 8
        %s919 = scalar_lea.vmem %s13, %s918
        %p920 = scmp.lt.s32.totalorder %s35, 1
        %s921 = scalar_select %p920, %s35, 1
        %s922 = scalar_lea.vmem %s14, %s921
        %p923 = scmp.lt.s32.totalorder %s35, 1
        %s924 = scalar_select %p923, %s35, 1
        %s925 = smul.addr %s924, 16
        %s926 = smul.addr %s925, 8
        %s927 = scalar_lea.vmem %s15, %s926
        %p928 = scmp.lt.s32.totalorder %s35, 1
        %s929 = scalar_select %p928, %s35, 1
        %s930 = scalar_lea.vmem %s16, %s929
        %p931 = scmp.lt.s32.totalorder %s35, 1
        %s932 = scalar_select %p931, %s35, 1
        %s933 = scalar_lea.vmem %s17, %s932
        %p934 = scmp.lt.s32.totalorder %s35, 1
        %s935 = scalar_select %p934, %s35, 1
        %s936 = scalar_lea.vmem %s18, %s935
        %p937 = scmp.eq.s32.totalorder %s35, 0
        // Predicated region
        $region113: #{tpu_custom_call.1} parent=111 // pred_check
          %p938 = pneg %p937
        $region114: #{tpu_custom_call.1} parent=111 // pred_check_branch
          %940 = sbr.rel (%p938) target = $region116
        $region115: #{tpu_custom_call.1} parent=111 // pred_region
          %v941 = vld [vmem:[%s0] sm:$0xff]
          %v942 = vld [vmem:[%s0 + $0x8] sm:$0xff]
          %v943 = vld [vmem:[%s0 + $0x10] sm:$0xff]
          %v944 = vld [vmem:[%s0 + $0x18] sm:$0xff]
          %v945 = vld [vmem:[%s1] sm:$0xff]
          %v946 = vld [vmem:[%s1 + $0x8] sm:$0xff]
          %v947 = vld [vmem:[%s1 + $0x10] sm:$0xff]
          %v948 = vld [vmem:[%s1 + $0x18] sm:$0xff]
          %v949 = vld [vmem:[%s1 + $0x20] sm:$0xff]
          %v950 = vld [vmem:[%s1 + $0x28] sm:$0xff]
          %v951 = vld [vmem:[%s1 + $0x30] sm:$0xff]
          %v952 = vld [vmem:[%s1 + $0x38] sm:$0xff]
          %v953 = vld [vmem:[%s1 + $0x40] sm:$0xff]
          %v954 = vld [vmem:[%s1 + $0x48] sm:$0xff]
          %v955 = vld [vmem:[%s1 + $0x50] sm:$0xff]
          %v956 = vld [vmem:[%s1 + $0x58] sm:$0xff]
          %v957 = vld [vmem:[%s1 + $0x60] sm:$0xff]
          %v958 = vld [vmem:[%s1 + $0x68] sm:$0xff]
          %v959 = vld [vmem:[%s1 + $0x70] sm:$0xff]
          %v960 = vld [vmem:[%s1 + $0x78] sm:$0xff]
          %v961 = vld [vmem:[%s1 + $0x80] sm:$0xff]
          %v962 = vld [vmem:[%s1 + $0x88] sm:$0xff]
          %v963 = vld [vmem:[%s1 + $0x90] sm:$0xff]
          %v964 = vld [vmem:[%s1 + $0x98] sm:$0xff]
          %v965 = vld [vmem:[%s1 + $0xa0] sm:$0xff]
          %v966 = vld [vmem:[%s1 + $0xa8] sm:$0xff]
          %v967 = vld [vmem:[%s1 + $0xb0] sm:$0xff]
          %v968 = vld [vmem:[%s1 + $0xb8] sm:$0xff]
          %v969 = vld [vmem:[%s1 + $0xc0] sm:$0xff]
          %v970 = vld [vmem:[%s1 + $0xc8] sm:$0xff]
          %v971 = vld [vmem:[%s1 + $0xd0] sm:$0xff]
          %v972 = vld [vmem:[%s1 + $0xd8] sm:$0xff]
          %v973 = vld [vmem:[%s1 + $0xe0] sm:$0xff]
          %v974 = vld [vmem:[%s1 + $0xe8] sm:$0xff]
          %v975 = vld [vmem:[%s1 + $0xf0] sm:$0xff]
          %v976 = vld [vmem:[%s1 + $0xf8] sm:$0xff]
          %v977 = vld [vmem:[%s2] sm:$0xff]
          %v978 = vld [vmem:[%s2 + $0x8] sm:$0xff]
          %979 = vmatprep.subr.mxu0 0.0
          %980 = vmatpush1.msra.mxu0 %v960
          %981 = vmatprep.subr.mxu0 0.0
          %982 = vmatpush1.msra.mxu0 %v959
          %983 = vmatprep.subr.mxu0 0.0
          %984 = vmatpush1.msra.mxu0 %v958
          %985 = vmatprep.subr.mxu0 0.0
          %986 = vmatpush1.msra.mxu0 %v957
          %987 = vmatprep.subr.mxu0 0.0
          %988 = vmatpush1.msra.mxu0 %v956
          %989 = vmatprep.subr.mxu0 0.0
          %990 = vmatpush1.msra.mxu0 %v955
          %991 = vmatprep.subr.mxu0 0.0
          %992 = vmatpush1.msra.mxu0 %v954
          %993 = vmatprep.subr.mxu0 0.0
          %994 = vmatpush1.msra.mxu0 %v953
          %995 = vmatprep.subr.mxu0 0.0
          %996 = vmatpush1.msra.mxu0 %v952
          %997 = vmatprep.subr.mxu0 0.0
          %998 = vmatpush1.msra.mxu0 %v951
          %999 = vmatprep.subr.mxu0 0.0
          %1000 = vmatpush1.msra.mxu0 %v950
          %1001 = vmatprep.subr.mxu0 0.0
          %1002 = vmatpush1.msra.mxu0 %v949
          %1003 = vmatprep.subr.mxu0 0.0
          %1004 = vmatpush1.msra.mxu0 %v948
          %1005 = vmatprep.subr.mxu0 0.0
          %1006 = vmatpush1.msra.mxu0 %v947
          %1007 = vmatprep.subr.mxu0 0.0
          %1008 = vmatpush1.msra.mxu0 %v946
          %1009 = vmatprep.subr.mxu0 0.0
          %1010 = vmatpush1.msra.mxu0 %v945
          %1011 = vmatprep.subr.mxu0 0.0
          %1012 = vmatpush2.msra.mxu0 %v976
          %1013 = vmatprep.subr.mxu0 0.0
          %1014 = vmatpush2.msra.mxu0 %v975
          %1015 = vmatprep.subr.mxu0 0.0
          %1016 = vmatpush2.msra.mxu0 %v974
          %1017 = vmatprep.subr.mxu0 0.0
          %1018 = vmatpush2.msra.mxu0 %v973
          %1019 = vmatprep.subr.mxu0 0.0
          %1020 = vmatpush2.msra.mxu0 %v972
          %1021 = vmatprep.subr.mxu0 0.0
          %1022 = vmatpush2.msra.mxu0 %v971
          %1023 = vmatprep.subr.mxu0 0.0
          %1024 = vmatpush2.msra.mxu0 %v970
          %1025 = vmatprep.subr.mxu0 0.0
          %1026 = vmatpush2.msra.mxu0 %v969
          %1027 = vmatprep.subr.mxu0 0.0
          %1028 = vmatpush2.msra.mxu0 %v968
          %1029 = vmatprep.subr.mxu0 0.0
          %1030 = vmatpush2.msra.mxu0 %v967
          %1031 = vmatprep.subr.mxu0 0.0
          %1032 = vmatpush2.msra.mxu0 %v966
          %1033 = vmatprep.subr.mxu0 0.0
          %1034 = vmatpush2.msra.mxu0 %v965
          %1035 = vmatprep.subr.mxu0 0.0
          %1036 = vmatpush2.msra.mxu0 %v964
          %1037 = vmatprep.subr.mxu0 0.0
          %1038 = vmatpush2.msra.mxu0 %v963
          %1039 = vmatprep.subr.mxu0 0.0
          %1040 = vmatpush2.msra.mxu0 %v962
          %1041 = vmatprep.subr.mxu0 0.0
          %1042 = vmatpush2.msra.mxu0 %v961
          %1043 = vmatprep.mubr.f32.mxu0 %v942
          %1044 = vmatmul.mubr.f32.gmra.mxu0 %v941
          %v1045 = vpop.f32.mrf.mxu0
          %v1046 = vadd.f32 %v977, %v1045
          %v1047 = vpop.f32.mrf.mxu0
          %1048 = vmatprep.mubr.f32.mxu0 %v944
          %1049 = vmatmul.mubr.f32.gmra.mxu0 %v943
          %v1050 = vpop.f32.mrf.mxu0
          %v1051 = vadd.f32 %v978, %v1050
          %v1052 = vpop.f32.mrf.mxu0
          %1053 = vdwg.mxu0
          %vm1054 = vcmask 261120
          %1055 = vst.msk [vmem:[#allocation2] sm:$0xff] %vm1054, %v1046
          %1056 = vst.msk [vmem:[#allocation2 + $0x8] sm:$0xff] %vm1054, %v1051
        $region116: #{tpu_custom_call.1} parent=111 // pred_fallthru
          _
        %v1057 = vld [vmem:[#allocation2] sm:$0xff]
        %v1058 = vld [vmem:[#allocation2 + $0x8] sm:$0xff]
        %v1059 = vld [vmem:[%s881] sm:$0xff]
        %v1060 = vld [vmem:[%s881 + $0x8] sm:$0xff]
        %v1061 = vld [vmem:[%s881 + $0x10] sm:$0xff]
        %v1062 = vld [vmem:[%s881 + $0x18] sm:$0xff]
        %v1063 = vld [vmem:[%s884] sm:$0x1]
        %v1065 = vlaneseq
        %v1066 = vshrl.u32 %v1065, 7
        %v1067 = vsub.s32 0, %v1066
        %v1068 = vrot.slane %v1063, %v1067
        %vm1070 = vcmask 261120
        %v1072 = vsel %vm1070, %v1057, 0
        %v1075 = vsel %vm1070, %v1058, 0
        %1077 = vmatprep.subr.mxu0 0.0
        %1078 = vmatpush1.msra.mxu0 0.0
        %1079 = vmatprep.subr.mxu0 0.0
        %1080 = vmatpush1.msra.mxu0 0.0
        %1081 = vmatprep.subr.mxu0 0.0
        %1082 = vmatpush1.msra.mxu0 0.0
        %1083 = vmatprep.subr.mxu0 0.0
        %1084 = vmatpush1.msra.mxu0 0.0
        %1085 = vmatprep.subr.mxu0 0.0
        %1086 = vmatpush1.msra.mxu0 0.0
        %1087 = vmatprep.subr.mxu0 0.0
        %1088 = vmatpush1.msra.mxu0 0.0
        %1089 = vmatprep.subr.mxu0 0.0
        %1090 = vmatpush1.msra.mxu0 0.0
        %1091 = vmatprep.subr.mxu0 0.0
        %1092 = vmatpush1.msra.mxu0 0.0
        %1093 = vmatprep.subr.mxu0 0.0
        %1094 = vmatpush1.msra.mxu0 0.0
        %1095 = vmatprep.subr.mxu0 0.0
        %1096 = vmatpush1.msra.mxu0 0.0
        %1097 = vmatprep.subr.mxu0 0.0
        %1098 = vmatpush1.msra.mxu0 0.0
        %1099 = vmatprep.subr.mxu0 0.0
        %1100 = vmatpush1.msra.mxu0 0.0
        %1101 = vmatprep.subr.mxu0 0.0
        %1102 = vmatpush1.msra.mxu0 %v1062
        %1103 = vmatprep.subr.mxu0 0.0
        %1104 = vmatpush1.msra.mxu0 %v1061
        %1105 = vmatprep.subr.mxu0 0.0
        %1106 = vmatpush1.msra.mxu0 %v1060
        %1107 = vmatprep.subr.mxu0 0.0
        %1108 = vmatpush1.msra.mxu0 %v1059
        %1109 = vmatprep.subr.mxu0 0.0
        %1110 = vmatpush2.msra.mxu0 0.0
        %1111 = vmatprep.subr.mxu0 0.0
        %1112 = vmatpush2.msra.mxu0 0.0
        %1113 = vmatprep.subr.mxu0 0.0
        %1114 = vmatpush2.msra.mxu0 0.0
        %1115 = vmatprep.subr.mxu0 0.0
        %1116 = vmatpush2.msra.mxu0 0.0
        %1117 = vmatprep.subr.mxu0 0.0
        %1118 = vmatpush2.msra.mxu0 0.0
        %1119 = vmatprep.subr.mxu0 0.0
        %1120 = vmatpush2.msra.mxu0 0.0
        %1121 = vmatprep.subr.mxu0 0.0
        %1122 = vmatpush2.msra.mxu0 0.0
        %1123 = vmatprep.subr.mxu0 0.0
        %1124 = vmatpush2.msra.mxu0 0.0
        %1125 = vmatprep.subr.mxu0 0.0
        %1126 = vmatpush2.msra.mxu0 0.0
        %1127 = vmatprep.subr.mxu0 0.0
        %1128 = vmatpush2.msra.mxu0 0.0
        %1129 = vmatprep.subr.mxu0 0.0
        %1130 = vmatpush2.msra.mxu0 0.0
        %1131 = vmatprep.subr.mxu0 0.0
        %1132 = vmatpush2.msra.mxu0 0.0
        %1133 = vmatprep.subr.mxu0 0.0
        %1134 = vmatpush2.msra.mxu0 0.0
        %1135 = vmatprep.subr.mxu0 0.0
        %1136 = vmatpush2.msra.mxu0 0.0
        %1137 = vmatprep.subr.mxu0 0.0
        %1138 = vmatpush2.msra.mxu0 0.0
        %1139 = vmatprep.subr.mxu0 0.0
        %1140 = vmatpush2.msra.mxu0 0.0
        %1141 = vmatprep.mubr.f32.mxu0 0.0
        %1142 = vmatmul.mubr.f32.gmra.mxu0 %v1072
        %v1143 = vpop.f32.mrf.mxu0
        %v1144 = vadd.f32 %v1068, %v1143
        %v1145 = vpop.f32.mrf.mxu0
        %1146 = vmatprep.mubr.f32.mxu0 0.0
        %1147 = vmatmul.mubr.f32.gmra.mxu0 %v1075
        %v1148 = vpop.f32.mrf.mxu0
        %v1149 = vadd.f32 %v1068, %v1148
        %v1150 = vpop.f32.mrf.mxu0
        %1151 = vdwg.mxu0
        %v1152 = vld [vmem:[%s889] sm:$0xff]
        %v1153 = vld [vmem:[%s889 + $0x8] sm:$0xff]
        %v1154 = vld [vmem:[%s889 + $0x10] sm:$0xff]
        %v1155 = vld [vmem:[%s889 + $0x18] sm:$0xff]
        %v1156 = vld [vmem:[%s892] sm:$0x1]
        %v1158 = vlaneseq
        %v1159 = vshrl.u32 %v1158, 7
        %v1160 = vsub.s32 0, %v1159
        %v1161 = vrot.slane %v1156, %v1160
        %1163 = vmatprep.subr.mxu0 0.0
        %1164 = vmatpush1.msra.mxu0 0.0
        %1165 = vmatprep.subr.mxu0 0.0
        %1166 = vmatpush1.msra.mxu0 0.0
        %1167 = vmatprep.subr.mxu0 0.0
        %1168 = vmatpush1.msra.mxu0 0.0
        %1169 = vmatprep.subr.mxu0 0.0
        %1170 = vmatpush1.msra.mxu0 0.0
        %1171 = vmatprep.subr.mxu0 0.0
        %1172 = vmatpush1.msra.mxu0 0.0
        %1173 = vmatprep.subr.mxu0 0.0
        %1174 = vmatpush1.msra.mxu0 0.0
        %1175 = vmatprep.subr.mxu0 0.0
        %1176 = vmatpush1.msra.mxu0 0.0
        %1177 = vmatprep.subr.mxu0 0.0
        %1178 = vmatpush1.msra.mxu0 0.0
        %1179 = vmatprep.subr.mxu0 0.0
        %1180 = vmatpush1.msra.mxu0 0.0
        %1181 = vmatprep.subr.mxu0 0.0
        %1182 = vmatpush1.msra.mxu0 0.0
        %1183 = vmatprep.subr.mxu0 0.0
        %1184 = vmatpush1.msra.mxu0 0.0
        %1185 = vmatprep.subr.mxu0 0.0
        %1186 = vmatpush1.msra.mxu0 0.0
        %1187 = vmatprep.subr.mxu0 0.0
        %1188 = vmatpush1.msra.mxu0 %v1155
        %1189 = vmatprep.subr.mxu0 0.0
        %1190 = vmatpush1.msra.mxu0 %v1154
        %1191 = vmatprep.subr.mxu0 0.0
        %1192 = vmatpush1.msra.mxu0 %v1153
        %1193 = vmatprep.subr.mxu0 0.0
        %1194 = vmatpush1.msra.mxu0 %v1152
        %1195 = vmatprep.subr.mxu0 0.0
        %1196 = vmatpush2.msra.mxu0 0.0
        %1197 = vmatprep.subr.mxu0 0.0
        %1198 = vmatpush2.msra.mxu0 0.0
        %1199 = vmatprep.subr.mxu0 0.0
        %1200 = vmatpush2.msra.mxu0 0.0
        %1201 = vmatprep.subr.mxu0 0.0
        %1202 = vmatpush2.msra.mxu0 0.0
        %1203 = vmatprep.subr.mxu0 0.0
        %1204 = vmatpush2.msra.mxu0 0.0
        %1205 = vmatprep.subr.mxu0 0.0
        %1206 = vmatpush2.msra.mxu0 0.0
        %1207 = vmatprep.subr.mxu0 0.0
        %1208 = vmatpush2.msra.mxu0 0.0
        %1209 = vmatprep.subr.mxu0 0.0
        %1210 = vmatpush2.msra.mxu0 0.0
        %1211 = vmatprep.subr.mxu0 0.0
        %1212 = vmatpush2.msra.mxu0 0.0
        %1213 = vmatprep.subr.mxu0 0.0
        %1214 = vmatpush2.msra.mxu0 0.0
        %1215 = vmatprep.subr.mxu0 0.0
        %1216 = vmatpush2.msra.mxu0 0.0
        %1217 = vmatprep.subr.mxu0 0.0
        %1218 = vmatpush2.msra.mxu0 0.0
        %1219 = vmatprep.subr.mxu0 0.0
        %1220 = vmatpush2.msra.mxu0 0.0
        %1221 = vmatprep.subr.mxu0 0.0
        %1222 = vmatpush2.msra.mxu0 0.0
        %1223 = vmatprep.subr.mxu0 0.0
        %1224 = vmatpush2.msra.mxu0 0.0
        %1225 = vmatprep.subr.mxu0 0.0
        %1226 = vmatpush2.msra.mxu0 0.0
        %1227 = vmatprep.mubr.f32.mxu0 0.0
        %1228 = vmatmul.mubr.f32.gmra.mxu0 %v1072
        %v1229 = vpop.f32.mrf.mxu0
        %v1230 = vadd.f32 %v1161, %v1229
        %v1231 = vpop.f32.mrf.mxu0
        %1232 = vmatprep.mubr.f32.mxu0 0.0
        %1233 = vmatmul.mubr.f32.gmra.mxu0 %v1075
        %v1234 = vpop.f32.mrf.mxu0
        %v1235 = vadd.f32 %v1161, %v1234
        %v1236 = vpop.f32.mrf.mxu0
        %1237 = vdwg.mxu0
        %v1238 = vld [vmem:[%s897] sm:$0xff]
        %v1239 = vld [vmem:[%s897 + $0x8] sm:$0xff]
        %v1240 = vld [vmem:[%s897 + $0x10] sm:$0xff]
        %v1241 = vld [vmem:[%s897 + $0x18] sm:$0xff]
        %v1242 = vld [vmem:[%s900] sm:$0x1]
        %v1244 = vlaneseq
        %v1245 = vshrl.u32 %v1244, 7
        %v1246 = vsub.s32 0, %v1245
        %v1247 = vrot.slane %v1242, %v1246
        %1249 = vmatprep.subr.mxu0 0.0
        %1250 = vmatpush1.msra.mxu0 0.0
        %1251 = vmatprep.subr.mxu0 0.0
        %1252 = vmatpush1.msra.mxu0 0.0
        %1253 = vmatprep.subr.mxu0 0.0
        %1254 = vmatpush1.msra.mxu0 0.0
        %1255 = vmatprep.subr.mxu0 0.0
        %1256 = vmatpush1.msra.mxu0 0.0
        %1257 = vmatprep.subr.mxu0 0.0
        %1258 = vmatpush1.msra.mxu0 0.0
        %1259 = vmatprep.subr.mxu0 0.0
        %1260 = vmatpush1.msra.mxu0 0.0
        %1261 = vmatprep.subr.mxu0 0.0
        %1262 = vmatpush1.msra.mxu0 0.0
        %1263 = vmatprep.subr.mxu0 0.0
        %1264 = vmatpush1.msra.mxu0 0.0
        %1265 = vmatprep.subr.mxu0 0.0
        %1266 = vmatpush1.msra.mxu0 0.0
        %1267 = vmatprep.subr.mxu0 0.0
        %1268 = vmatpush1.msra.mxu0 0.0
        %1269 = vmatprep.subr.mxu0 0.0
        %1270 = vmatpush1.msra.mxu0 0.0
        %1271 = vmatprep.subr.mxu0 0.0
        %1272 = vmatpush1.msra.mxu0 0.0
        %1273 = vmatprep.subr.mxu0 0.0
        %1274 = vmatpush1.msra.mxu0 %v1241
        %1275 = vmatprep.subr.mxu0 0.0
        %1276 = vmatpush1.msra.mxu0 %v1240
        %1277 = vmatprep.subr.mxu0 0.0
        %1278 = vmatpush1.msra.mxu0 %v1239
        %1279 = vmatprep.subr.mxu0 0.0
        %1280 = vmatpush1.msra.mxu0 %v1238
        %1281 = vmatprep.subr.mxu0 0.0
        %1282 = vmatpush2.msra.mxu0 0.0
        %1283 = vmatprep.subr.mxu0 0.0
        %1284 = vmatpush2.msra.mxu0 0.0
        %1285 = vmatprep.subr.mxu0 0.0
        %1286 = vmatpush2.msra.mxu0 0.0
        %1287 = vmatprep.subr.mxu0 0.0
        %1288 = vmatpush2.msra.mxu0 0.0
        %1289 = vmatprep.subr.mxu0 0.0
        %1290 = vmatpush2.msra.mxu0 0.0
        %1291 = vmatprep.subr.mxu0 0.0
        %1292 = vmatpush2.msra.mxu0 0.0
        %1293 = vmatprep.subr.mxu0 0.0
        %1294 = vmatpush2.msra.mxu0 0.0
        %1295 = vmatprep.subr.mxu0 0.0
        %1296 = vmatpush2.msra.mxu0 0.0
        %1297 = vmatprep.subr.mxu0 0.0
        %1298 = vmatpush2.msra.mxu0 0.0
        %1299 = vmatprep.subr.mxu0 0.0
        %1300 = vmatpush2.msra.mxu0 0.0
        %1301 = vmatprep.subr.mxu0 0.0
        %1302 = vmatpush2.msra.mxu0 0.0
        %1303 = vmatprep.subr.mxu0 0.0
        %1304 = vmatpush2.msra.mxu0 0.0
        %1305 = vmatprep.subr.mxu0 0.0
        %1306 = vmatpush2.msra.mxu0 0.0
        %1307 = vmatprep.subr.mxu0 0.0
        %1308 = vmatpush2.msra.mxu0 0.0
        %1309 = vmatprep.subr.mxu0 0.0
        %1310 = vmatpush2.msra.mxu0 0.0
        %1311 = vmatprep.subr.mxu0 0.0
        %1312 = vmatpush2.msra.mxu0 0.0
        %1313 = vmatprep.mubr.f32.mxu0 0.0
        %1314 = vmatmul.mubr.f32.gmra.mxu0 %v1072
        %v1315 = vpop.f32.mrf.mxu0
        %v1316 = vadd.f32 %v1247, %v1315
        %v1317 = vpop.f32.mrf.mxu0
        %1318 = vmatprep.mubr.f32.mxu0 0.0
        %1319 = vmatmul.mubr.f32.gmra.mxu0 %v1075
        %v1320 = vpop.f32.mrf.mxu0
        %v1321 = vadd.f32 %v1247, %v1320
        %v1322 = vpop.f32.mrf.mxu0
        %1323 = vdwg.mxu0
        %1326 = vrot.lane.b32.xlu0 %v1144, 112
        %v1327 = vpop.permute.xlu0 %1326
        %1328 = vrot.lane.b32.xlu0 %v1149, 112
        %v1329 = vpop.permute.xlu0 %1328
        %v1332 = vcombine.high %v1144, 0.0
        %v1334 = vunpack.c.l.s4 1983009808
        %v1335 = vunpack.c.0.s8 %v1334
        %v1336 = vlaneseq
        %v1337 = vshrl.u32 %v1336, 7
        %v1338 = vsub.s32 %v1335, %v1337
        %v1339 = vrot.slane %v1144, %v1338
        %v1341 = vunpack.c.l.s4 1983009808
        %v1342 = vunpack.c.0.s8 %v1341
        %v1343 = vlaneseq
        %v1344 = vshrl.u32 %v1343, 7
        %v1345 = vsub.s32 %v1342, %v1344
        %v1346 = vrot.slane %v1332, %v1345
        %v1347 = vcombine.high %v1327, 0.0
        %v1349 = vunpack.c.l.s4 1983009808
        %v1350 = vunpack.c.0.s8 %v1349
        %v1351 = vlaneseq
        %v1352 = vshrl.u32 %v1351, 7
        %v1353 = vsub.s32 %v1350, %v1352
        %v1354 = vrot.slane %v1327, %v1353
        %v1356 = vunpack.c.l.s4 1983009808
        %v1357 = vunpack.c.0.s8 %v1356
        %v1358 = vlaneseq
        %v1359 = vshrl.u32 %v1358, 7
        %v1360 = vsub.s32 %v1357, %v1359
        %v1361 = vrot.slane %v1347, %v1360
        %v1362 = vcombine.low %v1339, %v1354
        %v1363 = vcombine.high %v1339, %v1354
        %v1365 = vunpack.c.l.s4 1934713408
        %v1366 = vunpack.c.0.s8 %v1365
        %v1367 = vlaneseq
        %v1368 = vshrl.u32 %v1367, 7
        %v1369 = vsub.s32 %v1366, %v1368
        %v1370 = vrot.slane %v1362, %v1369
        %v1372 = vunpack.c.l.s4 1934713408
        %v1373 = vunpack.c.0.s8 %v1372
        %v1374 = vlaneseq
        %v1375 = vshrl.u32 %v1374, 7
        %v1376 = vsub.s32 %v1373, %v1375
        %v1377 = vrot.slane %v1363, %v1376
        %v1378 = vcombine.low %v1346, %v1361
        %v1379 = vcombine.high %v1346, %v1361
        %v1381 = vunpack.c.l.s4 1934713408
        %v1382 = vunpack.c.0.s8 %v1381
        %v1383 = vlaneseq
        %v1384 = vshrl.u32 %v1383, 7
        %v1385 = vsub.s32 %v1382, %v1384
        %v1386 = vrot.slane %v1378, %v1385
        %v1388 = vunpack.c.l.s4 1934713408
        %v1389 = vunpack.c.0.s8 %v1388
        %v1390 = vlaneseq
        %v1391 = vshrl.u32 %v1390, 7
        %v1392 = vsub.s32 %v1389, %v1391
        %v1393 = vrot.slane %v1379, %v1392
        %v1394 = vcombine.high %v1149, 0.0
        %v1396 = vunpack.c.l.s4 1983009808
        %v1397 = vunpack.c.0.s8 %v1396
        %v1398 = vlaneseq
        %v1399 = vshrl.u32 %v1398, 7
        %v1400 = vsub.s32 %v1397, %v1399
        %v1401 = vrot.slane %v1149, %v1400
        %v1403 = vunpack.c.l.s4 1983009808
        %v1404 = vunpack.c.0.s8 %v1403
        %v1405 = vlaneseq
        %v1406 = vshrl.u32 %v1405, 7
        %v1407 = vsub.s32 %v1404, %v1406
        %v1408 = vrot.slane %v1394, %v1407
        %v1409 = vcombine.high %v1329, 0.0
        %v1411 = vunpack.c.l.s4 1983009808
        %v1412 = vunpack.c.0.s8 %v1411
        %v1413 = vlaneseq
        %v1414 = vshrl.u32 %v1413, 7
        %v1415 = vsub.s32 %v1412, %v1414
        %v1416 = vrot.slane %v1329, %v1415
        %v1418 = vunpack.c.l.s4 1983009808
        %v1419 = vunpack.c.0.s8 %v1418
        %v1420 = vlaneseq
        %v1421 = vshrl.u32 %v1420, 7
        %v1422 = vsub.s32 %v1419, %v1421
        %v1423 = vrot.slane %v1409, %v1422
        %v1424 = vcombine.low %v1401, %v1416
        %v1425 = vcombine.high %v1401, %v1416
        %v1427 = vunpack.c.l.s4 1934713408
        %v1428 = vunpack.c.0.s8 %v1427
        %v1429 = vlaneseq
        %v1430 = vshrl.u32 %v1429, 7
        %v1431 = vsub.s32 %v1428, %v1430
        %v1432 = vrot.slane %v1424, %v1431
        %v1434 = vunpack.c.l.s4 1934713408
        %v1435 = vunpack.c.0.s8 %v1434
        %v1436 = vlaneseq
        %v1437 = vshrl.u32 %v1436, 7
        %v1438 = vsub.s32 %v1435, %v1437
        %v1439 = vrot.slane %v1425, %v1438
        %v1440 = vcombine.low %v1408, %v1423
        %v1441 = vcombine.high %v1408, %v1423
        %v1443 = vunpack.c.l.s4 1934713408
        %v1444 = vunpack.c.0.s8 %v1443
        %v1445 = vlaneseq
        %v1446 = vshrl.u32 %v1445, 7
        %v1447 = vsub.s32 %v1444, %v1446
        %v1448 = vrot.slane %v1440, %v1447
        %v1450 = vunpack.c.l.s4 1934713408
        %v1451 = vunpack.c.0.s8 %v1450
        %v1452 = vlaneseq
        %v1453 = vshrl.u32 %v1452, 7
        %v1454 = vsub.s32 %v1451, %v1453
        %v1455 = vrot.slane %v1441, %v1454
        %v1456 = vcombine.low %v1370, %v1432
        %v1458 = vunpack.c.l.s4 1934713408
        %v1459 = vunpack.c.0.s8 %v1458
        %v1460 = vlaneseq
        %v1461 = vshrl.u32 %v1460, 7
        %v1462 = vsub.s32 %v1459, %v1461
        %v1463 = vrot.slane %v1456, %v1462
        %v1464 = vcombine.high %v1463, 0.0
        %v1465 = vcombine.high %v1370, 0.0
        %v1466 = vcombine.high %v1432, 0.0
        %v1467 = vcombine.low %v1465, %v1466
        %v1469 = vunpack.c.l.s4 1934713408
        %v1470 = vunpack.c.0.s8 %v1469
        %v1471 = vlaneseq
        %v1472 = vshrl.u32 %v1471, 7
        %v1473 = vsub.s32 %v1470, %v1472
        %v1474 = vrot.slane %v1467, %v1473
        %v1475 = vcombine.high %v1474, 0.0
        %v1476 = vcombine.low %v1377, %v1439
        %v1478 = vunpack.c.l.s4 1934713408
        %v1479 = vunpack.c.0.s8 %v1478
        %v1480 = vlaneseq
        %v1481 = vshrl.u32 %v1480, 7
        %v1482 = vsub.s32 %v1479, %v1481
        %v1483 = vrot.slane %v1476, %v1482
        %v1484 = vcombine.high %v1483, 0.0
        %v1485 = vcombine.high %v1377, 0.0
        %v1486 = vcombine.high %v1439, 0.0
        %v1487 = vcombine.low %v1485, %v1486
        %v1489 = vunpack.c.l.s4 1934713408
        %v1490 = vunpack.c.0.s8 %v1489
        %v1491 = vlaneseq
        %v1492 = vshrl.u32 %v1491, 7
        %v1493 = vsub.s32 %v1490, %v1492
        %v1494 = vrot.slane %v1487, %v1493
        %v1495 = vcombine.high %v1494, 0.0
        %v1496 = vcombine.low %v1386, %v1448
        %v1498 = vunpack.c.l.s4 1934713408
        %v1499 = vunpack.c.0.s8 %v1498
        %v1500 = vlaneseq
        %v1501 = vshrl.u32 %v1500, 7
        %v1502 = vsub.s32 %v1499, %v1501
        %v1503 = vrot.slane %v1496, %v1502
        %v1504 = vcombine.high %v1503, 0.0
        %v1505 = vcombine.high %v1386, 0.0
        %v1506 = vcombine.high %v1448, 0.0
        %v1507 = vcombine.low %v1505, %v1506
        %v1509 = vunpack.c.l.s4 1934713408
        %v1510 = vunpack.c.0.s8 %v1509
        %v1511 = vlaneseq
        %v1512 = vshrl.u32 %v1511, 7
        %v1513 = vsub.s32 %v1510, %v1512
        %v1514 = vrot.slane %v1507, %v1513
        %v1515 = vcombine.high %v1514, 0.0
        %v1516 = vcombine.low %v1393, %v1455
        %v1518 = vunpack.c.l.s4 1934713408
        %v1519 = vunpack.c.0.s8 %v1518
        %v1520 = vlaneseq
        %v1521 = vshrl.u32 %v1520, 7
        %v1522 = vsub.s32 %v1519, %v1521
        %v1523 = vrot.slane %v1516, %v1522
        %v1524 = vcombine.high %v1523, 0.0
        %v1525 = vcombine.high %v1393, 0.0
        %v1526 = vcombine.high %v1455, 0.0
        %v1527 = vcombine.low %v1525, %v1526
        %v1529 = vunpack.c.l.s4 1934713408
        %v1530 = vunpack.c.0.s8 %v1529
        %v1531 = vlaneseq
        %v1532 = vshrl.u32 %v1531, 7
        %v1533 = vsub.s32 %v1530, %v1532
        %v1534 = vrot.slane %v1527, %v1533
        %v1535 = vcombine.high %v1534, 0.0
        %v1536 = vmul.f32 %v1463, 0.25
        %v1537 = vmul.f32 %v1464, 0.25
        %v1538 = vmul.f32 %v1474, 0.25
        %v1539 = vmul.f32 %v1475, 0.25
        %v1540 = vmul.f32 %v1483, 0.25
        %v1541 = vmul.f32 %v1484, 0.25
        %v1542 = vmul.f32 %v1494, 0.25
        %v1543 = vmul.f32 %v1495, 0.25
        %v1544 = vmul.f32 %v1503, 0.25
        %v1545 = vmul.f32 %v1504, 0.25
        %v1546 = vmul.f32 %v1514, 0.25
        %v1547 = vmul.f32 %v1515, 0.25
        %v1548 = vmul.f32 %v1523, 0.25
        %v1549 = vmul.f32 %v1524, 0.25
        %v1550 = vmul.f32 %v1534, 0.25
        %v1551 = vmul.f32 %v1535, 0.25
        %1554 = vrot.lane.b32.xlu0 %v1230, 112
        %v1555 = vpop.permute.xlu0 %1554
        %1556 = vrot.lane.b32.xlu0 %v1235, 112
        %v1557 = vpop.permute.xlu0 %1556
        %v1560 = vcombine.high %v1230, 0.0
        %v1562 = vunpack.c.l.s4 1983009808
        %v1563 = vunpack.c.0.s8 %v1562
        %v1564 = vlaneseq
        %v1565 = vshrl.u32 %v1564, 7
        %v1566 = vsub.s32 %v1563, %v1565
        %v1567 = vrot.slane %v1230, %v1566
        %v1569 = vunpack.c.l.s4 1983009808
        %v1570 = vunpack.c.0.s8 %v1569
        %v1571 = vlaneseq
        %v1572 = vshrl.u32 %v1571, 7
        %v1573 = vsub.s32 %v1570, %v1572
        %v1574 = vrot.slane %v1560, %v1573
        %v1575 = vcombine.high %v1555, 0.0
        %v1577 = vunpack.c.l.s4 1983009808
        %v1578 = vunpack.c.0.s8 %v1577
        %v1579 = vlaneseq
        %v1580 = vshrl.u32 %v1579, 7
        %v1581 = vsub.s32 %v1578, %v1580
        %v1582 = vrot.slane %v1555, %v1581
        %v1584 = vunpack.c.l.s4 1983009808
        %v1585 = vunpack.c.0.s8 %v1584
        %v1586 = vlaneseq
        %v1587 = vshrl.u32 %v1586, 7
        %v1588 = vsub.s32 %v1585, %v1587
        %v1589 = vrot.slane %v1575, %v1588
        %v1590 = vcombine.low %v1567, %v1582
        %v1591 = vcombine.high %v1567, %v1582
        %v1593 = vunpack.c.l.s4 1934713408
        %v1594 = vunpack.c.0.s8 %v1593
        %v1595 = vlaneseq
        %v1596 = vshrl.u32 %v1595, 7
        %v1597 = vsub.s32 %v1594, %v1596
        %v1598 = vrot.slane %v1590, %v1597
        %v1600 = vunpack.c.l.s4 1934713408
        %v1601 = vunpack.c.0.s8 %v1600
        %v1602 = vlaneseq
        %v1603 = vshrl.u32 %v1602, 7
        %v1604 = vsub.s32 %v1601, %v1603
        %v1605 = vrot.slane %v1591, %v1604
        %v1606 = vcombine.low %v1574, %v1589
        %v1607 = vcombine.high %v1574, %v1589
        %v1609 = vunpack.c.l.s4 1934713408
        %v1610 = vunpack.c.0.s8 %v1609
        %v1611 = vlaneseq
        %v1612 = vshrl.u32 %v1611, 7
        %v1613 = vsub.s32 %v1610, %v1612
        %v1614 = vrot.slane %v1606, %v1613
        %v1616 = vunpack.c.l.s4 1934713408
        %v1617 = vunpack.c.0.s8 %v1616
        %v1618 = vlaneseq
        %v1619 = vshrl.u32 %v1618, 7
        %v1620 = vsub.s32 %v1617, %v1619
        %v1621 = vrot.slane %v1607, %v1620
        %v1622 = vcombine.high %v1235, 0.0
        %v1624 = vunpack.c.l.s4 1983009808
        %v1625 = vunpack.c.0.s8 %v1624
        %v1626 = vlaneseq
        %v1627 = vshrl.u32 %v1626, 7
        %v1628 = vsub.s32 %v1625, %v1627
        %v1629 = vrot.slane %v1235, %v1628
        %v1631 = vunpack.c.l.s4 1983009808
        %v1632 = vunpack.c.0.s8 %v1631
        %v1633 = vlaneseq
        %v1634 = vshrl.u32 %v1633, 7
        %v1635 = vsub.s32 %v1632, %v1634
        %v1636 = vrot.slane %v1622, %v1635
        %v1637 = vcombine.high %v1557, 0.0
        %v1639 = vunpack.c.l.s4 1983009808
        %v1640 = vunpack.c.0.s8 %v1639
        %v1641 = vlaneseq
        %v1642 = vshrl.u32 %v1641, 7
        %v1643 = vsub.s32 %v1640, %v1642
        %v1644 = vrot.slane %v1557, %v1643
        %v1646 = vunpack.c.l.s4 1983009808
        %v1647 = vunpack.c.0.s8 %v1646
        %v1648 = vlaneseq
        %v1649 = vshrl.u32 %v1648, 7
        %v1650 = vsub.s32 %v1647, %v1649
        %v1651 = vrot.slane %v1637, %v1650
        %v1652 = vcombine.low %v1629, %v1644
        %v1653 = vcombine.high %v1629, %v1644
        %v1655 = vunpack.c.l.s4 1934713408
        %v1656 = vunpack.c.0.s8 %v1655
        %v1657 = vlaneseq
        %v1658 = vshrl.u32 %v1657, 7
        %v1659 = vsub.s32 %v1656, %v1658
        %v1660 = vrot.slane %v1652, %v1659
        %v1662 = vunpack.c.l.s4 1934713408
        %v1663 = vunpack.c.0.s8 %v1662
        %v1664 = vlaneseq
        %v1665 = vshrl.u32 %v1664, 7
        %v1666 = vsub.s32 %v1663, %v1665
        %v1667 = vrot.slane %v1653, %v1666
        %v1668 = vcombine.low %v1636, %v1651
        %v1669 = vcombine.high %v1636, %v1651
        %v1671 = vunpack.c.l.s4 1934713408
        %v1672 = vunpack.c.0.s8 %v1671
        %v1673 = vlaneseq
        %v1674 = vshrl.u32 %v1673, 7
        %v1675 = vsub.s32 %v1672, %v1674
        %v1676 = vrot.slane %v1668, %v1675
        %v1678 = vunpack.c.l.s4 1934713408
        %v1679 = vunpack.c.0.s8 %v1678
        %v1680 = vlaneseq
        %v1681 = vshrl.u32 %v1680, 7
        %v1682 = vsub.s32 %v1679, %v1681
        %v1683 = vrot.slane %v1669, %v1682
        %v1684 = vcombine.low %v1598, %v1660
        %v1686 = vunpack.c.l.s4 1934713408
        %v1687 = vunpack.c.0.s8 %v1686
        %v1688 = vlaneseq
        %v1689 = vshrl.u32 %v1688, 7
        %v1690 = vsub.s32 %v1687, %v1689
        %v1691 = vrot.slane %v1684, %v1690
        %v1692 = vcombine.high %v1691, 0.0
        %v1693 = vcombine.high %v1598, 0.0
        %v1694 = vcombine.high %v1660, 0.0
        %v1695 = vcombine.low %v1693, %v1694
        %v1697 = vunpack.c.l.s4 1934713408
        %v1698 = vunpack.c.0.s8 %v1697
        %v1699 = vlaneseq
        %v1700 = vshrl.u32 %v1699, 7
        %v1701 = vsub.s32 %v1698, %v1700
        %v1702 = vrot.slane %v1695, %v1701
        %v1703 = vcombine.high %v1702, 0.0
        %v1704 = vcombine.low %v1605, %v1667
        %v1706 = vunpack.c.l.s4 1934713408
        %v1707 = vunpack.c.0.s8 %v1706
        %v1708 = vlaneseq
        %v1709 = vshrl.u32 %v1708, 7
        %v1710 = vsub.s32 %v1707, %v1709
        %v1711 = vrot.slane %v1704, %v1710
        %v1712 = vcombine.high %v1711, 0.0
        %v1713 = vcombine.high %v1605, 0.0
        %v1714 = vcombine.high %v1667, 0.0
        %v1715 = vcombine.low %v1713, %v1714
        %v1717 = vunpack.c.l.s4 1934713408
        %v1718 = vunpack.c.0.s8 %v1717
        %v1719 = vlaneseq
        %v1720 = vshrl.u32 %v1719, 7
        %v1721 = vsub.s32 %v1718, %v1720
        %v1722 = vrot.slane %v1715, %v1721
        %v1723 = vcombine.high %v1722, 0.0
        %v1724 = vcombine.low %v1614, %v1676
        %v1726 = vunpack.c.l.s4 1934713408
        %v1727 = vunpack.c.0.s8 %v1726
        %v1728 = vlaneseq
        %v1729 = vshrl.u32 %v1728, 7
        %v1730 = vsub.s32 %v1727, %v1729
        %v1731 = vrot.slane %v1724, %v1730
        %v1732 = vcombine.high %v1731, 0.0
        %v1733 = vcombine.high %v1614, 0.0
        %v1734 = vcombine.high %v1676, 0.0
        %v1735 = vcombine.low %v1733, %v1734
        %v1737 = vunpack.c.l.s4 1934713408
        %v1738 = vunpack.c.0.s8 %v1737
        %v1739 = vlaneseq
        %v1740 = vshrl.u32 %v1739, 7
        %v1741 = vsub.s32 %v1738, %v1740
        %v1742 = vrot.slane %v1735, %v1741
        %v1743 = vcombine.high %v1742, 0.0
        %v1744 = vcombine.low %v1621, %v1683
        %v1746 = vunpack.c.l.s4 1934713408
        %v1747 = vunpack.c.0.s8 %v1746
        %v1748 = vlaneseq
        %v1749 = vshrl.u32 %v1748, 7
        %v1750 = vsub.s32 %v1747, %v1749
        %v1751 = vrot.slane %v1744, %v1750
        %v1752 = vcombine.high %v1751, 0.0
        %v1753 = vcombine.high %v1621, 0.0
        %v1754 = vcombine.high %v1683, 0.0
        %v1755 = vcombine.low %v1753, %v1754
        %v1757 = vunpack.c.l.s4 1934713408
        %v1758 = vunpack.c.0.s8 %v1757
        %v1759 = vlaneseq
        %v1760 = vshrl.u32 %v1759, 7
        %v1761 = vsub.s32 %v1758, %v1760
        %v1762 = vrot.slane %v1755, %v1761
        %v1763 = vcombine.high %v1762, 0.0
        %1766 = vrot.lane.b32.xlu0 %v1316, 112
        %v1767 = vpop.permute.xlu0 %1766
        %1768 = vrot.lane.b32.xlu0 %v1321, 112
        %v1769 = vpop.permute.xlu0 %1768
        %v1772 = vcombine.high %v1316, 0.0
        %v1774 = vunpack.c.l.s4 1983009808
        %v1775 = vunpack.c.0.s8 %v1774
        %v1776 = vlaneseq
        %v1777 = vshrl.u32 %v1776, 7
        %v1778 = vsub.s32 %v1775, %v1777
        %v1779 = vrot.slane %v1316, %v1778
        %v1781 = vunpack.c.l.s4 1983009808
        %v1782 = vunpack.c.0.s8 %v1781
        %v1783 = vlaneseq
        %v1784 = vshrl.u32 %v1783, 7
        %v1785 = vsub.s32 %v1782, %v1784
        %v1786 = vrot.slane %v1772, %v1785
        %v1787 = vcombine.high %v1767, 0.0
        %v1789 = vunpack.c.l.s4 1983009808
        %v1790 = vunpack.c.0.s8 %v1789
        %v1791 = vlaneseq
        %v1792 = vshrl.u32 %v1791, 7
        %v1793 = vsub.s32 %v1790, %v1792
        %v1794 = vrot.slane %v1767, %v1793
        %v1796 = vunpack.c.l.s4 1983009808
        %v1797 = vunpack.c.0.s8 %v1796
        %v1798 = vlaneseq
        %v1799 = vshrl.u32 %v1798, 7
        %v1800 = vsub.s32 %v1797, %v1799
        %v1801 = vrot.slane %v1787, %v1800
        %v1802 = vcombine.low %v1779, %v1794
        %v1803 = vcombine.high %v1779, %v1794
        %v1805 = vunpack.c.l.s4 1934713408
        %v1806 = vunpack.c.0.s8 %v1805
        %v1807 = vlaneseq
        %v1808 = vshrl.u32 %v1807, 7
        %v1809 = vsub.s32 %v1806, %v1808
        %v1810 = vrot.slane %v1802, %v1809
        %v1812 = vunpack.c.l.s4 1934713408
        %v1813 = vunpack.c.0.s8 %v1812
        %v1814 = vlaneseq
        %v1815 = vshrl.u32 %v1814, 7
        %v1816 = vsub.s32 %v1813, %v1815
        %v1817 = vrot.slane %v1803, %v1816
        %v1818 = vcombine.low %v1786, %v1801
        %v1819 = vcombine.high %v1786, %v1801
        %v1821 = vunpack.c.l.s4 1934713408
        %v1822 = vunpack.c.0.s8 %v1821
        %v1823 = vlaneseq
        %v1824 = vshrl.u32 %v1823, 7
        %v1825 = vsub.s32 %v1822, %v1824
        %v1826 = vrot.slane %v1818, %v1825
        %v1828 = vunpack.c.l.s4 1934713408
        %v1829 = vunpack.c.0.s8 %v1828
        %v1830 = vlaneseq
        %v1831 = vshrl.u32 %v1830, 7
        %v1832 = vsub.s32 %v1829, %v1831
        %v1833 = vrot.slane %v1819, %v1832
        %v1834 = vcombine.high %v1321, 0.0
        %v1836 = vunpack.c.l.s4 1983009808
        %v1837 = vunpack.c.0.s8 %v1836
        %v1838 = vlaneseq
        %v1839 = vshrl.u32 %v1838, 7
        %v1840 = vsub.s32 %v1837, %v1839
        %v1841 = vrot.slane %v1321, %v1840
        %v1843 = vunpack.c.l.s4 1983009808
        %v1844 = vunpack.c.0.s8 %v1843
        %v1845 = vlaneseq
        %v1846 = vshrl.u32 %v1845, 7
        %v1847 = vsub.s32 %v1844, %v1846
        %v1848 = vrot.slane %v1834, %v1847
        %v1849 = vcombine.high %v1769, 0.0
        %v1851 = vunpack.c.l.s4 1983009808
        %v1852 = vunpack.c.0.s8 %v1851
        %v1853 = vlaneseq
        %v1854 = vshrl.u32 %v1853, 7
        %v1855 = vsub.s32 %v1852, %v1854
        %v1856 = vrot.slane %v1769, %v1855
        %v1858 = vunpack.c.l.s4 1983009808
        %v1859 = vunpack.c.0.s8 %v1858
        %v1860 = vlaneseq
        %v1861 = vshrl.u32 %v1860, 7
        %v1862 = vsub.s32 %v1859, %v1861
        %v1863 = vrot.slane %v1849, %v1862
        %v1864 = vcombine.low %v1841, %v1856
        %v1865 = vcombine.high %v1841, %v1856
        %v1867 = vunpack.c.l.s4 1934713408
        %v1868 = vunpack.c.0.s8 %v1867
        %v1869 = vlaneseq
        %v1870 = vshrl.u32 %v1869, 7
        %v1871 = vsub.s32 %v1868, %v1870
        %v1872 = vrot.slane %v1864, %v1871
        %v1874 = vunpack.c.l.s4 1934713408
        %v1875 = vunpack.c.0.s8 %v1874
        %v1876 = vlaneseq
        %v1877 = vshrl.u32 %v1876, 7
        %v1878 = vsub.s32 %v1875, %v1877
        %v1879 = vrot.slane %v1865, %v1878
        %v1880 = vcombine.low %v1848, %v1863
        %v1881 = vcombine.high %v1848, %v1863
        %v1883 = vunpack.c.l.s4 1934713408
        %v1884 = vunpack.c.0.s8 %v1883
        %v1885 = vlaneseq
        %v1886 = vshrl.u32 %v1885, 7
        %v1887 = vsub.s32 %v1884, %v1886
        %v1888 = vrot.slane %v1880, %v1887
        %v1890 = vunpack.c.l.s4 1934713408
        %v1891 = vunpack.c.0.s8 %v1890
        %v1892 = vlaneseq
        %v1893 = vshrl.u32 %v1892, 7
        %v1894 = vsub.s32 %v1891, %v1893
        %v1895 = vrot.slane %v1881, %v1894
        %v1896 = vcombine.low %v1810, %v1872
        %v1898 = vunpack.c.l.s4 1934713408
        %v1899 = vunpack.c.0.s8 %v1898
        %v1900 = vlaneseq
        %v1901 = vshrl.u32 %v1900, 7
        %v1902 = vsub.s32 %v1899, %v1901
        %v1903 = vrot.slane %v1896, %v1902
        %v1904 = vcombine.high %v1903, 0.0
        %v1905 = vcombine.high %v1810, 0.0
        %v1906 = vcombine.high %v1872, 0.0
        %v1907 = vcombine.low %v1905, %v1906
        %v1909 = vunpack.c.l.s4 1934713408
        %v1910 = vunpack.c.0.s8 %v1909
        %v1911 = vlaneseq
        %v1912 = vshrl.u32 %v1911, 7
        %v1913 = vsub.s32 %v1910, %v1912
        %v1914 = vrot.slane %v1907, %v1913
        %v1915 = vcombine.high %v1914, 0.0
        %v1916 = vcombine.low %v1817, %v1879
        %v1918 = vunpack.c.l.s4 1934713408
        %v1919 = vunpack.c.0.s8 %v1918
        %v1920 = vlaneseq
        %v1921 = vshrl.u32 %v1920, 7
        %v1922 = vsub.s32 %v1919, %v1921
        %v1923 = vrot.slane %v1916, %v1922
        %v1924 = vcombine.high %v1923, 0.0
        %v1925 = vcombine.high %v1817, 0.0
        %v1926 = vcombine.high %v1879, 0.0
        %v1927 = vcombine.low %v1925, %v1926
        %v1929 = vunpack.c.l.s4 1934713408
        %v1930 = vunpack.c.0.s8 %v1929
        %v1931 = vlaneseq
        %v1932 = vshrl.u32 %v1931, 7
        %v1933 = vsub.s32 %v1930, %v1932
        %v1934 = vrot.slane %v1927, %v1933
        %v1935 = vcombine.high %v1934, 0.0
        %v1936 = vcombine.low %v1826, %v1888
        %v1938 = vunpack.c.l.s4 1934713408
        %v1939 = vunpack.c.0.s8 %v1938
        %v1940 = vlaneseq
        %v1941 = vshrl.u32 %v1940, 7
        %v1942 = vsub.s32 %v1939, %v1941
        %v1943 = vrot.slane %v1936, %v1942
        %v1944 = vcombine.high %v1943, 0.0
        %v1945 = vcombine.high %v1826, 0.0
        %v1946 = vcombine.high %v1888, 0.0
        %v1947 = vcombine.low %v1945, %v1946
        %v1949 = vunpack.c.l.s4 1934713408
        %v1950 = vunpack.c.0.s8 %v1949
        %v1951 = vlaneseq
        %v1952 = vshrl.u32 %v1951, 7
        %v1953 = vsub.s32 %v1950, %v1952
        %v1954 = vrot.slane %v1947, %v1953
        %v1955 = vcombine.high %v1954, 0.0
        %v1956 = vcombine.low %v1833, %v1895
        %v1958 = vunpack.c.l.s4 1934713408
        %v1959 = vunpack.c.0.s8 %v1958
        %v1960 = vlaneseq
        %v1961 = vshrl.u32 %v1960, 7
        %v1962 = vsub.s32 %v1959, %v1961
        %v1963 = vrot.slane %v1956, %v1962
        %v1964 = vcombine.high %v1963, 0.0
        %v1965 = vcombine.high %v1833, 0.0
        %v1966 = vcombine.high %v1895, 0.0
        %v1967 = vcombine.low %v1965, %v1966
        %v1969 = vunpack.c.l.s4 1934713408
        %v1970 = vunpack.c.0.s8 %v1969
        %v1971 = vlaneseq
        %v1972 = vshrl.u32 %v1971, 7
        %v1973 = vsub.s32 %v1970, %v1972
        %v1974 = vrot.slane %v1967, %v1973
        %v1975 = vcombine.high %v1974, 0.0
        %vm1976 = vcmask 130048
        %v1978 = vsel %vm1976, %v1536, 0
        %v1981 = vsel %vm1976, %v1691, 0
        %1983 = vmatprep.subr.mxu0 0.0
        %1984 = vmatpush1.xpose.msra.mxu0 0.0
        %1985 = vmatprep.subr.mxu0 0.0
        %1986 = vmatpush1.xpose.msra.mxu0 0.0
        %1987 = vmatprep.subr.mxu0 0.0
        %1988 = vmatpush1.xpose.msra.mxu0 0.0
        %1989 = vmatprep.subr.mxu0 0.0
        %1990 = vmatpush1.xpose.msra.mxu0 0.0
        %1991 = vmatprep.subr.mxu0 0.0
        %1992 = vmatpush1.xpose.msra.mxu0 0.0
        %1993 = vmatprep.subr.mxu0 0.0
        %1994 = vmatpush1.xpose.msra.mxu0 0.0
        %1995 = vmatprep.subr.mxu0 0.0
        %1996 = vmatpush1.xpose.msra.mxu0 0.0
        %1997 = vmatprep.subr.mxu0 0.0
        %1998 = vmatpush1.xpose.msra.mxu0 0.0
        %1999 = vmatprep.subr.mxu0 0.0
        %2000 = vmatpush1.xpose.msra.mxu0 0.0
        %2001 = vmatprep.subr.mxu0 0.0
        %2002 = vmatpush1.xpose.msra.mxu0 0.0
        %2003 = vmatprep.subr.mxu0 0.0
        %2004 = vmatpush1.xpose.msra.mxu0 0.0
        %2005 = vmatprep.subr.mxu0 0.0
        %2006 = vmatpush1.xpose.msra.mxu0 0.0
        %2007 = vmatprep.subr.mxu0 0.0
        %2008 = vmatpush1.xpose.msra.mxu0 0.0
        %2009 = vmatprep.subr.mxu0 0.0
        %2010 = vmatpush1.xpose.msra.mxu0 0.0
        %2011 = vmatprep.subr.mxu0 0.0
        %2012 = vmatpush1.xpose.msra.mxu0 0.0
        %2013 = vmatprep.subr.mxu0 0.0
        %2014 = vmatpush1.xpose.msra.mxu0 %v1981
        %2015 = vmatprep.subr.mxu0 0.0
        %2016 = vmatpush2.xpose.msra.mxu0 0.0
        %2017 = vmatprep.subr.mxu0 0.0
        %2018 = vmatpush2.xpose.msra.mxu0 0.0
        %2019 = vmatprep.subr.mxu0 0.0
        %2020 = vmatpush2.xpose.msra.mxu0 0.0
        %2021 = vmatprep.subr.mxu0 0.0
        %2022 = vmatpush2.xpose.msra.mxu0 0.0
        %2023 = vmatprep.subr.mxu0 0.0
        %2024 = vmatpush2.xpose.msra.mxu0 0.0
        %2025 = vmatprep.subr.mxu0 0.0
        %2026 = vmatpush2.xpose.msra.mxu0 0.0
        %2027 = vmatprep.subr.mxu0 0.0
        %2028 = vmatpush2.xpose.msra.mxu0 0.0
        %2029 = vmatprep.subr.mxu0 0.0
        %2030 = vmatpush2.xpose.msra.mxu0 0.0
        %2031 = vmatprep.subr.mxu0 0.0
        %2032 = vmatpush2.xpose.msra.mxu0 0.0
        %2033 = vmatprep.subr.mxu0 0.0
        %2034 = vmatpush2.xpose.msra.mxu0 0.0
        %2035 = vmatprep.subr.mxu0 0.0
        %2036 = vmatpush2.xpose.msra.mxu0 0.0
        %2037 = vmatprep.subr.mxu0 0.0
        %2038 = vmatpush2.xpose.msra.mxu0 0.0
        %2039 = vmatprep.subr.mxu0 0.0
        %2040 = vmatpush2.xpose.msra.mxu0 0.0
        %2041 = vmatprep.subr.mxu0 0.0
        %2042 = vmatpush2.xpose.msra.mxu0 0.0
        %2043 = vmatprep.subr.mxu0 0.0
        %2044 = vmatpush2.xpose.msra.mxu0 0.0
        %2045 = vmatprep.subr.mxu0 0.0
        %2046 = vmatpush2.xpose.msra.mxu0 0.0
        %2047 = vmatprep.mubr.f32.mxu0 0.0
        %2048 = vmatmul.mubr.f32.gmra.mxu0 %v1978
        %v2049 = vpop.f32.mrf.mxu0
        %v2050 = vadd.f32 0.0, %v2049
        %v2051 = vpop.f32.mrf.mxu0
        %2052 = vdwg.mxu0
        %v2054 = vsel %vm1976, %v1537, 0
        %v2057 = vsel %vm1976, %v1692, 0
        %2059 = vmatprep.subr.mxu0 0.0
        %2060 = vmatpush1.xpose.msra.mxu0 0.0
        %2061 = vmatprep.subr.mxu0 0.0
        %2062 = vmatpush1.xpose.msra.mxu0 0.0
        %2063 = vmatprep.subr.mxu0 0.0
        %2064 = vmatpush1.xpose.msra.mxu0 0.0
        %2065 = vmatprep.subr.mxu0 0.0
        %2066 = vmatpush1.xpose.msra.mxu0 0.0
        %2067 = vmatprep.subr.mxu0 0.0
        %2068 = vmatpush1.xpose.msra.mxu0 0.0
        %2069 = vmatprep.subr.mxu0 0.0
        %2070 = vmatpush1.xpose.msra.mxu0 0.0
        %2071 = vmatprep.subr.mxu0 0.0
        %2072 = vmatpush1.xpose.msra.mxu0 0.0
        %2073 = vmatprep.subr.mxu0 0.0
        %2074 = vmatpush1.xpose.msra.mxu0 0.0
        %2075 = vmatprep.subr.mxu0 0.0
        %2076 = vmatpush1.xpose.msra.mxu0 0.0
        %2077 = vmatprep.subr.mxu0 0.0
        %2078 = vmatpush1.xpose.msra.mxu0 0.0
        %2079 = vmatprep.subr.mxu0 0.0
        %2080 = vmatpush1.xpose.msra.mxu0 0.0
        %2081 = vmatprep.subr.mxu0 0.0
        %2082 = vmatpush1.xpose.msra.mxu0 0.0
        %2083 = vmatprep.subr.mxu0 0.0
        %2084 = vmatpush1.xpose.msra.mxu0 0.0
        %2085 = vmatprep.subr.mxu0 0.0
        %2086 = vmatpush1.xpose.msra.mxu0 0.0
        %2087 = vmatprep.subr.mxu0 0.0
        %2088 = vmatpush1.xpose.msra.mxu0 0.0
        %2089 = vmatprep.subr.mxu0 0.0
        %2090 = vmatpush1.xpose.msra.mxu0 %v2057
        %2091 = vmatprep.subr.mxu0 0.0
        %2092 = vmatpush2.xpose.msra.mxu0 0.0
        %2093 = vmatprep.subr.mxu0 0.0
        %2094 = vmatpush2.xpose.msra.mxu0 0.0
        %2095 = vmatprep.subr.mxu0 0.0
        %2096 = vmatpush2.xpose.msra.mxu0 0.0
        %2097 = vmatprep.subr.mxu0 0.0
        %2098 = vmatpush2.xpose.msra.mxu0 0.0
        %2099 = vmatprep.subr.mxu0 0.0
        %2100 = vmatpush2.xpose.msra.mxu0 0.0
        %2101 = vmatprep.subr.mxu0 0.0
        %2102 = vmatpush2.xpose.msra.mxu0 0.0
        %2103 = vmatprep.subr.mxu0 0.0
        %2104 = vmatpush2.xpose.msra.mxu0 0.0
        %2105 = vmatprep.subr.mxu0 0.0
        %2106 = vmatpush2.xpose.msra.mxu0 0.0
        %2107 = vmatprep.subr.mxu0 0.0
        %2108 = vmatpush2.xpose.msra.mxu0 0.0
        %2109 = vmatprep.subr.mxu0 0.0
        %2110 = vmatpush2.xpose.msra.mxu0 0.0
        %2111 = vmatprep.subr.mxu0 0.0
        %2112 = vmatpush2.xpose.msra.mxu0 0.0
        %2113 = vmatprep.subr.mxu0 0.0
        %2114 = vmatpush2.xpose.msra.mxu0 0.0
        %2115 = vmatprep.subr.mxu0 0.0
        %2116 = vmatpush2.xpose.msra.mxu0 0.0
        %2117 = vmatprep.subr.mxu0 0.0
        %2118 = vmatpush2.xpose.msra.mxu0 0.0
        %2119 = vmatprep.subr.mxu0 0.0
        %2120 = vmatpush2.xpose.msra.mxu0 0.0
        %2121 = vmatprep.subr.mxu0 0.0
        %2122 = vmatpush2.xpose.msra.mxu0 0.0
        %2123 = vmatprep.mubr.f32.mxu0 0.0
        %2124 = vmatmul.mubr.f32.gmra.mxu0 %v2054
        %v2125 = vpop.f32.mrf.mxu0
        %v2126 = vadd.f32 0.0, %v2125
        %v2127 = vpop.f32.mrf.mxu0
        %2128 = vdwg.mxu0
        %v2130 = vsel %vm1976, %v1538, 0
        %v2133 = vsel %vm1976, %v1702, 0
        %2135 = vmatprep.subr.mxu0 0.0
        %2136 = vmatpush1.xpose.msra.mxu0 0.0
        %2137 = vmatprep.subr.mxu0 0.0
        %2138 = vmatpush1.xpose.msra.mxu0 0.0
        %2139 = vmatprep.subr.mxu0 0.0
        %2140 = vmatpush1.xpose.msra.mxu0 0.0
        %2141 = vmatprep.subr.mxu0 0.0
        %2142 = vmatpush1.xpose.msra.mxu0 0.0
        %2143 = vmatprep.subr.mxu0 0.0
        %2144 = vmatpush1.xpose.msra.mxu0 0.0
        %2145 = vmatprep.subr.mxu0 0.0
        %2146 = vmatpush1.xpose.msra.mxu0 0.0
        %2147 = vmatprep.subr.mxu0 0.0
        %2148 = vmatpush1.xpose.msra.mxu0 0.0
        %2149 = vmatprep.subr.mxu0 0.0
        %2150 = vmatpush1.xpose.msra.mxu0 0.0
        %2151 = vmatprep.subr.mxu0 0.0
        %2152 = vmatpush1.xpose.msra.mxu0 0.0
        %2153 = vmatprep.subr.mxu0 0.0
        %2154 = vmatpush1.xpose.msra.mxu0 0.0
        %2155 = vmatprep.subr.mxu0 0.0
        %2156 = vmatpush1.xpose.msra.mxu0 0.0
        %2157 = vmatprep.subr.mxu0 0.0
        %2158 = vmatpush1.xpose.msra.mxu0 0.0
        %2159 = vmatprep.subr.mxu0 0.0
        %2160 = vmatpush1.xpose.msra.mxu0 0.0
        %2161 = vmatprep.subr.mxu0 0.0
        %2162 = vmatpush1.xpose.msra.mxu0 0.0
        %2163 = vmatprep.subr.mxu0 0.0
        %2164 = vmatpush1.xpose.msra.mxu0 0.0
        %2165 = vmatprep.subr.mxu0 0.0
        %2166 = vmatpush1.xpose.msra.mxu0 %v2133
        %2167 = vmatprep.subr.mxu0 0.0
        %2168 = vmatpush2.xpose.msra.mxu0 0.0
        %2169 = vmatprep.subr.mxu0 0.0
        %2170 = vmatpush2.xpose.msra.mxu0 0.0
        %2171 = vmatprep.subr.mxu0 0.0
        %2172 = vmatpush2.xpose.msra.mxu0 0.0
        %2173 = vmatprep.subr.mxu0 0.0
        %2174 = vmatpush2.xpose.msra.mxu0 0.0
        %2175 = vmatprep.subr.mxu0 0.0
        %2176 = vmatpush2.xpose.msra.mxu0 0.0
        %2177 = vmatprep.subr.mxu0 0.0
        %2178 = vmatpush2.xpose.msra.mxu0 0.0
        %2179 = vmatprep.subr.mxu0 0.0
        %2180 = vmatpush2.xpose.msra.mxu0 0.0
        %2181 = vmatprep.subr.mxu0 0.0
        %2182 = vmatpush2.xpose.msra.mxu0 0.0
        %2183 = vmatprep.subr.mxu0 0.0
        %2184 = vmatpush2.xpose.msra.mxu0 0.0
        %2185 = vmatprep.subr.mxu0 0.0
        %2186 = vmatpush2.xpose.msra.mxu0 0.0
        %2187 = vmatprep.subr.mxu0 0.0
        %2188 = vmatpush2.xpose.msra.mxu0 0.0
        %2189 = vmatprep.subr.mxu0 0.0
        %2190 = vmatpush2.xpose.msra.mxu0 0.0
        %2191 = vmatprep.subr.mxu0 0.0
        %2192 = vmatpush2.xpose.msra.mxu0 0.0
        %2193 = vmatprep.subr.mxu0 0.0
        %2194 = vmatpush2.xpose.msra.mxu0 0.0
        %2195 = vmatprep.subr.mxu0 0.0
        %2196 = vmatpush2.xpose.msra.mxu0 0.0
        %2197 = vmatprep.subr.mxu0 0.0
        %2198 = vmatpush2.xpose.msra.mxu0 0.0
        %2199 = vmatprep.mubr.f32.mxu0 0.0
        %2200 = vmatmul.mubr.f32.gmra.mxu0 %v2130
        %v2201 = vpop.f32.mrf.mxu0
        %v2202 = vadd.f32 0.0, %v2201
        %v2203 = vpop.f32.mrf.mxu0
        %2204 = vdwg.mxu0
        %v2206 = vsel %vm1976, %v1539, 0
        %v2209 = vsel %vm1976, %v1703, 0
        %2211 = vmatprep.subr.mxu0 0.0
        %2212 = vmatpush1.xpose.msra.mxu0 0.0
        %2213 = vmatprep.subr.mxu0 0.0
        %2214 = vmatpush1.xpose.msra.mxu0 0.0
        %2215 = vmatprep.subr.mxu0 0.0
        %2216 = vmatpush1.xpose.msra.mxu0 0.0
        %2217 = vmatprep.subr.mxu0 0.0
        %2218 = vmatpush1.xpose.msra.mxu0 0.0
        %2219 = vmatprep.subr.mxu0 0.0
        %2220 = vmatpush1.xpose.msra.mxu0 0.0
        %2221 = vmatprep.subr.mxu0 0.0
        %2222 = vmatpush1.xpose.msra.mxu0 0.0
        %2223 = vmatprep.subr.mxu0 0.0
        %2224 = vmatpush1.xpose.msra.mxu0 0.0
        %2225 = vmatprep.subr.mxu0 0.0
        %2226 = vmatpush1.xpose.msra.mxu0 0.0
        %2227 = vmatprep.subr.mxu0 0.0
        %2228 = vmatpush1.xpose.msra.mxu0 0.0
        %2229 = vmatprep.subr.mxu0 0.0
        %2230 = vmatpush1.xpose.msra.mxu0 0.0
        %2231 = vmatprep.subr.mxu0 0.0
        %2232 = vmatpush1.xpose.msra.mxu0 0.0
        %2233 = vmatprep.subr.mxu0 0.0
        %2234 = vmatpush1.xpose.msra.mxu0 0.0
        %2235 = vmatprep.subr.mxu0 0.0
        %2236 = vmatpush1.xpose.msra.mxu0 0.0
        %2237 = vmatprep.subr.mxu0 0.0
        %2238 = vmatpush1.xpose.msra.mxu0 0.0
        %2239 = vmatprep.subr.mxu0 0.0
        %2240 = vmatpush1.xpose.msra.mxu0 0.0
        %2241 = vmatprep.subr.mxu0 0.0
        %2242 = vmatpush1.xpose.msra.mxu0 %v2209
        %2243 = vmatprep.subr.mxu0 0.0
        %2244 = vmatpush2.xpose.msra.mxu0 0.0
        %2245 = vmatprep.subr.mxu0 0.0
        %2246 = vmatpush2.xpose.msra.mxu0 0.0
        %2247 = vmatprep.subr.mxu0 0.0
        %2248 = vmatpush2.xpose.msra.mxu0 0.0
        %2249 = vmatprep.subr.mxu0 0.0
        %2250 = vmatpush2.xpose.msra.mxu0 0.0
        %2251 = vmatprep.subr.mxu0 0.0
        %2252 = vmatpush2.xpose.msra.mxu0 0.0
        %2253 = vmatprep.subr.mxu0 0.0
        %2254 = vmatpush2.xpose.msra.mxu0 0.0
        %2255 = vmatprep.subr.mxu0 0.0
        %2256 = vmatpush2.xpose.msra.mxu0 0.0
        %2257 = vmatprep.subr.mxu0 0.0
        %2258 = vmatpush2.xpose.msra.mxu0 0.0
        %2259 = vmatprep.subr.mxu0 0.0
        %2260 = vmatpush2.xpose.msra.mxu0 0.0
        %2261 = vmatprep.subr.mxu0 0.0
        %2262 = vmatpush2.xpose.msra.mxu0 0.0
        %2263 = vmatprep.subr.mxu0 0.0
        %2264 = vmatpush2.xpose.msra.mxu0 0.0
        %2265 = vmatprep.subr.mxu0 0.0
        %2266 = vmatpush2.xpose.msra.mxu0 0.0
        %2267 = vmatprep.subr.mxu0 0.0
        %2268 = vmatpush2.xpose.msra.mxu0 0.0
        %2269 = vmatprep.subr.mxu0 0.0
        %2270 = vmatpush2.xpose.msra.mxu0 0.0
        %2271 = vmatprep.subr.mxu0 0.0
        %2272 = vmatpush2.xpose.msra.mxu0 0.0
        %2273 = vmatprep.subr.mxu0 0.0
        %2274 = vmatpush2.xpose.msra.mxu0 0.0
        %2275 = vmatprep.mubr.f32.mxu0 0.0
        %2276 = vmatmul.mubr.f32.gmra.mxu0 %v2206
        %v2277 = vpop.f32.mrf.mxu0
        %v2278 = vadd.f32 0.0, %v2277
        %v2279 = vpop.f32.mrf.mxu0
        %2280 = vdwg.mxu0
        %v2282 = vsel %vm1976, %v1540, 0
        %v2285 = vsel %vm1976, %v1711, 0
        %2287 = vmatprep.subr.mxu0 0.0
        %2288 = vmatpush1.xpose.msra.mxu0 0.0
        %2289 = vmatprep.subr.mxu0 0.0
        %2290 = vmatpush1.xpose.msra.mxu0 0.0
        %2291 = vmatprep.subr.mxu0 0.0
        %2292 = vmatpush1.xpose.msra.mxu0 0.0
        %2293 = vmatprep.subr.mxu0 0.0
        %2294 = vmatpush1.xpose.msra.mxu0 0.0
        %2295 = vmatprep.subr.mxu0 0.0
        %2296 = vmatpush1.xpose.msra.mxu0 0.0
        %2297 = vmatprep.subr.mxu0 0.0
        %2298 = vmatpush1.xpose.msra.mxu0 0.0
        %2299 = vmatprep.subr.mxu0 0.0
        %2300 = vmatpush1.xpose.msra.mxu0 0.0
        %2301 = vmatprep.subr.mxu0 0.0
        %2302 = vmatpush1.xpose.msra.mxu0 0.0
        %2303 = vmatprep.subr.mxu0 0.0
        %2304 = vmatpush1.xpose.msra.mxu0 0.0
        %2305 = vmatprep.subr.mxu0 0.0
        %2306 = vmatpush1.xpose.msra.mxu0 0.0
        %2307 = vmatprep.subr.mxu0 0.0
        %2308 = vmatpush1.xpose.msra.mxu0 0.0
        %2309 = vmatprep.subr.mxu0 0.0
        %2310 = vmatpush1.xpose.msra.mxu0 0.0
        %2311 = vmatprep.subr.mxu0 0.0
        %2312 = vmatpush1.xpose.msra.mxu0 0.0
        %2313 = vmatprep.subr.mxu0 0.0
        %2314 = vmatpush1.xpose.msra.mxu0 0.0
        %2315 = vmatprep.subr.mxu0 0.0
        %2316 = vmatpush1.xpose.msra.mxu0 0.0
        %2317 = vmatprep.subr.mxu0 0.0
        %2318 = vmatpush1.xpose.msra.mxu0 %v2285
        %2319 = vmatprep.subr.mxu0 0.0
        %2320 = vmatpush2.xpose.msra.mxu0 0.0
        %2321 = vmatprep.subr.mxu0 0.0
        %2322 = vmatpush2.xpose.msra.mxu0 0.0
        %2323 = vmatprep.subr.mxu0 0.0
        %2324 = vmatpush2.xpose.msra.mxu0 0.0
        %2325 = vmatprep.subr.mxu0 0.0
        %2326 = vmatpush2.xpose.msra.mxu0 0.0
        %2327 = vmatprep.subr.mxu0 0.0
        %2328 = vmatpush2.xpose.msra.mxu0 0.0
        %2329 = vmatprep.subr.mxu0 0.0
        %2330 = vmatpush2.xpose.msra.mxu0 0.0
        %2331 = vmatprep.subr.mxu0 0.0
        %2332 = vmatpush2.xpose.msra.mxu0 0.0
        %2333 = vmatprep.subr.mxu0 0.0
        %2334 = vmatpush2.xpose.msra.mxu0 0.0
        %2335 = vmatprep.subr.mxu0 0.0
        %2336 = vmatpush2.xpose.msra.mxu0 0.0
        %2337 = vmatprep.subr.mxu0 0.0
        %2338 = vmatpush2.xpose.msra.mxu0 0.0
        %2339 = vmatprep.subr.mxu0 0.0
        %2340 = vmatpush2.xpose.msra.mxu0 0.0
        %2341 = vmatprep.subr.mxu0 0.0
        %2342 = vmatpush2.xpose.msra.mxu0 0.0
        %2343 = vmatprep.subr.mxu0 0.0
        %2344 = vmatpush2.xpose.msra.mxu0 0.0
        %2345 = vmatprep.subr.mxu0 0.0
        %2346 = vmatpush2.xpose.msra.mxu0 0.0
        %2347 = vmatprep.subr.mxu0 0.0
        %2348 = vmatpush2.xpose.msra.mxu0 0.0
        %2349 = vmatprep.subr.mxu0 0.0
        %2350 = vmatpush2.xpose.msra.mxu0 0.0
        %2351 = vmatprep.mubr.f32.mxu0 0.0
        %2352 = vmatmul.mubr.f32.gmra.mxu0 %v2282
        %v2353 = vpop.f32.mrf.mxu0
        %v2354 = vadd.f32 0.0, %v2353
        %v2355 = vpop.f32.mrf.mxu0
        %2356 = vdwg.mxu0
        %v2358 = vsel %vm1976, %v1541, 0
        %v2361 = vsel %vm1976, %v1712, 0
        %2363 = vmatprep.subr.mxu0 0.0
        %2364 = vmatpush1.xpose.msra.mxu0 0.0
        %2365 = vmatprep.subr.mxu0 0.0
        %2366 = vmatpush1.xpose.msra.mxu0 0.0
        %2367 = vmatprep.subr.mxu0 0.0
        %2368 = vmatpush1.xpose.msra.mxu0 0.0
        %2369 = vmatprep.subr.mxu0 0.0
        %2370 = vmatpush1.xpose.msra.mxu0 0.0
        %2371 = vmatprep.subr.mxu0 0.0
        %2372 = vmatpush1.xpose.msra.mxu0 0.0
        %2373 = vmatprep.subr.mxu0 0.0
        %2374 = vmatpush1.xpose.msra.mxu0 0.0
        %2375 = vmatprep.subr.mxu0 0.0
        %2376 = vmatpush1.xpose.msra.mxu0 0.0
        %2377 = vmatprep.subr.mxu0 0.0
        %2378 = vmatpush1.xpose.msra.mxu0 0.0
        %2379 = vmatprep.subr.mxu0 0.0
        %2380 = vmatpush1.xpose.msra.mxu0 0.0
        %2381 = vmatprep.subr.mxu0 0.0
        %2382 = vmatpush1.xpose.msra.mxu0 0.0
        %2383 = vmatprep.subr.mxu0 0.0
        %2384 = vmatpush1.xpose.msra.mxu0 0.0
        %2385 = vmatprep.subr.mxu0 0.0
        %2386 = vmatpush1.xpose.msra.mxu0 0.0
        %2387 = vmatprep.subr.mxu0 0.0
        %2388 = vmatpush1.xpose.msra.mxu0 0.0
        %2389 = vmatprep.subr.mxu0 0.0
        %2390 = vmatpush1.xpose.msra.mxu0 0.0
        %2391 = vmatprep.subr.mxu0 0.0
        %2392 = vmatpush1.xpose.msra.mxu0 0.0
        %2393 = vmatprep.subr.mxu0 0.0
        %2394 = vmatpush1.xpose.msra.mxu0 %v2361
        %2395 = vmatprep.subr.mxu0 0.0
        %2396 = vmatpush2.xpose.msra.mxu0 0.0
        %2397 = vmatprep.subr.mxu0 0.0
        %2398 = vmatpush2.xpose.msra.mxu0 0.0
        %2399 = vmatprep.subr.mxu0 0.0
        %2400 = vmatpush2.xpose.msra.mxu0 0.0
        %2401 = vmatprep.subr.mxu0 0.0
        %2402 = vmatpush2.xpose.msra.mxu0 0.0
        %2403 = vmatprep.subr.mxu0 0.0
        %2404 = vmatpush2.xpose.msra.mxu0 0.0
        %2405 = vmatprep.subr.mxu0 0.0
        %2406 = vmatpush2.xpose.msra.mxu0 0.0
        %2407 = vmatprep.subr.mxu0 0.0
        %2408 = vmatpush2.xpose.msra.mxu0 0.0
        %2409 = vmatprep.subr.mxu0 0.0
        %2410 = vmatpush2.xpose.msra.mxu0 0.0
        %2411 = vmatprep.subr.mxu0 0.0
        %2412 = vmatpush2.xpose.msra.mxu0 0.0
        %2413 = vmatprep.subr.mxu0 0.0
        %2414 = vmatpush2.xpose.msra.mxu0 0.0
        %2415 = vmatprep.subr.mxu0 0.0
        %2416 = vmatpush2.xpose.msra.mxu0 0.0
        %2417 = vmatprep.subr.mxu0 0.0
        %2418 = vmatpush2.xpose.msra.mxu0 0.0
        %2419 = vmatprep.subr.mxu0 0.0
        %2420 = vmatpush2.xpose.msra.mxu0 0.0
        %2421 = vmatprep.subr.mxu0 0.0
        %2422 = vmatpush2.xpose.msra.mxu0 0.0
        %2423 = vmatprep.subr.mxu0 0.0
        %2424 = vmatpush2.xpose.msra.mxu0 0.0
        %2425 = vmatprep.subr.mxu0 0.0
        %2426 = vmatpush2.xpose.msra.mxu0 0.0
        %2427 = vmatprep.mubr.f32.mxu0 0.0
        %2428 = vmatmul.mubr.f32.gmra.mxu0 %v2358
        %v2429 = vpop.f32.mrf.mxu0
        %v2430 = vadd.f32 0.0, %v2429
        %v2431 = vpop.f32.mrf.mxu0
        %2432 = vdwg.mxu0
        %v2434 = vsel %vm1976, %v1542, 0
        %v2437 = vsel %vm1976, %v1722, 0
        %2439 = vmatprep.subr.mxu0 0.0
        %2440 = vmatpush1.xpose.msra.mxu0 0.0
        %2441 = vmatprep.subr.mxu0 0.0
        %2442 = vmatpush1.xpose.msra.mxu0 0.0
        %2443 = vmatprep.subr.mxu0 0.0
        %2444 = vmatpush1.xpose.msra.mxu0 0.0
        %2445 = vmatprep.subr.mxu0 0.0
        %2446 = vmatpush1.xpose.msra.mxu0 0.0
        %2447 = vmatprep.subr.mxu0 0.0
        %2448 = vmatpush1.xpose.msra.mxu0 0.0
        %2449 = vmatprep.subr.mxu0 0.0
        %2450 = vmatpush1.xpose.msra.mxu0 0.0
        %2451 = vmatprep.subr.mxu0 0.0
        %2452 = vmatpush1.xpose.msra.mxu0 0.0
        %2453 = vmatprep.subr.mxu0 0.0
        %2454 = vmatpush1.xpose.msra.mxu0 0.0
        %2455 = vmatprep.subr.mxu0 0.0
        %2456 = vmatpush1.xpose.msra.mxu0 0.0
        %2457 = vmatprep.subr.mxu0 0.0
        %2458 = vmatpush1.xpose.msra.mxu0 0.0
        %2459 = vmatprep.subr.mxu0 0.0
        %2460 = vmatpush1.xpose.msra.mxu0 0.0
        %2461 = vmatprep.subr.mxu0 0.0
        %2462 = vmatpush1.xpose.msra.mxu0 0.0
        %2463 = vmatprep.subr.mxu0 0.0
        %2464 = vmatpush1.xpose.msra.mxu0 0.0
        %2465 = vmatprep.subr.mxu0 0.0
        %2466 = vmatpush1.xpose.msra.mxu0 0.0
        %2467 = vmatprep.subr.mxu0 0.0
        %2468 = vmatpush1.xpose.msra.mxu0 0.0
        %2469 = vmatprep.subr.mxu0 0.0
        %2470 = vmatpush1.xpose.msra.mxu0 %v2437
        %2471 = vmatprep.subr.mxu0 0.0
        %2472 = vmatpush2.xpose.msra.mxu0 0.0
        %2473 = vmatprep.subr.mxu0 0.0
        %2474 = vmatpush2.xpose.msra.mxu0 0.0
        %2475 = vmatprep.subr.mxu0 0.0
        %2476 = vmatpush2.xpose.msra.mxu0 0.0
        %2477 = vmatprep.subr.mxu0 0.0
        %2478 = vmatpush2.xpose.msra.mxu0 0.0
        %2479 = vmatprep.subr.mxu0 0.0
        %2480 = vmatpush2.xpose.msra.mxu0 0.0
        %2481 = vmatprep.subr.mxu0 0.0
        %2482 = vmatpush2.xpose.msra.mxu0 0.0
        %2483 = vmatprep.subr.mxu0 0.0
        %2484 = vmatpush2.xpose.msra.mxu0 0.0
        %2485 = vmatprep.subr.mxu0 0.0
        %2486 = vmatpush2.xpose.msra.mxu0 0.0
        %2487 = vmatprep.subr.mxu0 0.0
        %2488 = vmatpush2.xpose.msra.mxu0 0.0
        %2489 = vmatprep.subr.mxu0 0.0
        %2490 = vmatpush2.xpose.msra.mxu0 0.0
        %2491 = vmatprep.subr.mxu0 0.0
        %2492 = vmatpush2.xpose.msra.mxu0 0.0
        %2493 = vmatprep.subr.mxu0 0.0
        %2494 = vmatpush2.xpose.msra.mxu0 0.0
        %2495 = vmatprep.subr.mxu0 0.0
        %2496 = vmatpush2.xpose.msra.mxu0 0.0
        %2497 = vmatprep.subr.mxu0 0.0
        %2498 = vmatpush2.xpose.msra.mxu0 0.0
        %2499 = vmatprep.subr.mxu0 0.0
        %2500 = vmatpush2.xpose.msra.mxu0 0.0
        %2501 = vmatprep.subr.mxu0 0.0
        %2502 = vmatpush2.xpose.msra.mxu0 0.0
        %2503 = vmatprep.mubr.f32.mxu0 0.0
        %2504 = vmatmul.mubr.f32.gmra.mxu0 %v2434
        %v2505 = vpop.f32.mrf.mxu0
        %v2506 = vadd.f32 0.0, %v2505
        %v2507 = vpop.f32.mrf.mxu0
        %2508 = vdwg.mxu0
        %v2510 = vsel %vm1976, %v1543, 0
        %v2513 = vsel %vm1976, %v1723, 0
        %2515 = vmatprep.subr.mxu0 0.0
        %2516 = vmatpush1.xpose.msra.mxu0 0.0
        %2517 = vmatprep.subr.mxu0 0.0
        %2518 = vmatpush1.xpose.msra.mxu0 0.0
        %2519 = vmatprep.subr.mxu0 0.0
        %2520 = vmatpush1.xpose.msra.mxu0 0.0
        %2521 = vmatprep.subr.mxu0 0.0
        %2522 = vmatpush1.xpose.msra.mxu0 0.0
        %2523 = vmatprep.subr.mxu0 0.0
        %2524 = vmatpush1.xpose.msra.mxu0 0.0
        %2525 = vmatprep.subr.mxu0 0.0
        %2526 = vmatpush1.xpose.msra.mxu0 0.0
        %2527 = vmatprep.subr.mxu0 0.0
        %2528 = vmatpush1.xpose.msra.mxu0 0.0
        %2529 = vmatprep.subr.mxu0 0.0
        %2530 = vmatpush1.xpose.msra.mxu0 0.0
        %2531 = vmatprep.subr.mxu0 0.0
        %2532 = vmatpush1.xpose.msra.mxu0 0.0
        %2533 = vmatprep.subr.mxu0 0.0
        %2534 = vmatpush1.xpose.msra.mxu0 0.0
        %2535 = vmatprep.subr.mxu0 0.0
        %2536 = vmatpush1.xpose.msra.mxu0 0.0
        %2537 = vmatprep.subr.mxu0 0.0
        %2538 = vmatpush1.xpose.msra.mxu0 0.0
        %2539 = vmatprep.subr.mxu0 0.0
        %2540 = vmatpush1.xpose.msra.mxu0 0.0
        %2541 = vmatprep.subr.mxu0 0.0
        %2542 = vmatpush1.xpose.msra.mxu0 0.0
        %2543 = vmatprep.subr.mxu0 0.0
        %2544 = vmatpush1.xpose.msra.mxu0 0.0
        %2545 = vmatprep.subr.mxu0 0.0
        %2546 = vmatpush1.xpose.msra.mxu0 %v2513
        %2547 = vmatprep.subr.mxu0 0.0
        %2548 = vmatpush2.xpose.msra.mxu0 0.0
        %2549 = vmatprep.subr.mxu0 0.0
        %2550 = vmatpush2.xpose.msra.mxu0 0.0
        %2551 = vmatprep.subr.mxu0 0.0
        %2552 = vmatpush2.xpose.msra.mxu0 0.0
        %2553 = vmatprep.subr.mxu0 0.0
        %2554 = vmatpush2.xpose.msra.mxu0 0.0
        %2555 = vmatprep.subr.mxu0 0.0
        %2556 = vmatpush2.xpose.msra.mxu0 0.0
        %2557 = vmatprep.subr.mxu0 0.0
        %2558 = vmatpush2.xpose.msra.mxu0 0.0
        %2559 = vmatprep.subr.mxu0 0.0
        %2560 = vmatpush2.xpose.msra.mxu0 0.0
        %2561 = vmatprep.subr.mxu0 0.0
        %2562 = vmatpush2.xpose.msra.mxu0 0.0
        %2563 = vmatprep.subr.mxu0 0.0
        %2564 = vmatpush2.xpose.msra.mxu0 0.0
        %2565 = vmatprep.subr.mxu0 0.0
        %2566 = vmatpush2.xpose.msra.mxu0 0.0
        %2567 = vmatprep.subr.mxu0 0.0
        %2568 = vmatpush2.xpose.msra.mxu0 0.0
        %2569 = vmatprep.subr.mxu0 0.0
        %2570 = vmatpush2.xpose.msra.mxu0 0.0
        %2571 = vmatprep.subr.mxu0 0.0
        %2572 = vmatpush2.xpose.msra.mxu0 0.0
        %2573 = vmatprep.subr.mxu0 0.0
        %2574 = vmatpush2.xpose.msra.mxu0 0.0
        %2575 = vmatprep.subr.mxu0 0.0
        %2576 = vmatpush2.xpose.msra.mxu0 0.0
        %2577 = vmatprep.subr.mxu0 0.0
        %2578 = vmatpush2.xpose.msra.mxu0 0.0
        %2579 = vmatprep.mubr.f32.mxu0 0.0
        %2580 = vmatmul.mubr.f32.gmra.mxu0 %v2510
        %v2581 = vpop.f32.mrf.mxu0
        %v2582 = vadd.f32 0.0, %v2581
        %v2583 = vpop.f32.mrf.mxu0
        %2584 = vdwg.mxu0
        %v2586 = vsel %vm1976, %v1544, 0
        %v2589 = vsel %vm1976, %v1731, 0
        %2591 = vmatprep.subr.mxu0 0.0
        %2592 = vmatpush1.xpose.msra.mxu0 0.0
        %2593 = vmatprep.subr.mxu0 0.0
        %2594 = vmatpush1.xpose.msra.mxu0 0.0
        %2595 = vmatprep.subr.mxu0 0.0
        %2596 = vmatpush1.xpose.msra.mxu0 0.0
        %2597 = vmatprep.subr.mxu0 0.0
        %2598 = vmatpush1.xpose.msra.mxu0 0.0
        %2599 = vmatprep.subr.mxu0 0.0
        %2600 = vmatpush1.xpose.msra.mxu0 0.0
        %2601 = vmatprep.subr.mxu0 0.0
        %2602 = vmatpush1.xpose.msra.mxu0 0.0
        %2603 = vmatprep.subr.mxu0 0.0
        %2604 = vmatpush1.xpose.msra.mxu0 0.0
        %2605 = vmatprep.subr.mxu0 0.0
        %2606 = vmatpush1.xpose.msra.mxu0 0.0
        %2607 = vmatprep.subr.mxu0 0.0
        %2608 = vmatpush1.xpose.msra.mxu0 0.0
        %2609 = vmatprep.subr.mxu0 0.0
        %2610 = vmatpush1.xpose.msra.mxu0 0.0
        %2611 = vmatprep.subr.mxu0 0.0
        %2612 = vmatpush1.xpose.msra.mxu0 0.0
        %2613 = vmatprep.subr.mxu0 0.0
        %2614 = vmatpush1.xpose.msra.mxu0 0.0
        %2615 = vmatprep.subr.mxu0 0.0
        %2616 = vmatpush1.xpose.msra.mxu0 0.0
        %2617 = vmatprep.subr.mxu0 0.0
        %2618 = vmatpush1.xpose.msra.mxu0 0.0
        %2619 = vmatprep.subr.mxu0 0.0
        %2620 = vmatpush1.xpose.msra.mxu0 0.0
        %2621 = vmatprep.subr.mxu0 0.0
        %2622 = vmatpush1.xpose.msra.mxu0 %v2589
        %2623 = vmatprep.subr.mxu0 0.0
        %2624 = vmatpush2.xpose.msra.mxu0 0.0
        %2625 = vmatprep.subr.mxu0 0.0
        %2626 = vmatpush2.xpose.msra.mxu0 0.0
        %2627 = vmatprep.subr.mxu0 0.0
        %2628 = vmatpush2.xpose.msra.mxu0 0.0
        %2629 = vmatprep.subr.mxu0 0.0
        %2630 = vmatpush2.xpose.msra.mxu0 0.0
        %2631 = vmatprep.subr.mxu0 0.0
        %2632 = vmatpush2.xpose.msra.mxu0 0.0
        %2633 = vmatprep.subr.mxu0 0.0
        %2634 = vmatpush2.xpose.msra.mxu0 0.0
        %2635 = vmatprep.subr.mxu0 0.0
        %2636 = vmatpush2.xpose.msra.mxu0 0.0
        %2637 = vmatprep.subr.mxu0 0.0
        %2638 = vmatpush2.xpose.msra.mxu0 0.0
        %2639 = vmatprep.subr.mxu0 0.0
        %2640 = vmatpush2.xpose.msra.mxu0 0.0
        %2641 = vmatprep.subr.mxu0 0.0
        %2642 = vmatpush2.xpose.msra.mxu0 0.0
        %2643 = vmatprep.subr.mxu0 0.0
        %2644 = vmatpush2.xpose.msra.mxu0 0.0
        %2645 = vmatprep.subr.mxu0 0.0
        %2646 = vmatpush2.xpose.msra.mxu0 0.0
        %2647 = vmatprep.subr.mxu0 0.0
        %2648 = vmatpush2.xpose.msra.mxu0 0.0
        %2649 = vmatprep.subr.mxu0 0.0
        %2650 = vmatpush2.xpose.msra.mxu0 0.0
        %2651 = vmatprep.subr.mxu0 0.0
        %2652 = vmatpush2.xpose.msra.mxu0 0.0
        %2653 = vmatprep.subr.mxu0 0.0
        %2654 = vmatpush2.xpose.msra.mxu0 0.0
        %2655 = vmatprep.mubr.f32.mxu0 0.0
        %2656 = vmatmul.mubr.f32.gmra.mxu0 %v2586
        %v2657 = vpop.f32.mrf.mxu0
        %v2658 = vadd.f32 0.0, %v2657
        %v2659 = vpop.f32.mrf.mxu0
        %2660 = vdwg.mxu0
        %v2662 = vsel %vm1976, %v1545, 0
        %v2665 = vsel %vm1976, %v1732, 0
        %2667 = vmatprep.subr.mxu0 0.0
        %2668 = vmatpush1.xpose.msra.mxu0 0.0
        %2669 = vmatprep.subr.mxu0 0.0
        %2670 = vmatpush1.xpose.msra.mxu0 0.0
        %2671 = vmatprep.subr.mxu0 0.0
        %2672 = vmatpush1.xpose.msra.mxu0 0.0
        %2673 = vmatprep.subr.mxu0 0.0
        %2674 = vmatpush1.xpose.msra.mxu0 0.0
        %2675 = vmatprep.subr.mxu0 0.0
        %2676 = vmatpush1.xpose.msra.mxu0 0.0
        %2677 = vmatprep.subr.mxu0 0.0
        %2678 = vmatpush1.xpose.msra.mxu0 0.0
        %2679 = vmatprep.subr.mxu0 0.0
        %2680 = vmatpush1.xpose.msra.mxu0 0.0
        %2681 = vmatprep.subr.mxu0 0.0
        %2682 = vmatpush1.xpose.msra.mxu0 0.0
        %2683 = vmatprep.subr.mxu0 0.0
        %2684 = vmatpush1.xpose.msra.mxu0 0.0
        %2685 = vmatprep.subr.mxu0 0.0
        %2686 = vmatpush1.xpose.msra.mxu0 0.0
        %2687 = vmatprep.subr.mxu0 0.0
        %2688 = vmatpush1.xpose.msra.mxu0 0.0
        %2689 = vmatprep.subr.mxu0 0.0
        %2690 = vmatpush1.xpose.msra.mxu0 0.0
        %2691 = vmatprep.subr.mxu0 0.0
        %2692 = vmatpush1.xpose.msra.mxu0 0.0
        %2693 = vmatprep.subr.mxu0 0.0
        %2694 = vmatpush1.xpose.msra.mxu0 0.0
        %2695 = vmatprep.subr.mxu0 0.0
        %2696 = vmatpush1.xpose.msra.mxu0 0.0
        %2697 = vmatprep.subr.mxu0 0.0
        %2698 = vmatpush1.xpose.msra.mxu0 %v2665
        %2699 = vmatprep.subr.mxu0 0.0
        %2700 = vmatpush2.xpose.msra.mxu0 0.0
        %2701 = vmatprep.subr.mxu0 0.0
        %2702 = vmatpush2.xpose.msra.mxu0 0.0
        %2703 = vmatprep.subr.mxu0 0.0
        %2704 = vmatpush2.xpose.msra.mxu0 0.0
        %2705 = vmatprep.subr.mxu0 0.0
        %2706 = vmatpush2.xpose.msra.mxu0 0.0
        %2707 = vmatprep.subr.mxu0 0.0
        %2708 = vmatpush2.xpose.msra.mxu0 0.0
        %2709 = vmatprep.subr.mxu0 0.0
        %2710 = vmatpush2.xpose.msra.mxu0 0.0
        %2711 = vmatprep.subr.mxu0 0.0
        %2712 = vmatpush2.xpose.msra.mxu0 0.0
        %2713 = vmatprep.subr.mxu0 0.0
        %2714 = vmatpush2.xpose.msra.mxu0 0.0
        %2715 = vmatprep.subr.mxu0 0.0
        %2716 = vmatpush2.xpose.msra.mxu0 0.0
        %2717 = vmatprep.subr.mxu0 0.0
        %2718 = vmatpush2.xpose.msra.mxu0 0.0
        %2719 = vmatprep.subr.mxu0 0.0
        %2720 = vmatpush2.xpose.msra.mxu0 0.0
        %2721 = vmatprep.subr.mxu0 0.0
        %2722 = vmatpush2.xpose.msra.mxu0 0.0
        %2723 = vmatprep.subr.mxu0 0.0
        %2724 = vmatpush2.xpose.msra.mxu0 0.0
        %2725 = vmatprep.subr.mxu0 0.0
        %2726 = vmatpush2.xpose.msra.mxu0 0.0
        %2727 = vmatprep.subr.mxu0 0.0
        %2728 = vmatpush2.xpose.msra.mxu0 0.0
        %2729 = vmatprep.subr.mxu0 0.0
        %2730 = vmatpush2.xpose.msra.mxu0 0.0
        %2731 = vmatprep.mubr.f32.mxu0 0.0
        %2732 = vmatmul.mubr.f32.gmra.mxu0 %v2662
        %v2733 = vpop.f32.mrf.mxu0
        %v2734 = vadd.f32 0.0, %v2733
        %v2735 = vpop.f32.mrf.mxu0
        %2736 = vdwg.mxu0
        %v2738 = vsel %vm1976, %v1546, 0
        %v2741 = vsel %vm1976, %v1742, 0
        %2743 = vmatprep.subr.mxu0 0.0
        %2744 = vmatpush1.xpose.msra.mxu0 0.0
        %2745 = vmatprep.subr.mxu0 0.0
        %2746 = vmatpush1.xpose.msra.mxu0 0.0
        %2747 = vmatprep.subr.mxu0 0.0
        %2748 = vmatpush1.xpose.msra.mxu0 0.0
        %2749 = vmatprep.subr.mxu0 0.0
        %2750 = vmatpush1.xpose.msra.mxu0 0.0
        %2751 = vmatprep.subr.mxu0 0.0
        %2752 = vmatpush1.xpose.msra.mxu0 0.0
        %2753 = vmatprep.subr.mxu0 0.0
        %2754 = vmatpush1.xpose.msra.mxu0 0.0
        %2755 = vmatprep.subr.mxu0 0.0
        %2756 = vmatpush1.xpose.msra.mxu0 0.0
        %2757 = vmatprep.subr.mxu0 0.0
        %2758 = vmatpush1.xpose.msra.mxu0 0.0
        %2759 = vmatprep.subr.mxu0 0.0
        %2760 = vmatpush1.xpose.msra.mxu0 0.0
        %2761 = vmatprep.subr.mxu0 0.0
        %2762 = vmatpush1.xpose.msra.mxu0 0.0
        %2763 = vmatprep.subr.mxu0 0.0
        %2764 = vmatpush1.xpose.msra.mxu0 0.0
        %2765 = vmatprep.subr.mxu0 0.0
        %2766 = vmatpush1.xpose.msra.mxu0 0.0
        %2767 = vmatprep.subr.mxu0 0.0
        %2768 = vmatpush1.xpose.msra.mxu0 0.0
        %2769 = vmatprep.subr.mxu0 0.0
        %2770 = vmatpush1.xpose.msra.mxu0 0.0
        %2771 = vmatprep.subr.mxu0 0.0
        %2772 = vmatpush1.xpose.msra.mxu0 0.0
        %2773 = vmatprep.subr.mxu0 0.0
        %2774 = vmatpush1.xpose.msra.mxu0 %v2741
        %2775 = vmatprep.subr.mxu0 0.0
        %2776 = vmatpush2.xpose.msra.mxu0 0.0
        %2777 = vmatprep.subr.mxu0 0.0
        %2778 = vmatpush2.xpose.msra.mxu0 0.0
        %2779 = vmatprep.subr.mxu0 0.0
        %2780 = vmatpush2.xpose.msra.mxu0 0.0
        %2781 = vmatprep.subr.mxu0 0.0
        %2782 = vmatpush2.xpose.msra.mxu0 0.0
        %2783 = vmatprep.subr.mxu0 0.0
        %2784 = vmatpush2.xpose.msra.mxu0 0.0
        %2785 = vmatprep.subr.mxu0 0.0
        %2786 = vmatpush2.xpose.msra.mxu0 0.0
        %2787 = vmatprep.subr.mxu0 0.0
        %2788 = vmatpush2.xpose.msra.mxu0 0.0
        %2789 = vmatprep.subr.mxu0 0.0
        %2790 = vmatpush2.xpose.msra.mxu0 0.0
        %2791 = vmatprep.subr.mxu0 0.0
        %2792 = vmatpush2.xpose.msra.mxu0 0.0
        %2793 = vmatprep.subr.mxu0 0.0
        %2794 = vmatpush2.xpose.msra.mxu0 0.0
        %2795 = vmatprep.subr.mxu0 0.0
        %2796 = vmatpush2.xpose.msra.mxu0 0.0
        %2797 = vmatprep.subr.mxu0 0.0
        %2798 = vmatpush2.xpose.msra.mxu0 0.0
        %2799 = vmatprep.subr.mxu0 0.0
        %2800 = vmatpush2.xpose.msra.mxu0 0.0
        %2801 = vmatprep.subr.mxu0 0.0
        %2802 = vmatpush2.xpose.msra.mxu0 0.0
        %2803 = vmatprep.subr.mxu0 0.0
        %2804 = vmatpush2.xpose.msra.mxu0 0.0
        %2805 = vmatprep.subr.mxu0 0.0
        %2806 = vmatpush2.xpose.msra.mxu0 0.0
        %2807 = vmatprep.mubr.f32.mxu0 0.0
        %2808 = vmatmul.mubr.f32.gmra.mxu0 %v2738
        %v2809 = vpop.f32.mrf.mxu0
        %v2810 = vadd.f32 0.0, %v2809
        %v2811 = vpop.f32.mrf.mxu0
        %2812 = vdwg.mxu0
        %v2814 = vsel %vm1976, %v1547, 0
        %v2817 = vsel %vm1976, %v1743, 0
        %2819 = vmatprep.subr.mxu0 0.0
        %2820 = vmatpush1.xpose.msra.mxu0 0.0
        %2821 = vmatprep.subr.mxu0 0.0
        %2822 = vmatpush1.xpose.msra.mxu0 0.0
        %2823 = vmatprep.subr.mxu0 0.0
        %2824 = vmatpush1.xpose.msra.mxu0 0.0
        %2825 = vmatprep.subr.mxu0 0.0
        %2826 = vmatpush1.xpose.msra.mxu0 0.0
        %2827 = vmatprep.subr.mxu0 0.0
        %2828 = vmatpush1.xpose.msra.mxu0 0.0
        %2829 = vmatprep.subr.mxu0 0.0
        %2830 = vmatpush1.xpose.msra.mxu0 0.0
        %2831 = vmatprep.subr.mxu0 0.0
        %2832 = vmatpush1.xpose.msra.mxu0 0.0
        %2833 = vmatprep.subr.mxu0 0.0
        %2834 = vmatpush1.xpose.msra.mxu0 0.0
        %2835 = vmatprep.subr.mxu0 0.0
        %2836 = vmatpush1.xpose.msra.mxu0 0.0
        %2837 = vmatprep.subr.mxu0 0.0
        %2838 = vmatpush1.xpose.msra.mxu0 0.0
        %2839 = vmatprep.subr.mxu0 0.0
        %2840 = vmatpush1.xpose.msra.mxu0 0.0
        %2841 = vmatprep.subr.mxu0 0.0
        %2842 = vmatpush1.xpose.msra.mxu0 0.0
        %2843 = vmatprep.subr.mxu0 0.0
        %2844 = vmatpush1.xpose.msra.mxu0 0.0
        %2845 = vmatprep.subr.mxu0 0.0
        %2846 = vmatpush1.xpose.msra.mxu0 0.0
        %2847 = vmatprep.subr.mxu0 0.0
        %2848 = vmatpush1.xpose.msra.mxu0 0.0
        %2849 = vmatprep.subr.mxu0 0.0
        %2850 = vmatpush1.xpose.msra.mxu0 %v2817
        %2851 = vmatprep.subr.mxu0 0.0
        %2852 = vmatpush2.xpose.msra.mxu0 0.0
        %2853 = vmatprep.subr.mxu0 0.0
        %2854 = vmatpush2.xpose.msra.mxu0 0.0
        %2855 = vmatprep.subr.mxu0 0.0
        %2856 = vmatpush2.xpose.msra.mxu0 0.0
        %2857 = vmatprep.subr.mxu0 0.0
        %2858 = vmatpush2.xpose.msra.mxu0 0.0
        %2859 = vmatprep.subr.mxu0 0.0
        %2860 = vmatpush2.xpose.msra.mxu0 0.0
        %2861 = vmatprep.subr.mxu0 0.0
        %2862 = vmatpush2.xpose.msra.mxu0 0.0
        %2863 = vmatprep.subr.mxu0 0.0
        %2864 = vmatpush2.xpose.msra.mxu0 0.0
        %2865 = vmatprep.subr.mxu0 0.0
        %2866 = vmatpush2.xpose.msra.mxu0 0.0
        %2867 = vmatprep.subr.mxu0 0.0
        %2868 = vmatpush2.xpose.msra.mxu0 0.0
        %2869 = vmatprep.subr.mxu0 0.0
        %2870 = vmatpush2.xpose.msra.mxu0 0.0
        %2871 = vmatprep.subr.mxu0 0.0
        %2872 = vmatpush2.xpose.msra.mxu0 0.0
        %2873 = vmatprep.subr.mxu0 0.0
        %2874 = vmatpush2.xpose.msra.mxu0 0.0
        %2875 = vmatprep.subr.mxu0 0.0
        %2876 = vmatpush2.xpose.msra.mxu0 0.0
        %2877 = vmatprep.subr.mxu0 0.0
        %2878 = vmatpush2.xpose.msra.mxu0 0.0
        %2879 = vmatprep.subr.mxu0 0.0
        %2880 = vmatpush2.xpose.msra.mxu0 0.0
        %2881 = vmatprep.subr.mxu0 0.0
        %2882 = vmatpush2.xpose.msra.mxu0 0.0
        %2883 = vmatprep.mubr.f32.mxu0 0.0
        %2884 = vmatmul.mubr.f32.gmra.mxu0 %v2814
        %v2885 = vpop.f32.mrf.mxu0
        %v2886 = vadd.f32 0.0, %v2885
        %v2887 = vpop.f32.mrf.mxu0
        %2888 = vdwg.mxu0
        %v2890 = vsel %vm1976, %v1548, 0
        %v2893 = vsel %vm1976, %v1751, 0
        %2895 = vmatprep.subr.mxu0 0.0
        %2896 = vmatpush1.xpose.msra.mxu0 0.0
        %2897 = vmatprep.subr.mxu0 0.0
        %2898 = vmatpush1.xpose.msra.mxu0 0.0
        %2899 = vmatprep.subr.mxu0 0.0
        %2900 = vmatpush1.xpose.msra.mxu0 0.0
        %2901 = vmatprep.subr.mxu0 0.0
        %2902 = vmatpush1.xpose.msra.mxu0 0.0
        %2903 = vmatprep.subr.mxu0 0.0
        %2904 = vmatpush1.xpose.msra.mxu0 0.0
        %2905 = vmatprep.subr.mxu0 0.0
        %2906 = vmatpush1.xpose.msra.mxu0 0.0
        %2907 = vmatprep.subr.mxu0 0.0
        %2908 = vmatpush1.xpose.msra.mxu0 0.0
        %2909 = vmatprep.subr.mxu0 0.0
        %2910 = vmatpush1.xpose.msra.mxu0 0.0
        %2911 = vmatprep.subr.mxu0 0.0
        %2912 = vmatpush1.xpose.msra.mxu0 0.0
        %2913 = vmatprep.subr.mxu0 0.0
        %2914 = vmatpush1.xpose.msra.mxu0 0.0
        %2915 = vmatprep.subr.mxu0 0.0
        %2916 = vmatpush1.xpose.msra.mxu0 0.0
        %2917 = vmatprep.subr.mxu0 0.0
        %2918 = vmatpush1.xpose.msra.mxu0 0.0
        %2919 = vmatprep.subr.mxu0 0.0
        %2920 = vmatpush1.xpose.msra.mxu0 0.0
        %2921 = vmatprep.subr.mxu0 0.0
        %2922 = vmatpush1.xpose.msra.mxu0 0.0
        %2923 = vmatprep.subr.mxu0 0.0
        %2924 = vmatpush1.xpose.msra.mxu0 0.0
        %2925 = vmatprep.subr.mxu0 0.0
        %2926 = vmatpush1.xpose.msra.mxu0 %v2893
        %2927 = vmatprep.subr.mxu0 0.0
        %2928 = vmatpush2.xpose.msra.mxu0 0.0
        %2929 = vmatprep.subr.mxu0 0.0
        %2930 = vmatpush2.xpose.msra.mxu0 0.0
        %2931 = vmatprep.subr.mxu0 0.0
        %2932 = vmatpush2.xpose.msra.mxu0 0.0
        %2933 = vmatprep.subr.mxu0 0.0
        %2934 = vmatpush2.xpose.msra.mxu0 0.0
        %2935 = vmatprep.subr.mxu0 0.0
        %2936 = vmatpush2.xpose.msra.mxu0 0.0
        %2937 = vmatprep.subr.mxu0 0.0
        %2938 = vmatpush2.xpose.msra.mxu0 0.0
        %2939 = vmatprep.subr.mxu0 0.0
        %2940 = vmatpush2.xpose.msra.mxu0 0.0
        %2941 = vmatprep.subr.mxu0 0.0
        %2942 = vmatpush2.xpose.msra.mxu0 0.0
        %2943 = vmatprep.subr.mxu0 0.0
        %2944 = vmatpush2.xpose.msra.mxu0 0.0
        %2945 = vmatprep.subr.mxu0 0.0
        %2946 = vmatpush2.xpose.msra.mxu0 0.0
        %2947 = vmatprep.subr.mxu0 0.0
        %2948 = vmatpush2.xpose.msra.mxu0 0.0
        %2949 = vmatprep.subr.mxu0 0.0
        %2950 = vmatpush2.xpose.msra.mxu0 0.0
        %2951 = vmatprep.subr.mxu0 0.0
        %2952 = vmatpush2.xpose.msra.mxu0 0.0
        %2953 = vmatprep.subr.mxu0 0.0
        %2954 = vmatpush2.xpose.msra.mxu0 0.0
        %2955 = vmatprep.subr.mxu0 0.0
        %2956 = vmatpush2.xpose.msra.mxu0 0.0
        %2957 = vmatprep.subr.mxu0 0.0
        %2958 = vmatpush2.xpose.msra.mxu0 0.0
        %2959 = vmatprep.mubr.f32.mxu0 0.0
        %2960 = vmatmul.mubr.f32.gmra.mxu0 %v2890
        %v2961 = vpop.f32.mrf.mxu0
        %v2962 = vadd.f32 0.0, %v2961
        %v2963 = vpop.f32.mrf.mxu0
        %2964 = vdwg.mxu0
        %v2966 = vsel %vm1976, %v1549, 0
        %v2969 = vsel %vm1976, %v1752, 0
        %2971 = vmatprep.subr.mxu0 0.0
        %2972 = vmatpush1.xpose.msra.mxu0 0.0
        %2973 = vmatprep.subr.mxu0 0.0
        %2974 = vmatpush1.xpose.msra.mxu0 0.0
        %2975 = vmatprep.subr.mxu0 0.0
        %2976 = vmatpush1.xpose.msra.mxu0 0.0
        %2977 = vmatprep.subr.mxu0 0.0
        %2978 = vmatpush1.xpose.msra.mxu0 0.0
        %2979 = vmatprep.subr.mxu0 0.0
        %2980 = vmatpush1.xpose.msra.mxu0 0.0
        %2981 = vmatprep.subr.mxu0 0.0
        %2982 = vmatpush1.xpose.msra.mxu0 0.0
        %2983 = vmatprep.subr.mxu0 0.0
        %2984 = vmatpush1.xpose.msra.mxu0 0.0
        %2985 = vmatprep.subr.mxu0 0.0
        %2986 = vmatpush1.xpose.msra.mxu0 0.0
        %2987 = vmatprep.subr.mxu0 0.0
        %2988 = vmatpush1.xpose.msra.mxu0 0.0
        %2989 = vmatprep.subr.mxu0 0.0
        %2990 = vmatpush1.xpose.msra.mxu0 0.0
        %2991 = vmatprep.subr.mxu0 0.0
        %2992 = vmatpush1.xpose.msra.mxu0 0.0
        %2993 = vmatprep.subr.mxu0 0.0
        %2994 = vmatpush1.xpose.msra.mxu0 0.0
        %2995 = vmatprep.subr.mxu0 0.0
        %2996 = vmatpush1.xpose.msra.mxu0 0.0
        %2997 = vmatprep.subr.mxu0 0.0
        %2998 = vmatpush1.xpose.msra.mxu0 0.0
        %2999 = vmatprep.subr.mxu0 0.0
        %3000 = vmatpush1.xpose.msra.mxu0 0.0
        %3001 = vmatprep.subr.mxu0 0.0
        %3002 = vmatpush1.xpose.msra.mxu0 %v2969
        %3003 = vmatprep.subr.mxu0 0.0
        %3004 = vmatpush2.xpose.msra.mxu0 0.0
        %3005 = vmatprep.subr.mxu0 0.0
        %3006 = vmatpush2.xpose.msra.mxu0 0.0
        %3007 = vmatprep.subr.mxu0 0.0
        %3008 = vmatpush2.xpose.msra.mxu0 0.0
        %3009 = vmatprep.subr.mxu0 0.0
        %3010 = vmatpush2.xpose.msra.mxu0 0.0
        %3011 = vmatprep.subr.mxu0 0.0
        %3012 = vmatpush2.xpose.msra.mxu0 0.0
        %3013 = vmatprep.subr.mxu0 0.0
        %3014 = vmatpush2.xpose.msra.mxu0 0.0
        %3015 = vmatprep.subr.mxu0 0.0
        %3016 = vmatpush2.xpose.msra.mxu0 0.0
        %3017 = vmatprep.subr.mxu0 0.0
        %3018 = vmatpush2.xpose.msra.mxu0 0.0
        %3019 = vmatprep.subr.mxu0 0.0
        %3020 = vmatpush2.xpose.msra.mxu0 0.0
        %3021 = vmatprep.subr.mxu0 0.0
        %3022 = vmatpush2.xpose.msra.mxu0 0.0
        %3023 = vmatprep.subr.mxu0 0.0
        %3024 = vmatpush2.xpose.msra.mxu0 0.0
        %3025 = vmatprep.subr.mxu0 0.0
        %3026 = vmatpush2.xpose.msra.mxu0 0.0
        %3027 = vmatprep.subr.mxu0 0.0
        %3028 = vmatpush2.xpose.msra.mxu0 0.0
        %3029 = vmatprep.subr.mxu0 0.0
        %3030 = vmatpush2.xpose.msra.mxu0 0.0
        %3031 = vmatprep.subr.mxu0 0.0
        %3032 = vmatpush2.xpose.msra.mxu0 0.0
        %3033 = vmatprep.subr.mxu0 0.0
        %3034 = vmatpush2.xpose.msra.mxu0 0.0
        %3035 = vmatprep.mubr.f32.mxu0 0.0
        %3036 = vmatmul.mubr.f32.gmra.mxu0 %v2966
        %v3037 = vpop.f32.mrf.mxu0
        %v3038 = vadd.f32 0.0, %v3037
        %v3039 = vpop.f32.mrf.mxu0
        %3040 = vdwg.mxu0
        %v3042 = vsel %vm1976, %v1550, 0
        %v3045 = vsel %vm1976, %v1762, 0
        %3047 = vmatprep.subr.mxu0 0.0
        %3048 = vmatpush1.xpose.msra.mxu0 0.0
        %3049 = vmatprep.subr.mxu0 0.0
        %3050 = vmatpush1.xpose.msra.mxu0 0.0
        %3051 = vmatprep.subr.mxu0 0.0
        %3052 = vmatpush1.xpose.msra.mxu0 0.0
        %3053 = vmatprep.subr.mxu0 0.0
        %3054 = vmatpush1.xpose.msra.mxu0 0.0
        %3055 = vmatprep.subr.mxu0 0.0
        %3056 = vmatpush1.xpose.msra.mxu0 0.0
        %3057 = vmatprep.subr.mxu0 0.0
        %3058 = vmatpush1.xpose.msra.mxu0 0.0
        %3059 = vmatprep.subr.mxu0 0.0
        %3060 = vmatpush1.xpose.msra.mxu0 0.0
        %3061 = vmatprep.subr.mxu0 0.0
        %3062 = vmatpush1.xpose.msra.mxu0 0.0
        %3063 = vmatprep.subr.mxu0 0.0
        %3064 = vmatpush1.xpose.msra.mxu0 0.0
        %3065 = vmatprep.subr.mxu0 0.0
        %3066 = vmatpush1.xpose.msra.mxu0 0.0
        %3067 = vmatprep.subr.mxu0 0.0
        %3068 = vmatpush1.xpose.msra.mxu0 0.0
        %3069 = vmatprep.subr.mxu0 0.0
        %3070 = vmatpush1.xpose.msra.mxu0 0.0
        %3071 = vmatprep.subr.mxu0 0.0
        %3072 = vmatpush1.xpose.msra.mxu0 0.0
        %3073 = vmatprep.subr.mxu0 0.0
        %3074 = vmatpush1.xpose.msra.mxu0 0.0
        %3075 = vmatprep.subr.mxu0 0.0
        %3076 = vmatpush1.xpose.msra.mxu0 0.0
        %3077 = vmatprep.subr.mxu0 0.0
        %3078 = vmatpush1.xpose.msra.mxu0 %v3045
        %3079 = vmatprep.subr.mxu0 0.0
        %3080 = vmatpush2.xpose.msra.mxu0 0.0
        %3081 = vmatprep.subr.mxu0 0.0
        %3082 = vmatpush2.xpose.msra.mxu0 0.0
        %3083 = vmatprep.subr.mxu0 0.0
        %3084 = vmatpush2.xpose.msra.mxu0 0.0
        %3085 = vmatprep.subr.mxu0 0.0
        %3086 = vmatpush2.xpose.msra.mxu0 0.0
        %3087 = vmatprep.subr.mxu0 0.0
        %3088 = vmatpush2.xpose.msra.mxu0 0.0
        %3089 = vmatprep.subr.mxu0 0.0
        %3090 = vmatpush2.xpose.msra.mxu0 0.0
        %3091 = vmatprep.subr.mxu0 0.0
        %3092 = vmatpush2.xpose.msra.mxu0 0.0
        %3093 = vmatprep.subr.mxu0 0.0
        %3094 = vmatpush2.xpose.msra.mxu0 0.0
        %3095 = vmatprep.subr.mxu0 0.0
        %3096 = vmatpush2.xpose.msra.mxu0 0.0
        %3097 = vmatprep.subr.mxu0 0.0
        %3098 = vmatpush2.xpose.msra.mxu0 0.0
        %3099 = vmatprep.subr.mxu0 0.0
        %3100 = vmatpush2.xpose.msra.mxu0 0.0
        %3101 = vmatprep.subr.mxu0 0.0
        %3102 = vmatpush2.xpose.msra.mxu0 0.0
        %3103 = vmatprep.subr.mxu0 0.0
        %3104 = vmatpush2.xpose.msra.mxu0 0.0
        %3105 = vmatprep.subr.mxu0 0.0
        %3106 = vmatpush2.xpose.msra.mxu0 0.0
        %3107 = vmatprep.subr.mxu0 0.0
        %3108 = vmatpush2.xpose.msra.mxu0 0.0
        %3109 = vmatprep.subr.mxu0 0.0
        %3110 = vmatpush2.xpose.msra.mxu0 0.0
        %3111 = vmatprep.mubr.f32.mxu0 0.0
        %3112 = vmatmul.mubr.f32.gmra.mxu0 %v3042
        %v3113 = vpop.f32.mrf.mxu0
        %v3114 = vadd.f32 0.0, %v3113
        %v3115 = vpop.f32.mrf.mxu0
        %3116 = vdwg.mxu0
        %v3118 = vsel %vm1976, %v1551, 0
        %v3121 = vsel %vm1976, %v1763, 0
        %3123 = vmatprep.subr.mxu0 0.0
        %3124 = vmatpush1.xpose.msra.mxu0 0.0
        %3125 = vmatprep.subr.mxu0 0.0
        %3126 = vmatpush1.xpose.msra.mxu0 0.0
        %3127 = vmatprep.subr.mxu0 0.0
        %3128 = vmatpush1.xpose.msra.mxu0 0.0
        %3129 = vmatprep.subr.mxu0 0.0
        %3130 = vmatpush1.xpose.msra.mxu0 0.0
        %3131 = vmatprep.subr.mxu0 0.0
        %3132 = vmatpush1.xpose.msra.mxu0 0.0
        %3133 = vmatprep.subr.mxu0 0.0
        %3134 = vmatpush1.xpose.msra.mxu0 0.0
        %3135 = vmatprep.subr.mxu0 0.0
        %3136 = vmatpush1.xpose.msra.mxu0 0.0
        %3137 = vmatprep.subr.mxu0 0.0
        %3138 = vmatpush1.xpose.msra.mxu0 0.0
        %3139 = vmatprep.subr.mxu0 0.0
        %3140 = vmatpush1.xpose.msra.mxu0 0.0
        %3141 = vmatprep.subr.mxu0 0.0
        %3142 = vmatpush1.xpose.msra.mxu0 0.0
        %3143 = vmatprep.subr.mxu0 0.0
        %3144 = vmatpush1.xpose.msra.mxu0 0.0
        %3145 = vmatprep.subr.mxu0 0.0
        %3146 = vmatpush1.xpose.msra.mxu0 0.0
        %3147 = vmatprep.subr.mxu0 0.0
        %3148 = vmatpush1.xpose.msra.mxu0 0.0
        %3149 = vmatprep.subr.mxu0 0.0
        %3150 = vmatpush1.xpose.msra.mxu0 0.0
        %3151 = vmatprep.subr.mxu0 0.0
        %3152 = vmatpush1.xpose.msra.mxu0 0.0
        %3153 = vmatprep.subr.mxu0 0.0
        %3154 = vmatpush1.xpose.msra.mxu0 %v3121
        %3155 = vmatprep.subr.mxu0 0.0
        %3156 = vmatpush2.xpose.msra.mxu0 0.0
        %3157 = vmatprep.subr.mxu0 0.0
        %3158 = vmatpush2.xpose.msra.mxu0 0.0
        %3159 = vmatprep.subr.mxu0 0.0
        %3160 = vmatpush2.xpose.msra.mxu0 0.0
        %3161 = vmatprep.subr.mxu0 0.0
        %3162 = vmatpush2.xpose.msra.mxu0 0.0
        %3163 = vmatprep.subr.mxu0 0.0
        %3164 = vmatpush2.xpose.msra.mxu0 0.0
        %3165 = vmatprep.subr.mxu0 0.0
        %3166 = vmatpush2.xpose.msra.mxu0 0.0
        %3167 = vmatprep.subr.mxu0 0.0
        %3168 = vmatpush2.xpose.msra.mxu0 0.0
        %3169 = vmatprep.subr.mxu0 0.0
        %3170 = vmatpush2.xpose.msra.mxu0 0.0
        %3171 = vmatprep.subr.mxu0 0.0
        %3172 = vmatpush2.xpose.msra.mxu0 0.0
        %3173 = vmatprep.subr.mxu0 0.0
        %3174 = vmatpush2.xpose.msra.mxu0 0.0
        %3175 = vmatprep.subr.mxu0 0.0
        %3176 = vmatpush2.xpose.msra.mxu0 0.0
        %3177 = vmatprep.subr.mxu0 0.0
        %3178 = vmatpush2.xpose.msra.mxu0 0.0
        %3179 = vmatprep.subr.mxu0 0.0
        %3180 = vmatpush2.xpose.msra.mxu0 0.0
        %3181 = vmatprep.subr.mxu0 0.0
        %3182 = vmatpush2.xpose.msra.mxu0 0.0
        %3183 = vmatprep.subr.mxu0 0.0
        %3184 = vmatpush2.xpose.msra.mxu0 0.0
        %3185 = vmatprep.subr.mxu0 0.0
        %3186 = vmatpush2.xpose.msra.mxu0 0.0
        %3187 = vmatprep.mubr.f32.mxu0 0.0
        %3188 = vmatmul.mubr.f32.gmra.mxu0 %v3118
        %v3189 = vpop.f32.mrf.mxu0
        %v3190 = vadd.f32 0.0, %v3189
        %v3191 = vpop.f32.mrf.mxu0
        %3192 = vdwg.mxu0
        %vm3193 = vcmask 9216
        %v3194 = vsel %vm3193, %v2050, -inf
        %3195 = vmax.xlane.f32.xlu0 %v3194
        %v3196 = vpop.xlane.xlu0 %3195
        %v3197 = vsel %vm3193, %v2126, -inf
        %3198 = vmax.xlane.f32.xlu0 %v3197
        %v3199 = vpop.xlane.xlu0 %3198
        %v3200 = vsel %vm3193, %v2202, -inf
        %3201 = vmax.xlane.f32.xlu0 %v3200
        %v3202 = vpop.xlane.xlu0 %3201
        %v3203 = vsel %vm3193, %v2278, -inf
        %3204 = vmax.xlane.f32.xlu0 %v3203
        %v3205 = vpop.xlane.xlu0 %3204
        %v3206 = vsel %vm3193, %v2354, -inf
        %3207 = vmax.xlane.f32.xlu0 %v3206
        %v3208 = vpop.xlane.xlu0 %3207
        %v3209 = vsel %vm3193, %v2430, -inf
        %3210 = vmax.xlane.f32.xlu0 %v3209
        %v3211 = vpop.xlane.xlu0 %3210
        %v3212 = vsel %vm3193, %v2506, -inf
        %3213 = vmax.xlane.f32.xlu0 %v3212
        %v3214 = vpop.xlane.xlu0 %3213
        %v3215 = vsel %vm3193, %v2582, -inf
        %3216 = vmax.xlane.f32.xlu0 %v3215
        %v3217 = vpop.xlane.xlu0 %3216
        %v3218 = vsel %vm3193, %v2658, -inf
        %3219 = vmax.xlane.f32.xlu0 %v3218
        %v3220 = vpop.xlane.xlu0 %3219
        %v3221 = vsel %vm3193, %v2734, -inf
        %3222 = vmax.xlane.f32.xlu0 %v3221
        %v3223 = vpop.xlane.xlu0 %3222
        %v3224 = vsel %vm3193, %v2810, -inf
        %3225 = vmax.xlane.f32.xlu0 %v3224
        %v3226 = vpop.xlane.xlu0 %3225
        %v3227 = vsel %vm3193, %v2886, -inf
        %3228 = vmax.xlane.f32.xlu0 %v3227
        %v3229 = vpop.xlane.xlu0 %3228
        %v3230 = vsel %vm3193, %v2962, -inf
        %3231 = vmax.xlane.f32.xlu0 %v3230
        %v3232 = vpop.xlane.xlu0 %3231
        %v3233 = vsel %vm3193, %v3038, -inf
        %3234 = vmax.xlane.f32.xlu0 %v3233
        %v3235 = vpop.xlane.xlu0 %3234
        %v3236 = vsel %vm3193, %v3114, -inf
        %3237 = vmax.xlane.f32.xlu0 %v3236
        %v3238 = vpop.xlane.xlu0 %3237
        %v3239 = vsel %vm3193, %v3190, -inf
        %3240 = vmax.xlane.f32.xlu0 %v3239
        %v3241 = vpop.xlane.xlu0 %3240
        %v3242 = vsub.f32 %v2050, %v3196
        %v3243 = vsub.f32 %v2126, %v3199
        %v3244 = vsub.f32 %v2202, %v3202
        %v3245 = vsub.f32 %v2278, %v3205
        %v3246 = vsub.f32 %v2354, %v3208
        %v3247 = vsub.f32 %v2430, %v3211
        %v3248 = vsub.f32 %v2506, %v3214
        %v3249 = vsub.f32 %v2582, %v3217
        %v3250 = vsub.f32 %v2658, %v3220
        %v3251 = vsub.f32 %v2734, %v3223
        %v3252 = vsub.f32 %v2810, %v3226
        %v3253 = vsub.f32 %v2886, %v3229
        %v3254 = vsub.f32 %v2962, %v3232
        %v3255 = vsub.f32 %v3038, %v3235
        %v3256 = vsub.f32 %v3114, %v3238
        %v3257 = vsub.f32 %v3190, %v3241
        %v3258 = vmul.f32 %v3242, 1.442695
        %v3259 = vpow.pop %v3258
        %v3260 = vmul.f32 %v3243, 1.442695
        %v3261 = vpow.pop %v3260
        %v3262 = vmul.f32 %v3244, 1.442695
        %v3263 = vpow.pop %v3262
        %v3264 = vmul.f32 %v3245, 1.442695
        %v3265 = vpow.pop %v3264
        %v3266 = vmul.f32 %v3246, 1.442695
        %v3267 = vpow.pop %v3266
        %v3268 = vmul.f32 %v3247, 1.442695
        %v3269 = vpow.pop %v3268
        %v3270 = vmul.f32 %v3248, 1.442695
        %v3271 = vpow.pop %v3270
        %v3272 = vmul.f32 %v3249, 1.442695
        %v3273 = vpow.pop %v3272
        %v3274 = vmul.f32 %v3250, 1.442695
        %v3275 = vpow.pop %v3274
        %v3276 = vmul.f32 %v3251, 1.442695
        %v3277 = vpow.pop %v3276
        %v3278 = vmul.f32 %v3252, 1.442695
        %v3279 = vpow.pop %v3278
        %v3280 = vmul.f32 %v3253, 1.442695
        %v3281 = vpow.pop %v3280
        %v3282 = vmul.f32 %v3254, 1.442695
        %v3283 = vpow.pop %v3282
        %v3284 = vmul.f32 %v3255, 1.442695
        %v3285 = vpow.pop %v3284
        %v3286 = vmul.f32 %v3256, 1.442695
        %v3287 = vpow.pop %v3286
        %v3288 = vmul.f32 %v3257, 1.442695
        %v3289 = vpow.pop %v3288
        %v3290 = vsel %vm3193, %v3259, 0.0
        %3291 = vadd.xlane.f32.xlu0 %v3290
        %v3292 = vpop.xlane.xlu0 %3291
        %v3293 = vsel %vm3193, %v3261, 0.0
        %3294 = vadd.xlane.f32.xlu0 %v3293
        %v3295 = vpop.xlane.xlu0 %3294
        %v3296 = vsel %vm3193, %v3263, 0.0
        %3297 = vadd.xlane.f32.xlu0 %v3296
        %v3298 = vpop.xlane.xlu0 %3297
        %v3299 = vsel %vm3193, %v3265, 0.0
        %3300 = vadd.xlane.f32.xlu0 %v3299
        %v3301 = vpop.xlane.xlu0 %3300
        %v3302 = vsel %vm3193, %v3267, 0.0
        %3303 = vadd.xlane.f32.xlu0 %v3302
        %v3304 = vpop.xlane.xlu0 %3303
        %v3305 = vsel %vm3193, %v3269, 0.0
        %3306 = vadd.xlane.f32.xlu0 %v3305
        %v3307 = vpop.xlane.xlu0 %3306
        %v3308 = vsel %vm3193, %v3271, 0.0
        %3309 = vadd.xlane.f32.xlu0 %v3308
        %v3310 = vpop.xlane.xlu0 %3309
        %v3311 = vsel %vm3193, %v3273, 0.0
        %3312 = vadd.xlane.f32.xlu0 %v3311
        %v3313 = vpop.xlane.xlu0 %3312
        %v3314 = vsel %vm3193, %v3275, 0.0
        %3315 = vadd.xlane.f32.xlu0 %v3314
        %v3316 = vpop.xlane.xlu0 %3315
        %v3317 = vsel %vm3193, %v3277, 0.0
        %3318 = vadd.xlane.f32.xlu0 %v3317
        %v3319 = vpop.xlane.xlu0 %3318
        %v3320 = vsel %vm3193, %v3279, 0.0
        %3321 = vadd.xlane.f32.xlu0 %v3320
        %v3322 = vpop.xlane.xlu0 %3321
        %v3323 = vsel %vm3193, %v3281, 0.0
        %3324 = vadd.xlane.f32.xlu0 %v3323
        %v3325 = vpop.xlane.xlu0 %3324
        %v3326 = vsel %vm3193, %v3283, 0.0
        %3327 = vadd.xlane.f32.xlu0 %v3326
        %v3328 = vpop.xlane.xlu0 %3327
        %v3329 = vsel %vm3193, %v3285, 0.0
        %3330 = vadd.xlane.f32.xlu0 %v3329
        %v3331 = vpop.xlane.xlu0 %3330
        %v3332 = vsel %vm3193, %v3287, 0.0
        %3333 = vadd.xlane.f32.xlu0 %v3332
        %v3334 = vpop.xlane.xlu0 %3333
        %v3335 = vsel %vm3193, %v3289, 0.0
        %3336 = vadd.xlane.f32.xlu0 %v3335
        %v3337 = vpop.xlane.xlu0 %3336
        %v3338 = vrcp.pop %v3292
        %v3339 = vrcp.pop %v3295
        %v3340 = vrcp.pop %v3298
        %v3341 = vrcp.pop %v3301
        %v3342 = vrcp.pop %v3304
        %v3343 = vrcp.pop %v3307
        %v3344 = vrcp.pop %v3310
        %v3345 = vrcp.pop %v3313
        %v3346 = vrcp.pop %v3316
        %v3347 = vrcp.pop %v3319
        %v3348 = vrcp.pop %v3322
        %v3349 = vrcp.pop %v3325
        %v3350 = vrcp.pop %v3328
        %v3351 = vrcp.pop %v3331
        %v3352 = vrcp.pop %v3334
        %v3353 = vrcp.pop %v3337
        %v3354 = vmul.f32 %v3259, %v3338
        %v3355 = vmul.f32 %v3261, %v3339
        %v3356 = vmul.f32 %v3263, %v3340
        %v3357 = vmul.f32 %v3265, %v3341
        %v3358 = vmul.f32 %v3267, %v3342
        %v3359 = vmul.f32 %v3269, %v3343
        %v3360 = vmul.f32 %v3271, %v3344
        %v3361 = vmul.f32 %v3273, %v3345
        %v3362 = vmul.f32 %v3275, %v3346
        %v3363 = vmul.f32 %v3277, %v3347
        %v3364 = vmul.f32 %v3279, %v3348
        %v3365 = vmul.f32 %v3281, %v3349
        %v3366 = vmul.f32 %v3283, %v3350
        %v3367 = vmul.f32 %v3285, %v3351
        %v3368 = vmul.f32 %v3287, %v3352
        %v3369 = vmul.f32 %v3289, %v3353
        %vm3370 = vcmask 15360
        %v3372 = vsel %vm3370, %v3354, 0
        %vm3374 = vcmask 1041408
        %v3376 = vsel %vm3374, %v1903, 0
        %3378 = vmatprep.subr.mxu0 0.0
        %3379 = vmatpush1.msra.mxu0 0.0
        %3380 = vmatprep.subr.mxu0 0.0
        %3381 = vmatpush1.msra.mxu0 0.0
        %3382 = vmatprep.subr.mxu0 0.0
        %3383 = vmatpush1.msra.mxu0 0.0
        %3384 = vmatprep.subr.mxu0 0.0
        %3385 = vmatpush1.msra.mxu0 0.0
        %3386 = vmatprep.subr.mxu0 0.0
        %3387 = vmatpush1.msra.mxu0 0.0
        %3388 = vmatprep.subr.mxu0 0.0
        %3389 = vmatpush1.msra.mxu0 0.0
        %3390 = vmatprep.subr.mxu0 0.0
        %3391 = vmatpush1.msra.mxu0 0.0
        %3392 = vmatprep.subr.mxu0 0.0
        %3393 = vmatpush1.msra.mxu0 0.0
        %3394 = vmatprep.subr.mxu0 0.0
        %3395 = vmatpush1.msra.mxu0 0.0
        %3396 = vmatprep.subr.mxu0 0.0
        %3397 = vmatpush1.msra.mxu0 0.0
        %3398 = vmatprep.subr.mxu0 0.0
        %3399 = vmatpush1.msra.mxu0 0.0
        %3400 = vmatprep.subr.mxu0 0.0
        %3401 = vmatpush1.msra.mxu0 0.0
        %3402 = vmatprep.subr.mxu0 0.0
        %3403 = vmatpush1.msra.mxu0 0.0
        %3404 = vmatprep.subr.mxu0 0.0
        %3405 = vmatpush1.msra.mxu0 0.0
        %3406 = vmatprep.subr.mxu0 0.0
        %3407 = vmatpush1.msra.mxu0 0.0
        %3408 = vmatprep.subr.mxu0 0.0
        %3409 = vmatpush1.msra.mxu0 %v3376
        %3410 = vmatprep.subr.mxu0 0.0
        %3411 = vmatpush2.msra.mxu0 0.0
        %3412 = vmatprep.subr.mxu0 0.0
        %3413 = vmatpush2.msra.mxu0 0.0
        %3414 = vmatprep.subr.mxu0 0.0
        %3415 = vmatpush2.msra.mxu0 0.0
        %3416 = vmatprep.subr.mxu0 0.0
        %3417 = vmatpush2.msra.mxu0 0.0
        %3418 = vmatprep.subr.mxu0 0.0
        %3419 = vmatpush2.msra.mxu0 0.0
        %3420 = vmatprep.subr.mxu0 0.0
        %3421 = vmatpush2.msra.mxu0 0.0
        %3422 = vmatprep.subr.mxu0 0.0
        %3423 = vmatpush2.msra.mxu0 0.0
        %3424 = vmatprep.subr.mxu0 0.0
        %3425 = vmatpush2.msra.mxu0 0.0
        %3426 = vmatprep.subr.mxu0 0.0
        %3427 = vmatpush2.msra.mxu0 0.0
        %3428 = vmatprep.subr.mxu0 0.0
        %3429 = vmatpush2.msra.mxu0 0.0
        %3430 = vmatprep.subr.mxu0 0.0
        %3431 = vmatpush2.msra.mxu0 0.0
        %3432 = vmatprep.subr.mxu0 0.0
        %3433 = vmatpush2.msra.mxu0 0.0
        %3434 = vmatprep.subr.mxu0 0.0
        %3435 = vmatpush2.msra.mxu0 0.0
        %3436 = vmatprep.subr.mxu0 0.0
        %3437 = vmatpush2.msra.mxu0 0.0
        %3438 = vmatprep.subr.mxu0 0.0
        %3439 = vmatpush2.msra.mxu0 0.0
        %3440 = vmatprep.subr.mxu0 0.0
        %3441 = vmatpush2.msra.mxu0 0.0
        %3442 = vmatprep.mubr.f32.mxu0 0.0
        %3443 = vmatmul.mubr.f32.gmra.mxu0 %v3372
        %v3444 = vpop.f32.mrf.mxu0
        %v3445 = vadd.f32 0.0, %v3444
        %v3446 = vpop.f32.mrf.mxu0
        %3447 = vdwg.mxu0
        %v3449 = vsel %vm3370, %v3355, 0
        %v3452 = vsel %vm3374, %v1904, 0
        %3454 = vmatprep.subr.mxu0 0.0
        %3455 = vmatpush1.msra.mxu0 0.0
        %3456 = vmatprep.subr.mxu0 0.0
        %3457 = vmatpush1.msra.mxu0 0.0
        %3458 = vmatprep.subr.mxu0 0.0
        %3459 = vmatpush1.msra.mxu0 0.0
        %3460 = vmatprep.subr.mxu0 0.0
        %3461 = vmatpush1.msra.mxu0 0.0
        %3462 = vmatprep.subr.mxu0 0.0
        %3463 = vmatpush1.msra.mxu0 0.0
        %3464 = vmatprep.subr.mxu0 0.0
        %3465 = vmatpush1.msra.mxu0 0.0
        %3466 = vmatprep.subr.mxu0 0.0
        %3467 = vmatpush1.msra.mxu0 0.0
        %3468 = vmatprep.subr.mxu0 0.0
        %3469 = vmatpush1.msra.mxu0 0.0
        %3470 = vmatprep.subr.mxu0 0.0
        %3471 = vmatpush1.msra.mxu0 0.0
        %3472 = vmatprep.subr.mxu0 0.0
        %3473 = vmatpush1.msra.mxu0 0.0
        %3474 = vmatprep.subr.mxu0 0.0
        %3475 = vmatpush1.msra.mxu0 0.0
        %3476 = vmatprep.subr.mxu0 0.0
        %3477 = vmatpush1.msra.mxu0 0.0
        %3478 = vmatprep.subr.mxu0 0.0
        %3479 = vmatpush1.msra.mxu0 0.0
        %3480 = vmatprep.subr.mxu0 0.0
        %3481 = vmatpush1.msra.mxu0 0.0
        %3482 = vmatprep.subr.mxu0 0.0
        %3483 = vmatpush1.msra.mxu0 0.0
        %3484 = vmatprep.subr.mxu0 0.0
        %3485 = vmatpush1.msra.mxu0 %v3452
        %3486 = vmatprep.subr.mxu0 0.0
        %3487 = vmatpush2.msra.mxu0 0.0
        %3488 = vmatprep.subr.mxu0 0.0
        %3489 = vmatpush2.msra.mxu0 0.0
        %3490 = vmatprep.subr.mxu0 0.0
        %3491 = vmatpush2.msra.mxu0 0.0
        %3492 = vmatprep.subr.mxu0 0.0
        %3493 = vmatpush2.msra.mxu0 0.0
        %3494 = vmatprep.subr.mxu0 0.0
        %3495 = vmatpush2.msra.mxu0 0.0
        %3496 = vmatprep.subr.mxu0 0.0
        %3497 = vmatpush2.msra.mxu0 0.0
        %3498 = vmatprep.subr.mxu0 0.0
        %3499 = vmatpush2.msra.mxu0 0.0
        %3500 = vmatprep.subr.mxu0 0.0
        %3501 = vmatpush2.msra.mxu0 0.0
        %3502 = vmatprep.subr.mxu0 0.0
        %3503 = vmatpush2.msra.mxu0 0.0
        %3504 = vmatprep.subr.mxu0 0.0
        %3505 = vmatpush2.msra.mxu0 0.0
        %3506 = vmatprep.subr.mxu0 0.0
        %3507 = vmatpush2.msra.mxu0 0.0
        %3508 = vmatprep.subr.mxu0 0.0
        %3509 = vmatpush2.msra.mxu0 0.0
        %3510 = vmatprep.subr.mxu0 0.0
        %3511 = vmatpush2.msra.mxu0 0.0
        %3512 = vmatprep.subr.mxu0 0.0
        %3513 = vmatpush2.msra.mxu0 0.0
        %3514 = vmatprep.subr.mxu0 0.0
        %3515 = vmatpush2.msra.mxu0 0.0
        %3516 = vmatprep.subr.mxu0 0.0
        %3517 = vmatpush2.msra.mxu0 0.0
        %3518 = vmatprep.mubr.f32.mxu0 0.0
        %3519 = vmatmul.mubr.f32.gmra.mxu0 %v3449
        %v3520 = vpop.f32.mrf.mxu0
        %v3521 = vadd.f32 0.0, %v3520
        %v3522 = vpop.f32.mrf.mxu0
        %3523 = vdwg.mxu0
        %v3525 = vsel %vm3370, %v3356, 0
        %v3528 = vsel %vm3374, %v1914, 0
        %3530 = vmatprep.subr.mxu0 0.0
        %3531 = vmatpush1.msra.mxu0 0.0
        %3532 = vmatprep.subr.mxu0 0.0
        %3533 = vmatpush1.msra.mxu0 0.0
        %3534 = vmatprep.subr.mxu0 0.0
        %3535 = vmatpush1.msra.mxu0 0.0
        %3536 = vmatprep.subr.mxu0 0.0
        %3537 = vmatpush1.msra.mxu0 0.0
        %3538 = vmatprep.subr.mxu0 0.0
        %3539 = vmatpush1.msra.mxu0 0.0
        %3540 = vmatprep.subr.mxu0 0.0
        %3541 = vmatpush1.msra.mxu0 0.0
        %3542 = vmatprep.subr.mxu0 0.0
        %3543 = vmatpush1.msra.mxu0 0.0
        %3544 = vmatprep.subr.mxu0 0.0
        %3545 = vmatpush1.msra.mxu0 0.0
        %3546 = vmatprep.subr.mxu0 0.0
        %3547 = vmatpush1.msra.mxu0 0.0
        %3548 = vmatprep.subr.mxu0 0.0
        %3549 = vmatpush1.msra.mxu0 0.0
        %3550 = vmatprep.subr.mxu0 0.0
        %3551 = vmatpush1.msra.mxu0 0.0
        %3552 = vmatprep.subr.mxu0 0.0
        %3553 = vmatpush1.msra.mxu0 0.0
        %3554 = vmatprep.subr.mxu0 0.0
        %3555 = vmatpush1.msra.mxu0 0.0
        %3556 = vmatprep.subr.mxu0 0.0
        %3557 = vmatpush1.msra.mxu0 0.0
        %3558 = vmatprep.subr.mxu0 0.0
        %3559 = vmatpush1.msra.mxu0 0.0
        %3560 = vmatprep.subr.mxu0 0.0
        %3561 = vmatpush1.msra.mxu0 %v3528
        %3562 = vmatprep.subr.mxu0 0.0
        %3563 = vmatpush2.msra.mxu0 0.0
        %3564 = vmatprep.subr.mxu0 0.0
        %3565 = vmatpush2.msra.mxu0 0.0
        %3566 = vmatprep.subr.mxu0 0.0
        %3567 = vmatpush2.msra.mxu0 0.0
        %3568 = vmatprep.subr.mxu0 0.0
        %3569 = vmatpush2.msra.mxu0 0.0
        %3570 = vmatprep.subr.mxu0 0.0
        %3571 = vmatpush2.msra.mxu0 0.0
        %3572 = vmatprep.subr.mxu0 0.0
        %3573 = vmatpush2.msra.mxu0 0.0
        %3574 = vmatprep.subr.mxu0 0.0
        %3575 = vmatpush2.msra.mxu0 0.0
        %3576 = vmatprep.subr.mxu0 0.0
        %3577 = vmatpush2.msra.mxu0 0.0
        %3578 = vmatprep.subr.mxu0 0.0
        %3579 = vmatpush2.msra.mxu0 0.0
        %3580 = vmatprep.subr.mxu0 0.0
        %3581 = vmatpush2.msra.mxu0 0.0
        %3582 = vmatprep.subr.mxu0 0.0
        %3583 = vmatpush2.msra.mxu0 0.0
        %3584 = vmatprep.subr.mxu0 0.0
        %3585 = vmatpush2.msra.mxu0 0.0
        %3586 = vmatprep.subr.mxu0 0.0
        %3587 = vmatpush2.msra.mxu0 0.0
        %3588 = vmatprep.subr.mxu0 0.0
        %3589 = vmatpush2.msra.mxu0 0.0
        %3590 = vmatprep.subr.mxu0 0.0
        %3591 = vmatpush2.msra.mxu0 0.0
        %3592 = vmatprep.subr.mxu0 0.0
        %3593 = vmatpush2.msra.mxu0 0.0
        %3594 = vmatprep.mubr.f32.mxu0 0.0
        %3595 = vmatmul.mubr.f32.gmra.mxu0 %v3525
        %v3596 = vpop.f32.mrf.mxu0
        %v3597 = vadd.f32 0.0, %v3596
        %v3598 = vpop.f32.mrf.mxu0
        %3599 = vdwg.mxu0
        %v3601 = vsel %vm3370, %v3357, 0
        %v3604 = vsel %vm3374, %v1915, 0
        %3606 = vmatprep.subr.mxu0 0.0
        %3607 = vmatpush1.msra.mxu0 0.0
        %3608 = vmatprep.subr.mxu0 0.0
        %3609 = vmatpush1.msra.mxu0 0.0
        %3610 = vmatprep.subr.mxu0 0.0
        %3611 = vmatpush1.msra.mxu0 0.0
        %3612 = vmatprep.subr.mxu0 0.0
        %3613 = vmatpush1.msra.mxu0 0.0
        %3614 = vmatprep.subr.mxu0 0.0
        %3615 = vmatpush1.msra.mxu0 0.0
        %3616 = vmatprep.subr.mxu0 0.0
        %3617 = vmatpush1.msra.mxu0 0.0
        %3618 = vmatprep.subr.mxu0 0.0
        %3619 = vmatpush1.msra.mxu0 0.0
        %3620 = vmatprep.subr.mxu0 0.0
        %3621 = vmatpush1.msra.mxu0 0.0
        %3622 = vmatprep.subr.mxu0 0.0
        %3623 = vmatpush1.msra.mxu0 0.0
        %3624 = vmatprep.subr.mxu0 0.0
        %3625 = vmatpush1.msra.mxu0 0.0
        %3626 = vmatprep.subr.mxu0 0.0
        %3627 = vmatpush1.msra.mxu0 0.0
        %3628 = vmatprep.subr.mxu0 0.0
        %3629 = vmatpush1.msra.mxu0 0.0
        %3630 = vmatprep.subr.mxu0 0.0
        %3631 = vmatpush1.msra.mxu0 0.0
        %3632 = vmatprep.subr.mxu0 0.0
        %3633 = vmatpush1.msra.mxu0 0.0
        %3634 = vmatprep.subr.mxu0 0.0
        %3635 = vmatpush1.msra.mxu0 0.0
        %3636 = vmatprep.subr.mxu0 0.0
        %3637 = vmatpush1.msra.mxu0 %v3604
        %3638 = vmatprep.subr.mxu0 0.0
        %3639 = vmatpush2.msra.mxu0 0.0
        %3640 = vmatprep.subr.mxu0 0.0
        %3641 = vmatpush2.msra.mxu0 0.0
        %3642 = vmatprep.subr.mxu0 0.0
        %3643 = vmatpush2.msra.mxu0 0.0
        %3644 = vmatprep.subr.mxu0 0.0
        %3645 = vmatpush2.msra.mxu0 0.0
        %3646 = vmatprep.subr.mxu0 0.0
        %3647 = vmatpush2.msra.mxu0 0.0
        %3648 = vmatprep.subr.mxu0 0.0
        %3649 = vmatpush2.msra.mxu0 0.0
        %3650 = vmatprep.subr.mxu0 0.0
        %3651 = vmatpush2.msra.mxu0 0.0
        %3652 = vmatprep.subr.mxu0 0.0
        %3653 = vmatpush2.msra.mxu0 0.0
        %3654 = vmatprep.subr.mxu0 0.0
        %3655 = vmatpush2.msra.mxu0 0.0
        %3656 = vmatprep.subr.mxu0 0.0
        %3657 = vmatpush2.msra.mxu0 0.0
        %3658 = vmatprep.subr.mxu0 0.0
        %3659 = vmatpush2.msra.mxu0 0.0
        %3660 = vmatprep.subr.mxu0 0.0
        %3661 = vmatpush2.msra.mxu0 0.0
        %3662 = vmatprep.subr.mxu0 0.0
        %3663 = vmatpush2.msra.mxu0 0.0
        %3664 = vmatprep.subr.mxu0 0.0
        %3665 = vmatpush2.msra.mxu0 0.0
        %3666 = vmatprep.subr.mxu0 0.0
        %3667 = vmatpush2.msra.mxu0 0.0
        %3668 = vmatprep.subr.mxu0 0.0
        %3669 = vmatpush2.msra.mxu0 0.0
        %3670 = vmatprep.mubr.f32.mxu0 0.0
        %3671 = vmatmul.mubr.f32.gmra.mxu0 %v3601
        %v3672 = vpop.f32.mrf.mxu0
        %v3673 = vadd.f32 0.0, %v3672
        %v3674 = vpop.f32.mrf.mxu0
        %3675 = vdwg.mxu0
        %v3677 = vsel %vm3370, %v3358, 0
        %v3680 = vsel %vm3374, %v1923, 0
        %3682 = vmatprep.subr.mxu0 0.0
        %3683 = vmatpush1.msra.mxu0 0.0
        %3684 = vmatprep.subr.mxu0 0.0
        %3685 = vmatpush1.msra.mxu0 0.0
        %3686 = vmatprep.subr.mxu0 0.0
        %3687 = vmatpush1.msra.mxu0 0.0
        %3688 = vmatprep.subr.mxu0 0.0
        %3689 = vmatpush1.msra.mxu0 0.0
        %3690 = vmatprep.subr.mxu0 0.0
        %3691 = vmatpush1.msra.mxu0 0.0
        %3692 = vmatprep.subr.mxu0 0.0
        %3693 = vmatpush1.msra.mxu0 0.0
        %3694 = vmatprep.subr.mxu0 0.0
        %3695 = vmatpush1.msra.mxu0 0.0
        %3696 = vmatprep.subr.mxu0 0.0
        %3697 = vmatpush1.msra.mxu0 0.0
        %3698 = vmatprep.subr.mxu0 0.0
        %3699 = vmatpush1.msra.mxu0 0.0
        %3700 = vmatprep.subr.mxu0 0.0
        %3701 = vmatpush1.msra.mxu0 0.0
        %3702 = vmatprep.subr.mxu0 0.0
        %3703 = vmatpush1.msra.mxu0 0.0
        %3704 = vmatprep.subr.mxu0 0.0
        %3705 = vmatpush1.msra.mxu0 0.0
        %3706 = vmatprep.subr.mxu0 0.0
        %3707 = vmatpush1.msra.mxu0 0.0
        %3708 = vmatprep.subr.mxu0 0.0
        %3709 = vmatpush1.msra.mxu0 0.0
        %3710 = vmatprep.subr.mxu0 0.0
        %3711 = vmatpush1.msra.mxu0 0.0
        %3712 = vmatprep.subr.mxu0 0.0
        %3713 = vmatpush1.msra.mxu0 %v3680
        %3714 = vmatprep.subr.mxu0 0.0
        %3715 = vmatpush2.msra.mxu0 0.0
        %3716 = vmatprep.subr.mxu0 0.0
        %3717 = vmatpush2.msra.mxu0 0.0
        %3718 = vmatprep.subr.mxu0 0.0
        %3719 = vmatpush2.msra.mxu0 0.0
        %3720 = vmatprep.subr.mxu0 0.0
        %3721 = vmatpush2.msra.mxu0 0.0
        %3722 = vmatprep.subr.mxu0 0.0
        %3723 = vmatpush2.msra.mxu0 0.0
        %3724 = vmatprep.subr.mxu0 0.0
        %3725 = vmatpush2.msra.mxu0 0.0
        %3726 = vmatprep.subr.mxu0 0.0
        %3727 = vmatpush2.msra.mxu0 0.0
        %3728 = vmatprep.subr.mxu0 0.0
        %3729 = vmatpush2.msra.mxu0 0.0
        %3730 = vmatprep.subr.mxu0 0.0
        %3731 = vmatpush2.msra.mxu0 0.0
        %3732 = vmatprep.subr.mxu0 0.0
        %3733 = vmatpush2.msra.mxu0 0.0
        %3734 = vmatprep.subr.mxu0 0.0
        %3735 = vmatpush2.msra.mxu0 0.0
        %3736 = vmatprep.subr.mxu0 0.0
        %3737 = vmatpush2.msra.mxu0 0.0
        %3738 = vmatprep.subr.mxu0 0.0
        %3739 = vmatpush2.msra.mxu0 0.0
        %3740 = vmatprep.subr.mxu0 0.0
        %3741 = vmatpush2.msra.mxu0 0.0
        %3742 = vmatprep.subr.mxu0 0.0
        %3743 = vmatpush2.msra.mxu0 0.0
        %3744 = vmatprep.subr.mxu0 0.0
        %3745 = vmatpush2.msra.mxu0 0.0
        %3746 = vmatprep.mubr.f32.mxu0 0.0
        %3747 = vmatmul.mubr.f32.gmra.mxu0 %v3677
        %v3748 = vpop.f32.mrf.mxu0
        %v3749 = vadd.f32 0.0, %v3748
        %v3750 = vpop.f32.mrf.mxu0
        %3751 = vdwg.mxu0
        %v3753 = vsel %vm3370, %v3359, 0
        %v3756 = vsel %vm3374, %v1924, 0
        %3758 = vmatprep.subr.mxu0 0.0
        %3759 = vmatpush1.msra.mxu0 0.0
        %3760 = vmatprep.subr.mxu0 0.0
        %3761 = vmatpush1.msra.mxu0 0.0
        %3762 = vmatprep.subr.mxu0 0.0
        %3763 = vmatpush1.msra.mxu0 0.0
        %3764 = vmatprep.subr.mxu0 0.0
        %3765 = vmatpush1.msra.mxu0 0.0
        %3766 = vmatprep.subr.mxu0 0.0
        %3767 = vmatpush1.msra.mxu0 0.0
        %3768 = vmatprep.subr.mxu0 0.0
        %3769 = vmatpush1.msra.mxu0 0.0
        %3770 = vmatprep.subr.mxu0 0.0
        %3771 = vmatpush1.msra.mxu0 0.0
        %3772 = vmatprep.subr.mxu0 0.0
        %3773 = vmatpush1.msra.mxu0 0.0
        %3774 = vmatprep.subr.mxu0 0.0
        %3775 = vmatpush1.msra.mxu0 0.0
        %3776 = vmatprep.subr.mxu0 0.0
        %3777 = vmatpush1.msra.mxu0 0.0
        %3778 = vmatprep.subr.mxu0 0.0
        %3779 = vmatpush1.msra.mxu0 0.0
        %3780 = vmatprep.subr.mxu0 0.0
        %3781 = vmatpush1.msra.mxu0 0.0
        %3782 = vmatprep.subr.mxu0 0.0
        %3783 = vmatpush1.msra.mxu0 0.0
        %3784 = vmatprep.subr.mxu0 0.0
        %3785 = vmatpush1.msra.mxu0 0.0
        %3786 = vmatprep.subr.mxu0 0.0
        %3787 = vmatpush1.msra.mxu0 0.0
        %3788 = vmatprep.subr.mxu0 0.0
        %3789 = vmatpush1.msra.mxu0 %v3756
        %3790 = vmatprep.subr.mxu0 0.0
        %3791 = vmatpush2.msra.mxu0 0.0
        %3792 = vmatprep.subr.mxu0 0.0
        %3793 = vmatpush2.msra.mxu0 0.0
        %3794 = vmatprep.subr.mxu0 0.0
        %3795 = vmatpush2.msra.mxu0 0.0
        %3796 = vmatprep.subr.mxu0 0.0
        %3797 = vmatpush2.msra.mxu0 0.0
        %3798 = vmatprep.subr.mxu0 0.0
        %3799 = vmatpush2.msra.mxu0 0.0
        %3800 = vmatprep.subr.mxu0 0.0
        %3801 = vmatpush2.msra.mxu0 0.0
        %3802 = vmatprep.subr.mxu0 0.0
        %3803 = vmatpush2.msra.mxu0 0.0
        %3804 = vmatprep.subr.mxu0 0.0
        %3805 = vmatpush2.msra.mxu0 0.0
        %3806 = vmatprep.subr.mxu0 0.0
        %3807 = vmatpush2.msra.mxu0 0.0
        %3808 = vmatprep.subr.mxu0 0.0
        %3809 = vmatpush2.msra.mxu0 0.0
        %3810 = vmatprep.subr.mxu0 0.0
        %3811 = vmatpush2.msra.mxu0 0.0
        %3812 = vmatprep.subr.mxu0 0.0
        %3813 = vmatpush2.msra.mxu0 0.0
        %3814 = vmatprep.subr.mxu0 0.0
        %3815 = vmatpush2.msra.mxu0 0.0
        %3816 = vmatprep.subr.mxu0 0.0
        %3817 = vmatpush2.msra.mxu0 0.0
        %3818 = vmatprep.subr.mxu0 0.0
        %3819 = vmatpush2.msra.mxu0 0.0
        %3820 = vmatprep.subr.mxu0 0.0
        %3821 = vmatpush2.msra.mxu0 0.0
        %3822 = vmatprep.mubr.f32.mxu0 0.0
        %3823 = vmatmul.mubr.f32.gmra.mxu0 %v3753
        %v3824 = vpop.f32.mrf.mxu0
        %v3825 = vadd.f32 0.0, %v3824
        %v3826 = vpop.f32.mrf.mxu0
        %3827 = vdwg.mxu0
        %v3829 = vsel %vm3370, %v3360, 0
        %v3832 = vsel %vm3374, %v1934, 0
        %3834 = vmatprep.subr.mxu0 0.0
        %3835 = vmatpush1.msra.mxu0 0.0
        %3836 = vmatprep.subr.mxu0 0.0
        %3837 = vmatpush1.msra.mxu0 0.0
        %3838 = vmatprep.subr.mxu0 0.0
        %3839 = vmatpush1.msra.mxu0 0.0
        %3840 = vmatprep.subr.mxu0 0.0
        %3841 = vmatpush1.msra.mxu0 0.0
        %3842 = vmatprep.subr.mxu0 0.0
        %3843 = vmatpush1.msra.mxu0 0.0
        %3844 = vmatprep.subr.mxu0 0.0
        %3845 = vmatpush1.msra.mxu0 0.0
        %3846 = vmatprep.subr.mxu0 0.0
        %3847 = vmatpush1.msra.mxu0 0.0
        %3848 = vmatprep.subr.mxu0 0.0
        %3849 = vmatpush1.msra.mxu0 0.0
        %3850 = vmatprep.subr.mxu0 0.0
        %3851 = vmatpush1.msra.mxu0 0.0
        %3852 = vmatprep.subr.mxu0 0.0
        %3853 = vmatpush1.msra.mxu0 0.0
        %3854 = vmatprep.subr.mxu0 0.0
        %3855 = vmatpush1.msra.mxu0 0.0
        %3856 = vmatprep.subr.mxu0 0.0
        %3857 = vmatpush1.msra.mxu0 0.0
        %3858 = vmatprep.subr.mxu0 0.0
        %3859 = vmatpush1.msra.mxu0 0.0
        %3860 = vmatprep.subr.mxu0 0.0
        %3861 = vmatpush1.msra.mxu0 0.0
        %3862 = vmatprep.subr.mxu0 0.0
        %3863 = vmatpush1.msra.mxu0 0.0
        %3864 = vmatprep.subr.mxu0 0.0
        %3865 = vmatpush1.msra.mxu0 %v3832
        %3866 = vmatprep.subr.mxu0 0.0
        %3867 = vmatpush2.msra.mxu0 0.0
        %3868 = vmatprep.subr.mxu0 0.0
        %3869 = vmatpush2.msra.mxu0 0.0
        %3870 = vmatprep.subr.mxu0 0.0
        %3871 = vmatpush2.msra.mxu0 0.0
        %3872 = vmatprep.subr.mxu0 0.0
        %3873 = vmatpush2.msra.mxu0 0.0
        %3874 = vmatprep.subr.mxu0 0.0
        %3875 = vmatpush2.msra.mxu0 0.0
        %3876 = vmatprep.subr.mxu0 0.0
        %3877 = vmatpush2.msra.mxu0 0.0
        %3878 = vmatprep.subr.mxu0 0.0
        %3879 = vmatpush2.msra.mxu0 0.0
        %3880 = vmatprep.subr.mxu0 0.0
        %3881 = vmatpush2.msra.mxu0 0.0
        %3882 = vmatprep.subr.mxu0 0.0
        %3883 = vmatpush2.msra.mxu0 0.0
        %3884 = vmatprep.subr.mxu0 0.0
        %3885 = vmatpush2.msra.mxu0 0.0
        %3886 = vmatprep.subr.mxu0 0.0
        %3887 = vmatpush2.msra.mxu0 0.0
        %3888 = vmatprep.subr.mxu0 0.0
        %3889 = vmatpush2.msra.mxu0 0.0
        %3890 = vmatprep.subr.mxu0 0.0
        %3891 = vmatpush2.msra.mxu0 0.0
        %3892 = vmatprep.subr.mxu0 0.0
        %3893 = vmatpush2.msra.mxu0 0.0
        %3894 = vmatprep.subr.mxu0 0.0
        %3895 = vmatpush2.msra.mxu0 0.0
        %3896 = vmatprep.subr.mxu0 0.0
        %3897 = vmatpush2.msra.mxu0 0.0
        %3898 = vmatprep.mubr.f32.mxu0 0.0
        %3899 = vmatmul.mubr.f32.gmra.mxu0 %v3829
        %v3900 = vpop.f32.mrf.mxu0
        %v3901 = vadd.f32 0.0, %v3900
        %v3902 = vpop.f32.mrf.mxu0
        %3903 = vdwg.mxu0
        %v3905 = vsel %vm3370, %v3361, 0
        %v3908 = vsel %vm3374, %v1935, 0
        %3910 = vmatprep.subr.mxu0 0.0
        %3911 = vmatpush1.msra.mxu0 0.0
        %3912 = vmatprep.subr.mxu0 0.0
        %3913 = vmatpush1.msra.mxu0 0.0
        %3914 = vmatprep.subr.mxu0 0.0
        %3915 = vmatpush1.msra.mxu0 0.0
        %3916 = vmatprep.subr.mxu0 0.0
        %3917 = vmatpush1.msra.mxu0 0.0
        %3918 = vmatprep.subr.mxu0 0.0
        %3919 = vmatpush1.msra.mxu0 0.0
        %3920 = vmatprep.subr.mxu0 0.0
        %3921 = vmatpush1.msra.mxu0 0.0
        %3922 = vmatprep.subr.mxu0 0.0
        %3923 = vmatpush1.msra.mxu0 0.0
        %3924 = vmatprep.subr.mxu0 0.0
        %3925 = vmatpush1.msra.mxu0 0.0
        %3926 = vmatprep.subr.mxu0 0.0
        %3927 = vmatpush1.msra.mxu0 0.0
        %3928 = vmatprep.subr.mxu0 0.0
        %3929 = vmatpush1.msra.mxu0 0.0
        %3930 = vmatprep.subr.mxu0 0.0
        %3931 = vmatpush1.msra.mxu0 0.0
        %3932 = vmatprep.subr.mxu0 0.0
        %3933 = vmatpush1.msra.mxu0 0.0
        %3934 = vmatprep.subr.mxu0 0.0
        %3935 = vmatpush1.msra.mxu0 0.0
        %3936 = vmatprep.subr.mxu0 0.0
        %3937 = vmatpush1.msra.mxu0 0.0
        %3938 = vmatprep.subr.mxu0 0.0
        %3939 = vmatpush1.msra.mxu0 0.0
        %3940 = vmatprep.subr.mxu0 0.0
        %3941 = vmatpush1.msra.mxu0 %v3908
        %3942 = vmatprep.subr.mxu0 0.0
        %3943 = vmatpush2.msra.mxu0 0.0
        %3944 = vmatprep.subr.mxu0 0.0
        %3945 = vmatpush2.msra.mxu0 0.0
        %3946 = vmatprep.subr.mxu0 0.0
        %3947 = vmatpush2.msra.mxu0 0.0
        %3948 = vmatprep.subr.mxu0 0.0
        %3949 = vmatpush2.msra.mxu0 0.0
        %3950 = vmatprep.subr.mxu0 0.0
        %3951 = vmatpush2.msra.mxu0 0.0
        %3952 = vmatprep.subr.mxu0 0.0
        %3953 = vmatpush2.msra.mxu0 0.0
        %3954 = vmatprep.subr.mxu0 0.0
        %3955 = vmatpush2.msra.mxu0 0.0
        %3956 = vmatprep.subr.mxu0 0.0
        %3957 = vmatpush2.msra.mxu0 0.0
        %3958 = vmatprep.subr.mxu0 0.0
        %3959 = vmatpush2.msra.mxu0 0.0
        %3960 = vmatprep.subr.mxu0 0.0
        %3961 = vmatpush2.msra.mxu0 0.0
        %3962 = vmatprep.subr.mxu0 0.0
        %3963 = vmatpush2.msra.mxu0 0.0
        %3964 = vmatprep.subr.mxu0 0.0
        %3965 = vmatpush2.msra.mxu0 0.0
        %3966 = vmatprep.subr.mxu0 0.0
        %3967 = vmatpush2.msra.mxu0 0.0
        %3968 = vmatprep.subr.mxu0 0.0
        %3969 = vmatpush2.msra.mxu0 0.0
        %3970 = vmatprep.subr.mxu0 0.0
        %3971 = vmatpush2.msra.mxu0 0.0
        %3972 = vmatprep.subr.mxu0 0.0
        %3973 = vmatpush2.msra.mxu0 0.0
        %3974 = vmatprep.mubr.f32.mxu0 0.0
        %3975 = vmatmul.mubr.f32.gmra.mxu0 %v3905
        %v3976 = vpop.f32.mrf.mxu0
        %v3977 = vadd.f32 0.0, %v3976
        %v3978 = vpop.f32.mrf.mxu0
        %3979 = vdwg.mxu0
        %v3981 = vsel %vm3370, %v3362, 0
        %v3984 = vsel %vm3374, %v1943, 0
        %3986 = vmatprep.subr.mxu0 0.0
        %3987 = vmatpush1.msra.mxu0 0.0
        %3988 = vmatprep.subr.mxu0 0.0
        %3989 = vmatpush1.msra.mxu0 0.0
        %3990 = vmatprep.subr.mxu0 0.0
        %3991 = vmatpush1.msra.mxu0 0.0
        %3992 = vmatprep.subr.mxu0 0.0
        %3993 = vmatpush1.msra.mxu0 0.0
        %3994 = vmatprep.subr.mxu0 0.0
        %3995 = vmatpush1.msra.mxu0 0.0
        %3996 = vmatprep.subr.mxu0 0.0
        %3997 = vmatpush1.msra.mxu0 0.0
        %3998 = vmatprep.subr.mxu0 0.0
        %3999 = vmatpush1.msra.mxu0 0.0
        %4000 = vmatprep.subr.mxu0 0.0
        %4001 = vmatpush1.msra.mxu0 0.0
        %4002 = vmatprep.subr.mxu0 0.0
        %4003 = vmatpush1.msra.mxu0 0.0
        %4004 = vmatprep.subr.mxu0 0.0
        %4005 = vmatpush1.msra.mxu0 0.0
        %4006 = vmatprep.subr.mxu0 0.0
        %4007 = vmatpush1.msra.mxu0 0.0
        %4008 = vmatprep.subr.mxu0 0.0
        %4009 = vmatpush1.msra.mxu0 0.0
        %4010 = vmatprep.subr.mxu0 0.0
        %4011 = vmatpush1.msra.mxu0 0.0
        %4012 = vmatprep.subr.mxu0 0.0
        %4013 = vmatpush1.msra.mxu0 0.0
        %4014 = vmatprep.subr.mxu0 0.0
        %4015 = vmatpush1.msra.mxu0 0.0
        %4016 = vmatprep.subr.mxu0 0.0
        %4017 = vmatpush1.msra.mxu0 %v3984
        %4018 = vmatprep.subr.mxu0 0.0
        %4019 = vmatpush2.msra.mxu0 0.0
        %4020 = vmatprep.subr.mxu0 0.0
        %4021 = vmatpush2.msra.mxu0 0.0
        %4022 = vmatprep.subr.mxu0 0.0
        %4023 = vmatpush2.msra.mxu0 0.0
        %4024 = vmatprep.subr.mxu0 0.0
        %4025 = vmatpush2.msra.mxu0 0.0
        %4026 = vmatprep.subr.mxu0 0.0
        %4027 = vmatpush2.msra.mxu0 0.0
        %4028 = vmatprep.subr.mxu0 0.0
        %4029 = vmatpush2.msra.mxu0 0.0
        %4030 = vmatprep.subr.mxu0 0.0
        %4031 = vmatpush2.msra.mxu0 0.0
        %4032 = vmatprep.subr.mxu0 0.0
        %4033 = vmatpush2.msra.mxu0 0.0
        %4034 = vmatprep.subr.mxu0 0.0
        %4035 = vmatpush2.msra.mxu0 0.0
        %4036 = vmatprep.subr.mxu0 0.0
        %4037 = vmatpush2.msra.mxu0 0.0
        %4038 = vmatprep.subr.mxu0 0.0
        %4039 = vmatpush2.msra.mxu0 0.0
        %4040 = vmatprep.subr.mxu0 0.0
        %4041 = vmatpush2.msra.mxu0 0.0
        %4042 = vmatprep.subr.mxu0 0.0
        %4043 = vmatpush2.msra.mxu0 0.0
        %4044 = vmatprep.subr.mxu0 0.0
        %4045 = vmatpush2.msra.mxu0 0.0
        %4046 = vmatprep.subr.mxu0 0.0
        %4047 = vmatpush2.msra.mxu0 0.0
        %4048 = vmatprep.subr.mxu0 0.0
        %4049 = vmatpush2.msra.mxu0 0.0
        %4050 = vmatprep.mubr.f32.mxu0 0.0
        %4051 = vmatmul.mubr.f32.gmra.mxu0 %v3981
        %v4052 = vpop.f32.mrf.mxu0
        %v4053 = vadd.f32 0.0, %v4052
        %v4054 = vpop.f32.mrf.mxu0
        %4055 = vdwg.mxu0
        %v4057 = vsel %vm3370, %v3363, 0
        %v4060 = vsel %vm3374, %v1944, 0
        %4062 = vmatprep.subr.mxu0 0.0
        %4063 = vmatpush1.msra.mxu0 0.0
        %4064 = vmatprep.subr.mxu0 0.0
        %4065 = vmatpush1.msra.mxu0 0.0
        %4066 = vmatprep.subr.mxu0 0.0
        %4067 = vmatpush1.msra.mxu0 0.0
        %4068 = vmatprep.subr.mxu0 0.0
        %4069 = vmatpush1.msra.mxu0 0.0
        %4070 = vmatprep.subr.mxu0 0.0
        %4071 = vmatpush1.msra.mxu0 0.0
        %4072 = vmatprep.subr.mxu0 0.0
        %4073 = vmatpush1.msra.mxu0 0.0
        %4074 = vmatprep.subr.mxu0 0.0
        %4075 = vmatpush1.msra.mxu0 0.0
        %4076 = vmatprep.subr.mxu0 0.0
        %4077 = vmatpush1.msra.mxu0 0.0
        %4078 = vmatprep.subr.mxu0 0.0
        %4079 = vmatpush1.msra.mxu0 0.0
        %4080 = vmatprep.subr.mxu0 0.0
        %4081 = vmatpush1.msra.mxu0 0.0
        %4082 = vmatprep.subr.mxu0 0.0
        %4083 = vmatpush1.msra.mxu0 0.0
        %4084 = vmatprep.subr.mxu0 0.0
        %4085 = vmatpush1.msra.mxu0 0.0
        %4086 = vmatprep.subr.mxu0 0.0
        %4087 = vmatpush1.msra.mxu0 0.0
        %4088 = vmatprep.subr.mxu0 0.0
        %4089 = vmatpush1.msra.mxu0 0.0
        %4090 = vmatprep.subr.mxu0 0.0
        %4091 = vmatpush1.msra.mxu0 0.0
        %4092 = vmatprep.subr.mxu0 0.0
        %4093 = vmatpush1.msra.mxu0 %v4060
        %4094 = vmatprep.subr.mxu0 0.0
        %4095 = vmatpush2.msra.mxu0 0.0
        %4096 = vmatprep.subr.mxu0 0.0
        %4097 = vmatpush2.msra.mxu0 0.0
        %4098 = vmatprep.subr.mxu0 0.0
        %4099 = vmatpush2.msra.mxu0 0.0
        %4100 = vmatprep.subr.mxu0 0.0
        %4101 = vmatpush2.msra.mxu0 0.0
        %4102 = vmatprep.subr.mxu0 0.0
        %4103 = vmatpush2.msra.mxu0 0.0
        %4104 = vmatprep.subr.mxu0 0.0
        %4105 = vmatpush2.msra.mxu0 0.0
        %4106 = vmatprep.subr.mxu0 0.0
        %4107 = vmatpush2.msra.mxu0 0.0
        %4108 = vmatprep.subr.mxu0 0.0
        %4109 = vmatpush2.msra.mxu0 0.0
        %4110 = vmatprep.subr.mxu0 0.0
        %4111 = vmatpush2.msra.mxu0 0.0
        %4112 = vmatprep.subr.mxu0 0.0
        %4113 = vmatpush2.msra.mxu0 0.0
        %4114 = vmatprep.subr.mxu0 0.0
        %4115 = vmatpush2.msra.mxu0 0.0
        %4116 = vmatprep.subr.mxu0 0.0
        %4117 = vmatpush2.msra.mxu0 0.0
        %4118 = vmatprep.subr.mxu0 0.0
        %4119 = vmatpush2.msra.mxu0 0.0
        %4120 = vmatprep.subr.mxu0 0.0
        %4121 = vmatpush2.msra.mxu0 0.0
        %4122 = vmatprep.subr.mxu0 0.0
        %4123 = vmatpush2.msra.mxu0 0.0
        %4124 = vmatprep.subr.mxu0 0.0
        %4125 = vmatpush2.msra.mxu0 0.0
        %4126 = vmatprep.mubr.f32.mxu0 0.0
        %4127 = vmatmul.mubr.f32.gmra.mxu0 %v4057
        %v4128 = vpop.f32.mrf.mxu0
        %v4129 = vadd.f32 0.0, %v4128
        %v4130 = vpop.f32.mrf.mxu0
        %4131 = vdwg.mxu0
        %v4133 = vsel %vm3370, %v3364, 0
        %v4136 = vsel %vm3374, %v1954, 0
        %4138 = vmatprep.subr.mxu0 0.0
        %4139 = vmatpush1.msra.mxu0 0.0
        %4140 = vmatprep.subr.mxu0 0.0
        %4141 = vmatpush1.msra.mxu0 0.0
        %4142 = vmatprep.subr.mxu0 0.0
        %4143 = vmatpush1.msra.mxu0 0.0
        %4144 = vmatprep.subr.mxu0 0.0
        %4145 = vmatpush1.msra.mxu0 0.0
        %4146 = vmatprep.subr.mxu0 0.0
        %4147 = vmatpush1.msra.mxu0 0.0
        %4148 = vmatprep.subr.mxu0 0.0
        %4149 = vmatpush1.msra.mxu0 0.0
        %4150 = vmatprep.subr.mxu0 0.0
        %4151 = vmatpush1.msra.mxu0 0.0
        %4152 = vmatprep.subr.mxu0 0.0
        %4153 = vmatpush1.msra.mxu0 0.0
        %4154 = vmatprep.subr.mxu0 0.0
        %4155 = vmatpush1.msra.mxu0 0.0
        %4156 = vmatprep.subr.mxu0 0.0
        %4157 = vmatpush1.msra.mxu0 0.0
        %4158 = vmatprep.subr.mxu0 0.0
        %4159 = vmatpush1.msra.mxu0 0.0
        %4160 = vmatprep.subr.mxu0 0.0
        %4161 = vmatpush1.msra.mxu0 0.0
        %4162 = vmatprep.subr.mxu0 0.0
        %4163 = vmatpush1.msra.mxu0 0.0
        %4164 = vmatprep.subr.mxu0 0.0
        %4165 = vmatpush1.msra.mxu0 0.0
        %4166 = vmatprep.subr.mxu0 0.0
        %4167 = vmatpush1.msra.mxu0 0.0
        %4168 = vmatprep.subr.mxu0 0.0
        %4169 = vmatpush1.msra.mxu0 %v4136
        %4170 = vmatprep.subr.mxu0 0.0
        %4171 = vmatpush2.msra.mxu0 0.0
        %4172 = vmatprep.subr.mxu0 0.0
        %4173 = vmatpush2.msra.mxu0 0.0
        %4174 = vmatprep.subr.mxu0 0.0
        %4175 = vmatpush2.msra.mxu0 0.0
        %4176 = vmatprep.subr.mxu0 0.0
        %4177 = vmatpush2.msra.mxu0 0.0
        %4178 = vmatprep.subr.mxu0 0.0
        %4179 = vmatpush2.msra.mxu0 0.0
        %4180 = vmatprep.subr.mxu0 0.0
        %4181 = vmatpush2.msra.mxu0 0.0
        %4182 = vmatprep.subr.mxu0 0.0
        %4183 = vmatpush2.msra.mxu0 0.0
        %4184 = vmatprep.subr.mxu0 0.0
        %4185 = vmatpush2.msra.mxu0 0.0
        %4186 = vmatprep.subr.mxu0 0.0
        %4187 = vmatpush2.msra.mxu0 0.0
        %4188 = vmatprep.subr.mxu0 0.0
        %4189 = vmatpush2.msra.mxu0 0.0
        %4190 = vmatprep.subr.mxu0 0.0
        %4191 = vmatpush2.msra.mxu0 0.0
        %4192 = vmatprep.subr.mxu0 0.0
        %4193 = vmatpush2.msra.mxu0 0.0
        %4194 = vmatprep.subr.mxu0 0.0
        %4195 = vmatpush2.msra.mxu0 0.0
        %4196 = vmatprep.subr.mxu0 0.0
        %4197 = vmatpush2.msra.mxu0 0.0
        %4198 = vmatprep.subr.mxu0 0.0
        %4199 = vmatpush2.msra.mxu0 0.0
        %4200 = vmatprep.subr.mxu0 0.0
        %4201 = vmatpush2.msra.mxu0 0.0
        %4202 = vmatprep.mubr.f32.mxu0 0.0
        %4203 = vmatmul.mubr.f32.gmra.mxu0 %v4133
        %v4204 = vpop.f32.mrf.mxu0
        %v4205 = vadd.f32 0.0, %v4204
        %v4206 = vpop.f32.mrf.mxu0
        %4207 = vdwg.mxu0
        %v4209 = vsel %vm3370, %v3365, 0
        %v4212 = vsel %vm3374, %v1955, 0
        %4214 = vmatprep.subr.mxu0 0.0
        %4215 = vmatpush1.msra.mxu0 0.0
        %4216 = vmatprep.subr.mxu0 0.0
        %4217 = vmatpush1.msra.mxu0 0.0
        %4218 = vmatprep.subr.mxu0 0.0
        %4219 = vmatpush1.msra.mxu0 0.0
        %4220 = vmatprep.subr.mxu0 0.0
        %4221 = vmatpush1.msra.mxu0 0.0
        %4222 = vmatprep.subr.mxu0 0.0
        %4223 = vmatpush1.msra.mxu0 0.0
        %4224 = vmatprep.subr.mxu0 0.0
        %4225 = vmatpush1.msra.mxu0 0.0
        %4226 = vmatprep.subr.mxu0 0.0
        %4227 = vmatpush1.msra.mxu0 0.0
        %4228 = vmatprep.subr.mxu0 0.0
        %4229 = vmatpush1.msra.mxu0 0.0
        %4230 = vmatprep.subr.mxu0 0.0
        %4231 = vmatpush1.msra.mxu0 0.0
        %4232 = vmatprep.subr.mxu0 0.0
        %4233 = vmatpush1.msra.mxu0 0.0
        %4234 = vmatprep.subr.mxu0 0.0
        %4235 = vmatpush1.msra.mxu0 0.0
        %4236 = vmatprep.subr.mxu0 0.0
        %4237 = vmatpush1.msra.mxu0 0.0
        %4238 = vmatprep.subr.mxu0 0.0
        %4239 = vmatpush1.msra.mxu0 0.0
        %4240 = vmatprep.subr.mxu0 0.0
        %4241 = vmatpush1.msra.mxu0 0.0
        %4242 = vmatprep.subr.mxu0 0.0
        %4243 = vmatpush1.msra.mxu0 0.0
        %4244 = vmatprep.subr.mxu0 0.0
        %4245 = vmatpush1.msra.mxu0 %v4212
        %4246 = vmatprep.subr.mxu0 0.0
        %4247 = vmatpush2.msra.mxu0 0.0
        %4248 = vmatprep.subr.mxu0 0.0
        %4249 = vmatpush2.msra.mxu0 0.0
        %4250 = vmatprep.subr.mxu0 0.0
        %4251 = vmatpush2.msra.mxu0 0.0
        %4252 = vmatprep.subr.mxu0 0.0
        %4253 = vmatpush2.msra.mxu0 0.0
        %4254 = vmatprep.subr.mxu0 0.0
        %4255 = vmatpush2.msra.mxu0 0.0
        %4256 = vmatprep.subr.mxu0 0.0
        %4257 = vmatpush2.msra.mxu0 0.0
        %4258 = vmatprep.subr.mxu0 0.0
        %4259 = vmatpush2.msra.mxu0 0.0
        %4260 = vmatprep.subr.mxu0 0.0
        %4261 = vmatpush2.msra.mxu0 0.0
        %4262 = vmatprep.subr.mxu0 0.0
        %4263 = vmatpush2.msra.mxu0 0.0
        %4264 = vmatprep.subr.mxu0 0.0
        %4265 = vmatpush2.msra.mxu0 0.0
        %4266 = vmatprep.subr.mxu0 0.0
        %4267 = vmatpush2.msra.mxu0 0.0
        %4268 = vmatprep.subr.mxu0 0.0
        %4269 = vmatpush2.msra.mxu0 0.0
        %4270 = vmatprep.subr.mxu0 0.0
        %4271 = vmatpush2.msra.mxu0 0.0
        %4272 = vmatprep.subr.mxu0 0.0
        %4273 = vmatpush2.msra.mxu0 0.0
        %4274 = vmatprep.subr.mxu0 0.0
        %4275 = vmatpush2.msra.mxu0 0.0
        %4276 = vmatprep.subr.mxu0 0.0
        %4277 = vmatpush2.msra.mxu0 0.0
        %4278 = vmatprep.mubr.f32.mxu0 0.0
        %4279 = vmatmul.mubr.f32.gmra.mxu0 %v4209
        %v4280 = vpop.f32.mrf.mxu0
        %v4281 = vadd.f32 0.0, %v4280
        %v4282 = vpop.f32.mrf.mxu0
        %4283 = vdwg.mxu0
        %v4285 = vsel %vm3370, %v3366, 0
        %v4288 = vsel %vm3374, %v1963, 0
        %4290 = vmatprep.subr.mxu0 0.0
        %4291 = vmatpush1.msra.mxu0 0.0
        %4292 = vmatprep.subr.mxu0 0.0
        %4293 = vmatpush1.msra.mxu0 0.0
        %4294 = vmatprep.subr.mxu0 0.0
        %4295 = vmatpush1.msra.mxu0 0.0
        %4296 = vmatprep.subr.mxu0 0.0
        %4297 = vmatpush1.msra.mxu0 0.0
        %4298 = vmatprep.subr.mxu0 0.0
        %4299 = vmatpush1.msra.mxu0 0.0
        %4300 = vmatprep.subr.mxu0 0.0
        %4301 = vmatpush1.msra.mxu0 0.0
        %4302 = vmatprep.subr.mxu0 0.0
        %4303 = vmatpush1.msra.mxu0 0.0
        %4304 = vmatprep.subr.mxu0 0.0
        %4305 = vmatpush1.msra.mxu0 0.0
        %4306 = vmatprep.subr.mxu0 0.0
        %4307 = vmatpush1.msra.mxu0 0.0
        %4308 = vmatprep.subr.mxu0 0.0
        %4309 = vmatpush1.msra.mxu0 0.0
        %4310 = vmatprep.subr.mxu0 0.0
        %4311 = vmatpush1.msra.mxu0 0.0
        %4312 = vmatprep.subr.mxu0 0.0
        %4313 = vmatpush1.msra.mxu0 0.0
        %4314 = vmatprep.subr.mxu0 0.0
        %4315 = vmatpush1.msra.mxu0 0.0
        %4316 = vmatprep.subr.mxu0 0.0
        %4317 = vmatpush1.msra.mxu0 0.0
        %4318 = vmatprep.subr.mxu0 0.0
        %4319 = vmatpush1.msra.mxu0 0.0
        %4320 = vmatprep.subr.mxu0 0.0
        %4321 = vmatpush1.msra.mxu0 %v4288
        %4322 = vmatprep.subr.mxu0 0.0
        %4323 = vmatpush2.msra.mxu0 0.0
        %4324 = vmatprep.subr.mxu0 0.0
        %4325 = vmatpush2.msra.mxu0 0.0
        %4326 = vmatprep.subr.mxu0 0.0
        %4327 = vmatpush2.msra.mxu0 0.0
        %4328 = vmatprep.subr.mxu0 0.0
        %4329 = vmatpush2.msra.mxu0 0.0
        %4330 = vmatprep.subr.mxu0 0.0
        %4331 = vmatpush2.msra.mxu0 0.0
        %4332 = vmatprep.subr.mxu0 0.0
        %4333 = vmatpush2.msra.mxu0 0.0
        %4334 = vmatprep.subr.mxu0 0.0
        %4335 = vmatpush2.msra.mxu0 0.0
        %4336 = vmatprep.subr.mxu0 0.0
        %4337 = vmatpush2.msra.mxu0 0.0
        %4338 = vmatprep.subr.mxu0 0.0
        %4339 = vmatpush2.msra.mxu0 0.0
        %4340 = vmatprep.subr.mxu0 0.0
        %4341 = vmatpush2.msra.mxu0 0.0
        %4342 = vmatprep.subr.mxu0 0.0
        %4343 = vmatpush2.msra.mxu0 0.0
        %4344 = vmatprep.subr.mxu0 0.0
        %4345 = vmatpush2.msra.mxu0 0.0
        %4346 = vmatprep.subr.mxu0 0.0
        %4347 = vmatpush2.msra.mxu0 0.0
        %4348 = vmatprep.subr.mxu0 0.0
        %4349 = vmatpush2.msra.mxu0 0.0
        %4350 = vmatprep.subr.mxu0 0.0
        %4351 = vmatpush2.msra.mxu0 0.0
        %4352 = vmatprep.subr.mxu0 0.0
        %4353 = vmatpush2.msra.mxu0 0.0
        %4354 = vmatprep.mubr.f32.mxu0 0.0
        %4355 = vmatmul.mubr.f32.gmra.mxu0 %v4285
        %v4356 = vpop.f32.mrf.mxu0
        %v4357 = vadd.f32 0.0, %v4356
        %v4358 = vpop.f32.mrf.mxu0
        %4359 = vdwg.mxu0
        %v4361 = vsel %vm3370, %v3367, 0
        %v4364 = vsel %vm3374, %v1964, 0
        %4366 = vmatprep.subr.mxu0 0.0
        %4367 = vmatpush1.msra.mxu0 0.0
        %4368 = vmatprep.subr.mxu0 0.0
        %4369 = vmatpush1.msra.mxu0 0.0
        %4370 = vmatprep.subr.mxu0 0.0
        %4371 = vmatpush1.msra.mxu0 0.0
        %4372 = vmatprep.subr.mxu0 0.0
        %4373 = vmatpush1.msra.mxu0 0.0
        %4374 = vmatprep.subr.mxu0 0.0
        %4375 = vmatpush1.msra.mxu0 0.0
        %4376 = vmatprep.subr.mxu0 0.0
        %4377 = vmatpush1.msra.mxu0 0.0
        %4378 = vmatprep.subr.mxu0 0.0
        %4379 = vmatpush1.msra.mxu0 0.0
        %4380 = vmatprep.subr.mxu0 0.0
        %4381 = vmatpush1.msra.mxu0 0.0
        %4382 = vmatprep.subr.mxu0 0.0
        %4383 = vmatpush1.msra.mxu0 0.0
        %4384 = vmatprep.subr.mxu0 0.0
        %4385 = vmatpush1.msra.mxu0 0.0
        %4386 = vmatprep.subr.mxu0 0.0
        %4387 = vmatpush1.msra.mxu0 0.0
        %4388 = vmatprep.subr.mxu0 0.0
        %4389 = vmatpush1.msra.mxu0 0.0
        %4390 = vmatprep.subr.mxu0 0.0
        %4391 = vmatpush1.msra.mxu0 0.0
        %4392 = vmatprep.subr.mxu0 0.0
        %4393 = vmatpush1.msra.mxu0 0.0
        %4394 = vmatprep.subr.mxu0 0.0
        %4395 = vmatpush1.msra.mxu0 0.0
        %4396 = vmatprep.subr.mxu0 0.0
        %4397 = vmatpush1.msra.mxu0 %v4364
        %4398 = vmatprep.subr.mxu0 0.0
        %4399 = vmatpush2.msra.mxu0 0.0
        %4400 = vmatprep.subr.mxu0 0.0
        %4401 = vmatpush2.msra.mxu0 0.0
        %4402 = vmatprep.subr.mxu0 0.0
        %4403 = vmatpush2.msra.mxu0 0.0
        %4404 = vmatprep.subr.mxu0 0.0
        %4405 = vmatpush2.msra.mxu0 0.0
        %4406 = vmatprep.subr.mxu0 0.0
        %4407 = vmatpush2.msra.mxu0 0.0
        %4408 = vmatprep.subr.mxu0 0.0
        %4409 = vmatpush2.msra.mxu0 0.0
        %4410 = vmatprep.subr.mxu0 0.0
        %4411 = vmatpush2.msra.mxu0 0.0
        %4412 = vmatprep.subr.mxu0 0.0
        %4413 = vmatpush2.msra.mxu0 0.0
        %4414 = vmatprep.subr.mxu0 0.0
        %4415 = vmatpush2.msra.mxu0 0.0
        %4416 = vmatprep.subr.mxu0 0.0
        %4417 = vmatpush2.msra.mxu0 0.0
        %4418 = vmatprep.subr.mxu0 0.0
        %4419 = vmatpush2.msra.mxu0 0.0
        %4420 = vmatprep.subr.mxu0 0.0
        %4421 = vmatpush2.msra.mxu0 0.0
        %4422 = vmatprep.subr.mxu0 0.0
        %4423 = vmatpush2.msra.mxu0 0.0
        %4424 = vmatprep.subr.mxu0 0.0
        %4425 = vmatpush2.msra.mxu0 0.0
        %4426 = vmatprep.subr.mxu0 0.0
        %4427 = vmatpush2.msra.mxu0 0.0
        %4428 = vmatprep.subr.mxu0 0.0
        %4429 = vmatpush2.msra.mxu0 0.0
        %4430 = vmatprep.mubr.f32.mxu0 0.0
        %4431 = vmatmul.mubr.f32.gmra.mxu0 %v4361
        %v4432 = vpop.f32.mrf.mxu0
        %v4433 = vadd.f32 0.0, %v4432
        %v4434 = vpop.f32.mrf.mxu0
        %4435 = vdwg.mxu0
        %v4437 = vsel %vm3370, %v3368, 0
        %v4440 = vsel %vm3374, %v1974, 0
        %4442 = vmatprep.subr.mxu0 0.0
        %4443 = vmatpush1.msra.mxu0 0.0
        %4444 = vmatprep.subr.mxu0 0.0
        %4445 = vmatpush1.msra.mxu0 0.0
        %4446 = vmatprep.subr.mxu0 0.0
        %4447 = vmatpush1.msra.mxu0 0.0
        %4448 = vmatprep.subr.mxu0 0.0
        %4449 = vmatpush1.msra.mxu0 0.0
        %4450 = vmatprep.subr.mxu0 0.0
        %4451 = vmatpush1.msra.mxu0 0.0
        %4452 = vmatprep.subr.mxu0 0.0
        %4453 = vmatpush1.msra.mxu0 0.0
        %4454 = vmatprep.subr.mxu0 0.0
        %4455 = vmatpush1.msra.mxu0 0.0
        %4456 = vmatprep.subr.mxu0 0.0
        %4457 = vmatpush1.msra.mxu0 0.0
        %4458 = vmatprep.subr.mxu0 0.0
        %4459 = vmatpush1.msra.mxu0 0.0
        %4460 = vmatprep.subr.mxu0 0.0
        %4461 = vmatpush1.msra.mxu0 0.0
        %4462 = vmatprep.subr.mxu0 0.0
        %4463 = vmatpush1.msra.mxu0 0.0
        %4464 = vmatprep.subr.mxu0 0.0
        %4465 = vmatpush1.msra.mxu0 0.0
        %4466 = vmatprep.subr.mxu0 0.0
        %4467 = vmatpush1.msra.mxu0 0.0
        %4468 = vmatprep.subr.mxu0 0.0
        %4469 = vmatpush1.msra.mxu0 0.0
        %4470 = vmatprep.subr.mxu0 0.0
        %4471 = vmatpush1.msra.mxu0 0.0
        %4472 = vmatprep.subr.mxu0 0.0
        %4473 = vmatpush1.msra.mxu0 %v4440
        %4474 = vmatprep.subr.mxu0 0.0
        %4475 = vmatpush2.msra.mxu0 0.0
        %4476 = vmatprep.subr.mxu0 0.0
        %4477 = vmatpush2.msra.mxu0 0.0
        %4478 = vmatprep.subr.mxu0 0.0
        %4479 = vmatpush2.msra.mxu0 0.0
        %4480 = vmatprep.subr.mxu0 0.0
        %4481 = vmatpush2.msra.mxu0 0.0
        %4482 = vmatprep.subr.mxu0 0.0
        %4483 = vmatpush2.msra.mxu0 0.0
        %4484 = vmatprep.subr.mxu0 0.0
        %4485 = vmatpush2.msra.mxu0 0.0
        %4486 = vmatprep.subr.mxu0 0.0
        %4487 = vmatpush2.msra.mxu0 0.0
        %4488 = vmatprep.subr.mxu0 0.0
        %4489 = vmatpush2.msra.mxu0 0.0
        %4490 = vmatprep.subr.mxu0 0.0
        %4491 = vmatpush2.msra.mxu0 0.0
        %4492 = vmatprep.subr.mxu0 0.0
        %4493 = vmatpush2.msra.mxu0 0.0
        %4494 = vmatprep.subr.mxu0 0.0
        %4495 = vmatpush2.msra.mxu0 0.0
        %4496 = vmatprep.subr.mxu0 0.0
        %4497 = vmatpush2.msra.mxu0 0.0
        %4498 = vmatprep.subr.mxu0 0.0
        %4499 = vmatpush2.msra.mxu0 0.0
        %4500 = vmatprep.subr.mxu0 0.0
        %4501 = vmatpush2.msra.mxu0 0.0
        %4502 = vmatprep.subr.mxu0 0.0
        %4503 = vmatpush2.msra.mxu0 0.0
        %4504 = vmatprep.subr.mxu0 0.0
        %4505 = vmatpush2.msra.mxu0 0.0
        %4506 = vmatprep.mubr.f32.mxu0 0.0
        %4507 = vmatmul.mubr.f32.gmra.mxu0 %v4437
        %v4508 = vpop.f32.mrf.mxu0
        %v4509 = vadd.f32 0.0, %v4508
        %v4510 = vpop.f32.mrf.mxu0
        %4511 = vdwg.mxu0
        %v4513 = vsel %vm3370, %v3369, 0
        %v4516 = vsel %vm3374, %v1975, 0
        %4518 = vmatprep.subr.mxu0 0.0
        %4519 = vmatpush1.msra.mxu0 0.0
        %4520 = vmatprep.subr.mxu0 0.0
        %4521 = vmatpush1.msra.mxu0 0.0
        %4522 = vmatprep.subr.mxu0 0.0
        %4523 = vmatpush1.msra.mxu0 0.0
        %4524 = vmatprep.subr.mxu0 0.0
        %4525 = vmatpush1.msra.mxu0 0.0
        %4526 = vmatprep.subr.mxu0 0.0
        %4527 = vmatpush1.msra.mxu0 0.0
        %4528 = vmatprep.subr.mxu0 0.0
        %4529 = vmatpush1.msra.mxu0 0.0
        %4530 = vmatprep.subr.mxu0 0.0
        %4531 = vmatpush1.msra.mxu0 0.0
        %4532 = vmatprep.subr.mxu0 0.0
        %4533 = vmatpush1.msra.mxu0 0.0
        %4534 = vmatprep.subr.mxu0 0.0
        %4535 = vmatpush1.msra.mxu0 0.0
        %4536 = vmatprep.subr.mxu0 0.0
        %4537 = vmatpush1.msra.mxu0 0.0
        %4538 = vmatprep.subr.mxu0 0.0
        %4539 = vmatpush1.msra.mxu0 0.0
        %4540 = vmatprep.subr.mxu0 0.0
        %4541 = vmatpush1.msra.mxu0 0.0
        %4542 = vmatprep.subr.mxu0 0.0
        %4543 = vmatpush1.msra.mxu0 0.0
        %4544 = vmatprep.subr.mxu0 0.0
        %4545 = vmatpush1.msra.mxu0 0.0
        %4546 = vmatprep.subr.mxu0 0.0
        %4547 = vmatpush1.msra.mxu0 0.0
        %4548 = vmatprep.subr.mxu0 0.0
        %4549 = vmatpush1.msra.mxu0 %v4516
        %4550 = vmatprep.subr.mxu0 0.0
        %4551 = vmatpush2.msra.mxu0 0.0
        %4552 = vmatprep.subr.mxu0 0.0
        %4553 = vmatpush2.msra.mxu0 0.0
        %4554 = vmatprep.subr.mxu0 0.0
        %4555 = vmatpush2.msra.mxu0 0.0
        %4556 = vmatprep.subr.mxu0 0.0
        %4557 = vmatpush2.msra.mxu0 0.0
        %4558 = vmatprep.subr.mxu0 0.0
        %4559 = vmatpush2.msra.mxu0 0.0
        %4560 = vmatprep.subr.mxu0 0.0
        %4561 = vmatpush2.msra.mxu0 0.0
        %4562 = vmatprep.subr.mxu0 0.0
        %4563 = vmatpush2.msra.mxu0 0.0
        %4564 = vmatprep.subr.mxu0 0.0
        %4565 = vmatpush2.msra.mxu0 0.0
        %4566 = vmatprep.subr.mxu0 0.0
        %4567 = vmatpush2.msra.mxu0 0.0
        %4568 = vmatprep.subr.mxu0 0.0
        %4569 = vmatpush2.msra.mxu0 0.0
        %4570 = vmatprep.subr.mxu0 0.0
        %4571 = vmatpush2.msra.mxu0 0.0
        %4572 = vmatprep.subr.mxu0 0.0
        %4573 = vmatpush2.msra.mxu0 0.0
        %4574 = vmatprep.subr.mxu0 0.0
        %4575 = vmatpush2.msra.mxu0 0.0
        %4576 = vmatprep.subr.mxu0 0.0
        %4577 = vmatpush2.msra.mxu0 0.0
        %4578 = vmatprep.subr.mxu0 0.0
        %4579 = vmatpush2.msra.mxu0 0.0
        %4580 = vmatprep.subr.mxu0 0.0
        %4581 = vmatpush2.msra.mxu0 0.0
        %4582 = vmatprep.mubr.f32.mxu0 0.0
        %4583 = vmatmul.mubr.f32.gmra.mxu0 %v4513
        %v4584 = vpop.f32.mrf.mxu0
        %v4585 = vadd.f32 0.0, %v4584
        %v4586 = vpop.f32.mrf.mxu0
        %4587 = vdwg.mxu0
        %v4588 = vcombine.low %v3445, %v3521
        %v4590 = vunpack.c.l.s4 1934713408
        %v4591 = vunpack.c.0.s8 %v4590
        %v4592 = vlaneseq
        %v4593 = vshrl.u32 %v4592, 7
        %v4594 = vsub.s32 %v4591, %v4593
        %v4595 = vrot.slane %v4588, %v4594
        %v4596 = vcombine.high %v4595, 0.0
        %v4597 = vcombine.low %v3597, %v3673
        %v4599 = vunpack.c.l.s4 1934713408
        %v4600 = vunpack.c.0.s8 %v4599
        %v4601 = vlaneseq
        %v4602 = vshrl.u32 %v4601, 7
        %v4603 = vsub.s32 %v4600, %v4602
        %v4604 = vrot.slane %v4597, %v4603
        %v4605 = vcombine.high %v4604, 0.0
        %v4606 = vcombine.low %v3749, %v3825
        %v4608 = vunpack.c.l.s4 1934713408
        %v4609 = vunpack.c.0.s8 %v4608
        %v4610 = vlaneseq
        %v4611 = vshrl.u32 %v4610, 7
        %v4612 = vsub.s32 %v4609, %v4611
        %v4613 = vrot.slane %v4606, %v4612
        %v4614 = vcombine.high %v4613, 0.0
        %v4615 = vcombine.low %v3901, %v3977
        %v4617 = vunpack.c.l.s4 1934713408
        %v4618 = vunpack.c.0.s8 %v4617
        %v4619 = vlaneseq
        %v4620 = vshrl.u32 %v4619, 7
        %v4621 = vsub.s32 %v4618, %v4620
        %v4622 = vrot.slane %v4615, %v4621
        %v4623 = vcombine.high %v4622, 0.0
        %v4624 = vcombine.low %v4053, %v4129
        %v4626 = vunpack.c.l.s4 1934713408
        %v4627 = vunpack.c.0.s8 %v4626
        %v4628 = vlaneseq
        %v4629 = vshrl.u32 %v4628, 7
        %v4630 = vsub.s32 %v4627, %v4629
        %v4631 = vrot.slane %v4624, %v4630
        %v4632 = vcombine.high %v4631, 0.0
        %v4633 = vcombine.low %v4205, %v4281
        %v4635 = vunpack.c.l.s4 1934713408
        %v4636 = vunpack.c.0.s8 %v4635
        %v4637 = vlaneseq
        %v4638 = vshrl.u32 %v4637, 7
        %v4639 = vsub.s32 %v4636, %v4638
        %v4640 = vrot.slane %v4633, %v4639
        %v4641 = vcombine.high %v4640, 0.0
        %v4642 = vcombine.low %v4357, %v4433
        %v4644 = vunpack.c.l.s4 1934713408
        %v4645 = vunpack.c.0.s8 %v4644
        %v4646 = vlaneseq
        %v4647 = vshrl.u32 %v4646, 7
        %v4648 = vsub.s32 %v4645, %v4647
        %v4649 = vrot.slane %v4642, %v4648
        %v4650 = vcombine.high %v4649, 0.0
        %v4651 = vcombine.low %v4509, %v4585
        %v4653 = vunpack.c.l.s4 1934713408
        %v4654 = vunpack.c.0.s8 %v4653
        %v4655 = vlaneseq
        %v4656 = vshrl.u32 %v4655, 7
        %v4657 = vsub.s32 %v4654, %v4656
        %v4658 = vrot.slane %v4651, %v4657
        %v4659 = vcombine.high %v4658, 0.0
        %v4660 = vcombine.low %v4595, %v4613
        %v4662 = vunpack.c.l.s4 1983009808
        %v4663 = vunpack.c.0.s8 %v4662
        %v4664 = vlaneseq
        %v4665 = vshrl.u32 %v4664, 7
        %v4666 = vsub.s32 %v4663, %v4665
        %v4667 = vrot.slane %v4660, %v4666
        %v4668 = vcombine.low %v4604, %v4622
        %v4670 = vunpack.c.l.s4 1983009808
        %v4671 = vunpack.c.0.s8 %v4670
        %v4672 = vlaneseq
        %v4673 = vshrl.u32 %v4672, 7
        %v4674 = vsub.s32 %v4671, %v4673
        %v4675 = vrot.slane %v4668, %v4674
        %v4676 = vcombine.low %v4631, %v4649
        %v4678 = vunpack.c.l.s4 1983009808
        %v4679 = vunpack.c.0.s8 %v4678
        %v4680 = vlaneseq
        %v4681 = vshrl.u32 %v4680, 7
        %v4682 = vsub.s32 %v4679, %v4681
        %v4683 = vrot.slane %v4676, %v4682
        %v4684 = vcombine.low %v4640, %v4658
        %v4686 = vunpack.c.l.s4 1983009808
        %v4687 = vunpack.c.0.s8 %v4686
        %v4688 = vlaneseq
        %v4689 = vshrl.u32 %v4688, 7
        %v4690 = vsub.s32 %v4687, %v4689
        %v4691 = vrot.slane %v4684, %v4690
        %v4692 = vcombine.low %v4667, %v4675
        %v4694 = vunpack.c.l.s4 1934713408
        %v4695 = vunpack.c.0.s8 %v4694
        %v4696 = vlaneseq
        %v4697 = vshrl.u32 %v4696, 7
        %v4698 = vsub.s32 %v4695, %v4697
        %v4699 = vrot.slane %v4692, %v4698
        %v4700 = vcombine.low %v4683, %v4691
        %v4702 = vunpack.c.l.s4 1934713408
        %v4703 = vunpack.c.0.s8 %v4702
        %v4704 = vlaneseq
        %v4705 = vshrl.u32 %v4704, 7
        %v4706 = vsub.s32 %v4703, %v4705
        %v4707 = vrot.slane %v4700, %v4706
        %v4708 = vcombine.low %v4699, %v4707
        %v4709 = vcombine.high %v4699, %v4707
        %v4710 = vcombine.low %v4596, %v4614
        %v4712 = vunpack.c.l.s4 1983009808
        %v4713 = vunpack.c.0.s8 %v4712
        %v4714 = vlaneseq
        %v4715 = vshrl.u32 %v4714, 7
        %v4716 = vsub.s32 %v4713, %v4715
        %v4717 = vrot.slane %v4710, %v4716
        %v4718 = vcombine.low %v4605, %v4623
        %v4720 = vunpack.c.l.s4 1983009808
        %v4721 = vunpack.c.0.s8 %v4720
        %v4722 = vlaneseq
        %v4723 = vshrl.u32 %v4722, 7
        %v4724 = vsub.s32 %v4721, %v4723
        %v4725 = vrot.slane %v4718, %v4724
        %v4726 = vcombine.low %v4632, %v4650
        %v4728 = vunpack.c.l.s4 1983009808
        %v4729 = vunpack.c.0.s8 %v4728
        %v4730 = vlaneseq
        %v4731 = vshrl.u32 %v4730, 7
        %v4732 = vsub.s32 %v4729, %v4731
        %v4733 = vrot.slane %v4726, %v4732
        %v4734 = vcombine.low %v4641, %v4659
        %v4736 = vunpack.c.l.s4 1983009808
        %v4737 = vunpack.c.0.s8 %v4736
        %v4738 = vlaneseq
        %v4739 = vshrl.u32 %v4738, 7
        %v4740 = vsub.s32 %v4737, %v4739
        %v4741 = vrot.slane %v4734, %v4740
        %v4742 = vcombine.low %v4717, %v4725
        %v4744 = vunpack.c.l.s4 1934713408
        %v4745 = vunpack.c.0.s8 %v4744
        %v4746 = vlaneseq
        %v4747 = vshrl.u32 %v4746, 7
        %v4748 = vsub.s32 %v4745, %v4747
        %v4749 = vrot.slane %v4742, %v4748
        %v4750 = vcombine.low %v4733, %v4741
        %v4752 = vunpack.c.l.s4 1934713408
        %v4753 = vunpack.c.0.s8 %v4752
        %v4754 = vlaneseq
        %v4755 = vshrl.u32 %v4754, 7
        %v4756 = vsub.s32 %v4753, %v4755
        %v4757 = vrot.slane %v4750, %v4756
        %v4758 = vcombine.low %v4749, %v4757
        %v4759 = vcombine.high %v4749, %v4757
        %4762 = vrot.lane.b32.xlu0 %v4709, 16
        %v4763 = vpop.permute.xlu0 %4762
        %4764 = vrot.lane.b32.xlu0 %v4759, 16
        %v4765 = vpop.permute.xlu0 %4764
        %v4768 = vsel %vm1976, %v4708, %v4763
        %v4769 = vsel %vm1976, %v4758, %v4765
        %v4770 = vld [vmem:[%s905] sm:$0xff]
        %v4771 = vld [vmem:[%s905 + $0x8] sm:$0xff]
        %v4772 = vld [vmem:[%s905 + $0x10] sm:$0xff]
        %v4773 = vld [vmem:[%s905 + $0x18] sm:$0xff]
        %v4774 = vld [vmem:[%s908] sm:$0x1]
        %v4776 = vlaneseq
        %v4777 = vshrl.u32 %v4776, 7
        %v4778 = vsub.s32 0, %v4777
        %v4779 = vrot.slane %v4774, %v4778
        %v4782 = vsel %vm1070, %v4768, 0
        %v4785 = vsel %vm1070, %v4769, 0
        %4787 = vmatprep.subr.mxu0 0.0
        %4788 = vmatpush1.msra.mxu0 0.0
        %4789 = vmatprep.subr.mxu0 0.0
        %4790 = vmatpush1.msra.mxu0 0.0
        %4791 = vmatprep.subr.mxu0 0.0
        %4792 = vmatpush1.msra.mxu0 0.0
        %4793 = vmatprep.subr.mxu0 0.0
        %4794 = vmatpush1.msra.mxu0 0.0
        %4795 = vmatprep.subr.mxu0 0.0
        %4796 = vmatpush1.msra.mxu0 0.0
        %4797 = vmatprep.subr.mxu0 0.0
        %4798 = vmatpush1.msra.mxu0 0.0
        %4799 = vmatprep.subr.mxu0 0.0
        %4800 = vmatpush1.msra.mxu0 0.0
        %4801 = vmatprep.subr.mxu0 0.0
        %4802 = vmatpush1.msra.mxu0 0.0
        %4803 = vmatprep.subr.mxu0 0.0
        %4804 = vmatpush1.msra.mxu0 0.0
        %4805 = vmatprep.subr.mxu0 0.0
        %4806 = vmatpush1.msra.mxu0 0.0
        %4807 = vmatprep.subr.mxu0 0.0
        %4808 = vmatpush1.msra.mxu0 0.0
        %4809 = vmatprep.subr.mxu0 0.0
        %4810 = vmatpush1.msra.mxu0 0.0
        %4811 = vmatprep.subr.mxu0 0.0
        %4812 = vmatpush1.msra.mxu0 %v4773
        %4813 = vmatprep.subr.mxu0 0.0
        %4814 = vmatpush1.msra.mxu0 %v4772
        %4815 = vmatprep.subr.mxu0 0.0
        %4816 = vmatpush1.msra.mxu0 %v4771
        %4817 = vmatprep.subr.mxu0 0.0
        %4818 = vmatpush1.msra.mxu0 %v4770
        %4819 = vmatprep.subr.mxu0 0.0
        %4820 = vmatpush2.msra.mxu0 0.0
        %4821 = vmatprep.subr.mxu0 0.0
        %4822 = vmatpush2.msra.mxu0 0.0
        %4823 = vmatprep.subr.mxu0 0.0
        %4824 = vmatpush2.msra.mxu0 0.0
        %4825 = vmatprep.subr.mxu0 0.0
        %4826 = vmatpush2.msra.mxu0 0.0
        %4827 = vmatprep.subr.mxu0 0.0
        %4828 = vmatpush2.msra.mxu0 0.0
        %4829 = vmatprep.subr.mxu0 0.0
        %4830 = vmatpush2.msra.mxu0 0.0
        %4831 = vmatprep.subr.mxu0 0.0
        %4832 = vmatpush2.msra.mxu0 0.0
        %4833 = vmatprep.subr.mxu0 0.0
        %4834 = vmatpush2.msra.mxu0 0.0
        %4835 = vmatprep.subr.mxu0 0.0
        %4836 = vmatpush2.msra.mxu0 0.0
        %4837 = vmatprep.subr.mxu0 0.0
        %4838 = vmatpush2.msra.mxu0 0.0
        %4839 = vmatprep.subr.mxu0 0.0
        %4840 = vmatpush2.msra.mxu0 0.0
        %4841 = vmatprep.subr.mxu0 0.0
        %4842 = vmatpush2.msra.mxu0 0.0
        %4843 = vmatprep.subr.mxu0 0.0
        %4844 = vmatpush2.msra.mxu0 0.0
        %4845 = vmatprep.subr.mxu0 0.0
        %4846 = vmatpush2.msra.mxu0 0.0
        %4847 = vmatprep.subr.mxu0 0.0
        %4848 = vmatpush2.msra.mxu0 0.0
        %4849 = vmatprep.subr.mxu0 0.0
        %4850 = vmatpush2.msra.mxu0 0.0
        %4851 = vmatprep.mubr.f32.mxu0 0.0
        %4852 = vmatmul.mubr.f32.gmra.mxu0 %v4782
        %v4853 = vpop.f32.mrf.mxu0
        %v4854 = vadd.f32 %v4779, %v4853
        %v4855 = vpop.f32.mrf.mxu0
        %4856 = vmatprep.mubr.f32.mxu0 0.0
        %4857 = vmatmul.mubr.f32.gmra.mxu0 %v4785
        %v4858 = vpop.f32.mrf.mxu0
        %v4859 = vadd.f32 %v4779, %v4858
        %v4860 = vpop.f32.mrf.mxu0
        %4861 = vdwg.mxu0
        %v4862 = vadd.f32 %v1057, %v4854
        %v4863 = vadd.f32 %v1058, %v4859
        %v4864 = vld [vmem:[%s911] sm:$0x1]
        %v4865 = vld [vmem:[%s914] sm:$0x1]
        %v4866 = vsel %vm1070, %v4862, 0.0
        %4867 = vadd.xlane.f32.xlu0 %v4866
        %v4868 = vpop.xlane.xlu0 %4867
        %v4869 = vsel %vm1070, %v4863, 0.0
        %4870 = vadd.xlane.f32.xlu0 %v4869
        %v4871 = vpop.xlane.xlu0 %4870
        %v4872 = vrcp.pop 32.0
        %v4873 = vmul.f32 %v4868, %v4872
        %v4874 = vmul.f32 %v4871, %v4872
        %v4875 = vsub.f32 %v4862, %v4873
        %v4876 = vsub.f32 %v4863, %v4874
        %v4877 = vmul.f32 %v4875, %v4875
        %v4878 = vmul.f32 %v4876, %v4876
        %v4879 = vsel %vm1070, %v4877, 0.0
        %4880 = vadd.xlane.f32.xlu0 %v4879
        %v4881 = vpop.xlane.xlu0 %4880
        %v4882 = vsel %vm1070, %v4878, 0.0
        %4883 = vadd.xlane.f32.xlu0 %v4882
        %v4884 = vpop.xlane.xlu0 %4883
        %v4885 = vmul.f32 %v4881, %v4872
        %v4886 = vmul.f32 %v4884, %v4872
        %v4887 = vadd.f32 %v4885, 1e-05
        %v4888 = vadd.f32 %v4886, 1e-05
        %v4889 = vrsqrt.pop %v4887
        %v4890 = vrsqrt.pop %v4888
        %v4891 = vmul.f32 %v4875, %v4889
        %v4892 = vmul.f32 %v4876, %v4890
        %v4894 = vlaneseq
        %v4895 = vshrl.u32 %v4894, 7
        %v4896 = vsub.s32 0, %v4895
        %v4897 = vrot.slane %v4864, %v4896
        %v4899 = vmul.f32 %v4891, %v4897
        %v4900 = vmul.f32 %v4892, %v4897
        %v4902 = vlaneseq
        %v4903 = vshrl.u32 %v4902, 7
        %v4904 = vsub.s32 0, %v4903
        %v4905 = vrot.slane %v4865, %v4904
        %v4907 = vadd.f32 %v4899, %v4905
        %v4908 = vadd.f32 %v4900, %v4905
        %v4909 = vld [vmem:[%s919] sm:$0xff]
        %v4910 = vld [vmem:[%s919 + $0x8] sm:$0xff]
        %v4911 = vld [vmem:[%s919 + $0x10] sm:$0xff]
        %v4912 = vld [vmem:[%s919 + $0x18] sm:$0xff]
        %v4913 = vld [vmem:[%s922] sm:$0x1]
        %v4915 = vlaneseq
        %v4916 = vshrl.u32 %v4915, 7
        %v4917 = vsub.s32 0, %v4916
        %v4918 = vrot.slane %v4913, %v4917
        %v4921 = vsel %vm1070, %v4907, 0
        %v4924 = vsel %vm1070, %v4908, 0
        %4926 = vmatprep.subr.mxu0 0.0
        %4927 = vmatpush1.msra.mxu0 0.0
        %4928 = vmatprep.subr.mxu0 0.0
        %4929 = vmatpush1.msra.mxu0 0.0
        %4930 = vmatprep.subr.mxu0 0.0
        %4931 = vmatpush1.msra.mxu0 0.0
        %4932 = vmatprep.subr.mxu0 0.0
        %4933 = vmatpush1.msra.mxu0 0.0
        %4934 = vmatprep.subr.mxu0 0.0
        %4935 = vmatpush1.msra.mxu0 0.0
        %4936 = vmatprep.subr.mxu0 0.0
        %4937 = vmatpush1.msra.mxu0 0.0
        %4938 = vmatprep.subr.mxu0 0.0
        %4939 = vmatpush1.msra.mxu0 0.0
        %4940 = vmatprep.subr.mxu0 0.0
        %4941 = vmatpush1.msra.mxu0 0.0
        %4942 = vmatprep.subr.mxu0 0.0
        %4943 = vmatpush1.msra.mxu0 0.0
        %4944 = vmatprep.subr.mxu0 0.0
        %4945 = vmatpush1.msra.mxu0 0.0
        %4946 = vmatprep.subr.mxu0 0.0
        %4947 = vmatpush1.msra.mxu0 0.0
        %4948 = vmatprep.subr.mxu0 0.0
        %4949 = vmatpush1.msra.mxu0 0.0
        %4950 = vmatprep.subr.mxu0 0.0
        %4951 = vmatpush1.msra.mxu0 %v4912
        %4952 = vmatprep.subr.mxu0 0.0
        %4953 = vmatpush1.msra.mxu0 %v4911
        %4954 = vmatprep.subr.mxu0 0.0
        %4955 = vmatpush1.msra.mxu0 %v4910
        %4956 = vmatprep.subr.mxu0 0.0
        %4957 = vmatpush1.msra.mxu0 %v4909
        %4958 = vmatprep.subr.mxu0 0.0
        %4959 = vmatpush2.msra.mxu0 0.0
        %4960 = vmatprep.subr.mxu0 0.0
        %4961 = vmatpush2.msra.mxu0 0.0
        %4962 = vmatprep.subr.mxu0 0.0
        %4963 = vmatpush2.msra.mxu0 0.0
        %4964 = vmatprep.subr.mxu0 0.0
        %4965 = vmatpush2.msra.mxu0 0.0
        %4966 = vmatprep.subr.mxu0 0.0
        %4967 = vmatpush2.msra.mxu0 0.0
        %4968 = vmatprep.subr.mxu0 0.0
        %4969 = vmatpush2.msra.mxu0 0.0
        %4970 = vmatprep.subr.mxu0 0.0
        %4971 = vmatpush2.msra.mxu0 0.0
        %4972 = vmatprep.subr.mxu0 0.0
        %4973 = vmatpush2.msra.mxu0 0.0
        %4974 = vmatprep.subr.mxu0 0.0
        %4975 = vmatpush2.msra.mxu0 0.0
        %4976 = vmatprep.subr.mxu0 0.0
        %4977 = vmatpush2.msra.mxu0 0.0
        %4978 = vmatprep.subr.mxu0 0.0
        %4979 = vmatpush2.msra.mxu0 0.0
        %4980 = vmatprep.subr.mxu0 0.0
        %4981 = vmatpush2.msra.mxu0 0.0
        %4982 = vmatprep.subr.mxu0 0.0
        %4983 = vmatpush2.msra.mxu0 0.0
        %4984 = vmatprep.subr.mxu0 0.0
        %4985 = vmatpush2.msra.mxu0 0.0
        %4986 = vmatprep.subr.mxu0 0.0
        %4987 = vmatpush2.msra.mxu0 0.0
        %4988 = vmatprep.subr.mxu0 0.0
        %4989 = vmatpush2.msra.mxu0 0.0
        %4990 = vmatprep.mubr.f32.mxu0 0.0
        %4991 = vmatmul.mubr.f32.gmra.mxu0 %v4921
        %v4992 = vpop.f32.mrf.mxu0
        %v4993 = vadd.f32 %v4918, %v4992
        %v4994 = vpop.f32.mrf.mxu0
        %4995 = vmatprep.mubr.f32.mxu0 0.0
        %4996 = vmatmul.mubr.f32.gmra.mxu0 %v4924
        %v4997 = vpop.f32.mrf.mxu0
        %v4998 = vadd.f32 %v4918, %v4997
        %v4999 = vpop.f32.mrf.mxu0
        %5000 = vdwg.mxu0
        %v5001 = vmul.f32 %v4993, 0.5
        %v5002 = vmul.f32 %v4998, 0.5
        %v5003 = vmul.f32 %v4993, 0.70710677
        %v5004 = vmul.f32 %v4998, 0.70710677
        %v5005 = verf.f32.pop %v5003
        %v5006 = verf.f32.pop %v5004
        %v5007 = vadd.f32 %v5005, 1.0
        %v5008 = vadd.f32 %v5006, 1.0
        %v5009 = vmul.f32 %v5001, %v5007
        %v5010 = vmul.f32 %v5002, %v5008
        %v5011 = vld [vmem:[%s927] sm:$0xff]
        %v5012 = vld [vmem:[%s927 + $0x8] sm:$0xff]
        %v5013 = vld [vmem:[%s927 + $0x10] sm:$0xff]
        %v5014 = vld [vmem:[%s927 + $0x18] sm:$0xff]
        %v5015 = vld [vmem:[%s927 + $0x20] sm:$0xff]
        %v5016 = vld [vmem:[%s927 + $0x28] sm:$0xff]
        %v5017 = vld [vmem:[%s927 + $0x30] sm:$0xff]
        %v5018 = vld [vmem:[%s927 + $0x38] sm:$0xff]
        %v5019 = vld [vmem:[%s927 + $0x40] sm:$0xff]
        %v5020 = vld [vmem:[%s927 + $0x48] sm:$0xff]
        %v5021 = vld [vmem:[%s927 + $0x50] sm:$0xff]
        %v5022 = vld [vmem:[%s927 + $0x58] sm:$0xff]
        %v5023 = vld [vmem:[%s927 + $0x60] sm:$0xff]
        %v5024 = vld [vmem:[%s927 + $0x68] sm:$0xff]
        %v5025 = vld [vmem:[%s927 + $0x70] sm:$0xff]
        %v5026 = vld [vmem:[%s927 + $0x78] sm:$0xff]
        %v5027 = vld [vmem:[%s930] sm:$0x1]
        %v5029 = vlaneseq
        %v5030 = vshrl.u32 %v5029, 7
        %v5031 = vsub.s32 0, %v5030
        %v5032 = vrot.slane %v5027, %v5031
        %5034 = vmatprep.subr.mxu0 0.0
        %5035 = vmatpush1.msra.mxu0 %v5026
        %5036 = vmatprep.subr.mxu0 0.0
        %5037 = vmatpush1.msra.mxu0 %v5025
        %5038 = vmatprep.subr.mxu0 0.0
        %5039 = vmatpush1.msra.mxu0 %v5024
        %5040 = vmatprep.subr.mxu0 0.0
        %5041 = vmatpush1.msra.mxu0 %v5023
        %5042 = vmatprep.subr.mxu0 0.0
        %5043 = vmatpush1.msra.mxu0 %v5022
        %5044 = vmatprep.subr.mxu0 0.0
        %5045 = vmatpush1.msra.mxu0 %v5021
        %5046 = vmatprep.subr.mxu0 0.0
        %5047 = vmatpush1.msra.mxu0 %v5020
        %5048 = vmatprep.subr.mxu0 0.0
        %5049 = vmatpush1.msra.mxu0 %v5019
        %5050 = vmatprep.subr.mxu0 0.0
        %5051 = vmatpush1.msra.mxu0 %v5018
        %5052 = vmatprep.subr.mxu0 0.0
        %5053 = vmatpush1.msra.mxu0 %v5017
        %5054 = vmatprep.subr.mxu0 0.0
        %5055 = vmatpush1.msra.mxu0 %v5016
        %5056 = vmatprep.subr.mxu0 0.0
        %5057 = vmatpush1.msra.mxu0 %v5015
        %5058 = vmatprep.subr.mxu0 0.0
        %5059 = vmatpush1.msra.mxu0 %v5014
        %5060 = vmatprep.subr.mxu0 0.0
        %5061 = vmatpush1.msra.mxu0 %v5013
        %5062 = vmatprep.subr.mxu0 0.0
        %5063 = vmatpush1.msra.mxu0 %v5012
        %5064 = vmatprep.subr.mxu0 0.0
        %5065 = vmatpush1.msra.mxu0 %v5011
        %5066 = vmatprep.subr.mxu0 0.0
        %5067 = vmatpush2.msra.mxu0 0.0
        %5068 = vmatprep.subr.mxu0 0.0
        %5069 = vmatpush2.msra.mxu0 0.0
        %5070 = vmatprep.subr.mxu0 0.0
        %5071 = vmatpush2.msra.mxu0 0.0
        %5072 = vmatprep.subr.mxu0 0.0
        %5073 = vmatpush2.msra.mxu0 0.0
        %5074 = vmatprep.subr.mxu0 0.0
        %5075 = vmatpush2.msra.mxu0 0.0
        %5076 = vmatprep.subr.mxu0 0.0
        %5077 = vmatpush2.msra.mxu0 0.0
        %5078 = vmatprep.subr.mxu0 0.0
        %5079 = vmatpush2.msra.mxu0 0.0
        %5080 = vmatprep.subr.mxu0 0.0
        %5081 = vmatpush2.msra.mxu0 0.0
        %5082 = vmatprep.subr.mxu0 0.0
        %5083 = vmatpush2.msra.mxu0 0.0
        %5084 = vmatprep.subr.mxu0 0.0
        %5085 = vmatpush2.msra.mxu0 0.0
        %5086 = vmatprep.subr.mxu0 0.0
        %5087 = vmatpush2.msra.mxu0 0.0
        %5088 = vmatprep.subr.mxu0 0.0
        %5089 = vmatpush2.msra.mxu0 0.0
        %5090 = vmatprep.subr.mxu0 0.0
        %5091 = vmatpush2.msra.mxu0 0.0
        %5092 = vmatprep.subr.mxu0 0.0
        %5093 = vmatpush2.msra.mxu0 0.0
        %5094 = vmatprep.subr.mxu0 0.0
        %5095 = vmatpush2.msra.mxu0 0.0
        %5096 = vmatprep.subr.mxu0 0.0
        %5097 = vmatpush2.msra.mxu0 0.0
        %5098 = vmatprep.mubr.f32.mxu0 0.0
        %5099 = vmatmul.mubr.f32.gmra.mxu0 %v5009
        %v5100 = vpop.f32.mrf.mxu0
        %v5101 = vadd.f32 %v5032, %v5100
        %v5102 = vpop.f32.mrf.mxu0
        %5103 = vmatprep.mubr.f32.mxu0 0.0
        %5104 = vmatmul.mubr.f32.gmra.mxu0 %v5010
        %v5105 = vpop.f32.mrf.mxu0
        %v5106 = vadd.f32 %v5032, %v5105
        %v5107 = vpop.f32.mrf.mxu0
        %5108 = vdwg.mxu0
        %v5109 = vadd.f32 %v4907, %v5101
        %v5110 = vadd.f32 %v4908, %v5106
        %v5111 = vld [vmem:[%s933] sm:$0x1]
        %v5112 = vld [vmem:[%s936] sm:$0x1]
        %v5113 = vsel %vm1070, %v5109, 0.0
        %5114 = vadd.xlane.f32.xlu0 %v5113
        %v5115 = vpop.xlane.xlu0 %5114
        %v5116 = vsel %vm1070, %v5110, 0.0
        %5117 = vadd.xlane.f32.xlu0 %v5116
        %v5118 = vpop.xlane.xlu0 %5117
        %v5119 = vmul.f32 %v5115, %v4872
        %v5120 = vmul.f32 %v5118, %v4872
        %v5121 = vsub.f32 %v5109, %v5119
        %v5122 = vsub.f32 %v5110, %v5120
        %v5123 = vmul.f32 %v5121, %v5121
        %v5124 = vmul.f32 %v5122, %v5122
        %v5125 = vsel %vm1070, %v5123, 0.0
        %5126 = vadd.xlane.f32.xlu0 %v5125
        %v5127 = vpop.xlane.xlu0 %5126
        %v5128 = vsel %vm1070, %v5124, 0.0
        %5129 = vadd.xlane.f32.xlu0 %v5128
        %v5130 = vpop.xlane.xlu0 %5129
        %v5131 = vmul.f32 %v5127, %v4872
        %v5132 = vmul.f32 %v5130, %v4872
        %v5133 = vadd.f32 %v5131, 1e-05
        %v5134 = vadd.f32 %v5132, 1e-05
        %v5135 = vrsqrt.pop %v5133
        %v5136 = vrsqrt.pop %v5134
        %v5137 = vmul.f32 %v5121, %v5135
        %v5138 = vmul.f32 %v5122, %v5136
        %v5140 = vlaneseq
        %v5141 = vshrl.u32 %v5140, 7
        %v5142 = vsub.s32 0, %v5141
        %v5143 = vrot.slane %v5111, %v5142
        %v5145 = vmul.f32 %v5137, %v5143
        %v5146 = vmul.f32 %v5138, %v5143
        %v5148 = vlaneseq
        %v5149 = vshrl.u32 %v5148, 7
        %v5150 = vsub.s32 0, %v5149
        %v5151 = vrot.slane %v5112, %v5150
        %v5153 = vadd.f32 %v5145, %v5151
        %v5154 = vadd.f32 %v5146, %v5151
        %5155 = vst.msk [vmem:[#allocation2] sm:$0xff] %vm1070, %v5153
        %5156 = vst.msk [vmem:[#allocation2 + $0x8] sm:$0xff] %vm1070, %v5154
        %p5157 = scmp.eq.s32.totalorder %s35, 1
        // Predicated region
        $region117: #{tpu_custom_call.1} parent=111 // pred_check
          %p5158 = pneg %p5157
        $region118: #{tpu_custom_call.1} parent=111 // pred_check_branch
          %5160 = sbr.rel (%p5158) target = $region120
        $region119: #{tpu_custom_call.1} parent=111 // pred_region
          %v5161 = vsel %vm1070, %v5153, 0.0
          %v5162 = vrot.slane %v5161, 4
          %v5163 = vadd.f32 %v5161, %v5162
          %v5164 = vrot.slane %v5163, 2
          %v5165 = vadd.f32 %v5163, %v5164
          %v5166 = vrot.slane %v5165, 1
          %v5167 = vadd.f32 %v5165, %v5166
          %v5168 = vsel %vm1070, %v5154, 0.0
          %v5169 = vrot.slane %v5168, 4
          %v5170 = vadd.f32 %v5168, %v5169
          %v5171 = vrot.slane %v5170, 2
          %v5172 = vadd.f32 %v5170, %v5171
          %v5173 = vrot.slane %v5172, 1
          %v5174 = vadd.f32 %v5172, %v5173
          %v5175 = vrcp.pop 8.0
          %v5176 = vmul.f32 %v5167, %v5175
          %v5177 = vmul.f32 %v5174, %v5175
          %v5178 = vld [vmem:[%s19] sm:$0x1]
          %v5179 = vld [vmem:[%s20] sm:$0x1]
          %vm5182 = vcmask 1041409
          %v5183 = vsel %vm5182, %v5177, %v5176
          %vm5185 = vcmask 254976
          %v5186 = vsel %vm5185, %v5183, 0.0
          %5187 = vadd.xlane.f32.xlu0 %v5186
          %v5188 = vpop.xlane.xlu0 %5187
          %v5189 = vmul.f32 %v5188, %v4872
          %v5191 = vrot.slane %v5189, 1
          %v5194 = vsub.f32 %v5176, %v5189
          %v5195 = vsub.f32 %v5177, %v5191
          %v5196 = vmul.f32 %v5194, %v5194
          %v5197 = vmul.f32 %v5195, %v5195
          %v5200 = vrot.slane %v5197, 7
          %v5201 = vsel %vm5182, %v5200, %v5196
          %v5203 = vsel %vm5185, %v5201, 0.0
          %5204 = vadd.xlane.f32.xlu0 %v5203
          %v5205 = vpop.xlane.xlu0 %5204
          %v5206 = vmul.f32 %v5205, %v4872
          %v5207 = vadd.f32 %v5206, 1e-05
          %v5208 = vrsqrt.pop %v5207
          %v5210 = vrot.slane %v5208, 1
          %v5213 = vmul.f32 %v5194, %v5208
          %v5214 = vmul.f32 %v5195, %v5210
          %v5216 = vlaneseq
          %v5217 = vshrl.u32 %v5216, 7
          %v5218 = vsub.s32 0, %v5217
          %v5219 = vrot.slane %v5178, %v5218
          %v5221 = vmul.f32 %v5213, %v5219
          %v5222 = vmul.f32 %v5214, %v5219
          %v5224 = vlaneseq
          %v5225 = vshrl.u32 %v5224, 7
          %v5226 = vsub.s32 0, %v5225
          %v5227 = vrot.slane %v5179, %v5226
          %v5229 = vadd.f32 %v5221, %v5227
          %v5230 = vadd.f32 %v5222, %v5227
          %v5231 = vld [vmem:[%s21] sm:$0xff]
          %v5232 = vld [vmem:[%s21 + $0x8] sm:$0xff]
          %v5233 = vld [vmem:[%s21 + $0x10] sm:$0xff]
          %v5234 = vld [vmem:[%s21 + $0x18] sm:$0xff]
          %v5235 = vld [vmem:[%s22] sm:$0x1]
          %v5237 = vlaneseq
          %v5238 = vshrl.u32 %v5237, 7
          %v5239 = vsub.s32 0, %v5238
          %v5240 = vrot.slane %v5235, %v5239
          %v5244 = vrot.slane %v5230, 7
          %v5245 = vsel %vm5182, %v5244, %v5229
          %v5246 = vsel %vm1070, %v5245, 0
          %5248 = vmatprep.subr.mxu0 0.0
          %5249 = vmatpush1.msra.mxu0 0.0
          %5250 = vmatprep.subr.mxu0 0.0
          %5251 = vmatpush1.msra.mxu0 0.0
          %5252 = vmatprep.subr.mxu0 0.0
          %5253 = vmatpush1.msra.mxu0 0.0
          %5254 = vmatprep.subr.mxu0 0.0
          %5255 = vmatpush1.msra.mxu0 0.0
          %5256 = vmatprep.subr.mxu0 0.0
          %5257 = vmatpush1.msra.mxu0 0.0
          %5258 = vmatprep.subr.mxu0 0.0
          %5259 = vmatpush1.msra.mxu0 0.0
          %5260 = vmatprep.subr.mxu0 0.0
          %5261 = vmatpush1.msra.mxu0 0.0
          %5262 = vmatprep.subr.mxu0 0.0
          %5263 = vmatpush1.msra.mxu0 0.0
          %5264 = vmatprep.subr.mxu0 0.0
          %5265 = vmatpush1.msra.mxu0 0.0
          %5266 = vmatprep.subr.mxu0 0.0
          %5267 = vmatpush1.msra.mxu0 0.0
          %5268 = vmatprep.subr.mxu0 0.0
          %5269 = vmatpush1.msra.mxu0 0.0
          %5270 = vmatprep.subr.mxu0 0.0
          %5271 = vmatpush1.msra.mxu0 0.0
          %5272 = vmatprep.subr.mxu0 0.0
          %5273 = vmatpush1.msra.mxu0 %v5234
          %5274 = vmatprep.subr.mxu0 0.0
          %5275 = vmatpush1.msra.mxu0 %v5233
          %5276 = vmatprep.subr.mxu0 0.0
          %5277 = vmatpush1.msra.mxu0 %v5232
          %5278 = vmatprep.subr.mxu0 0.0
          %5279 = vmatpush1.msra.mxu0 %v5231
          %5280 = vmatprep.subr.mxu0 0.0
          %5281 = vmatpush2.msra.mxu0 0.0
          %5282 = vmatprep.subr.mxu0 0.0
          %5283 = vmatpush2.msra.mxu0 0.0
          %5284 = vmatprep.subr.mxu0 0.0
          %5285 = vmatpush2.msra.mxu0 0.0
          %5286 = vmatprep.subr.mxu0 0.0
          %5287 = vmatpush2.msra.mxu0 0.0
          %5288 = vmatprep.subr.mxu0 0.0
          %5289 = vmatpush2.msra.mxu0 0.0
          %5290 = vmatprep.subr.mxu0 0.0
          %5291 = vmatpush2.msra.mxu0 0.0
          %5292 = vmatprep.subr.mxu0 0.0
          %5293 = vmatpush2.msra.mxu0 0.0
          %5294 = vmatprep.subr.mxu0 0.0
          %5295 = vmatpush2.msra.mxu0 0.0
          %5296 = vmatprep.subr.mxu0 0.0
          %5297 = vmatpush2.msra.mxu0 0.0
          %5298 = vmatprep.subr.mxu0 0.0
          %5299 = vmatpush2.msra.mxu0 0.0
          %5300 = vmatprep.subr.mxu0 0.0
          %5301 = vmatpush2.msra.mxu0 0.0
          %5302 = vmatprep.subr.mxu0 0.0
          %5303 = vmatpush2.msra.mxu0 0.0
          %5304 = vmatprep.subr.mxu0 0.0
          %5305 = vmatpush2.msra.mxu0 0.0
          %5306 = vmatprep.subr.mxu0 0.0
          %5307 = vmatpush2.msra.mxu0 0.0
          %5308 = vmatprep.subr.mxu0 0.0
          %5309 = vmatpush2.msra.mxu0 0.0
          %5310 = vmatprep.subr.mxu0 0.0
          %5311 = vmatpush2.msra.mxu0 0.0
          %5312 = vmatprep.mubr.f32.mxu0 0.0
          %5313 = vmatmul.mubr.f32.gmra.mxu0 %v5246
          %v5314 = vpop.f32.mrf.mxu0
          %v5315 = vadd.f32 %v5240, %v5314
          %v5316 = vpop.f32.mrf.mxu0
          %5317 = vdwg.mxu0
          %vm5318 = vcmask 74752
          %5319 = vst.msk [vmem:[#allocation3] sm:$0x3] %vm5318, %v5315
        $region120: #{tpu_custom_call.1} parent=111 // pred_fallthru
          _
        // Predicated region
        $region121: #{tpu_custom_call.1} parent=111 // pred_check
          %p5320 = pneg %p611
        $region122: #{tpu_custom_call.1} parent=111 // pred_check_branch
          %5322 = sbr.rel (%p5320) target = $region124
        $region123: #{tpu_custom_call.1} parent=111 // pred_region
          %s5324 = ssub.s32 32, 32
          %5325 = vsyncadd [#allocation4], %s5324
          %s5327 = sshll.u32 [#allocation3], 4
          %s5328 = int_to_ptr.vmem [resolvable:$true] %s5327
          %5330 = dma.vmem_to_hbm [thread:$0]  %s5328, 32, %s23, [#allocation4]
        $region124: #{tpu_custom_call.1} parent=111 // pred_fallthru
          _
        // Predicated region
        $region125: #{tpu_custom_call.1} parent=111 // pred_check
          %p5331 = pneg %p611
        $region126: #{tpu_custom_call.1} parent=111 // pred_check_branch
          %5333 = sbr.rel (%p5331) target = $region128
        $region127: #{tpu_custom_call.1} parent=111 // pred_region
          %5334 = dma.done [#allocation4], 32
        $region128: #{tpu_custom_call.1} parent=111 // pred_fallthru
          _
      $region112: #{tpu_custom_call.1} parent=5 // pred_fallthru
        _
      %p5335 = scmp.le.s32.totalorder 2, %s30
      // Predicated region
      $region129: #{tpu_custom_call.1} parent=5 // pred_check
        %p5336 = pneg %p5335
      $region130: #{tpu_custom_call.1} parent=5 // pred_check_branch
        %5338 = sbr.rel (%p5336) target = $region132
      $region131: #{tpu_custom_call.1} parent=5 // pred_region
        %s5339 = ssub.s32 %s30, 2
      $region132: #{tpu_custom_call.1} parent=5 // pred_fallthru
        _
    $region6: #{tpu_custom_call.1} parent=1 // loop_footer
      %s34 = sadd.s32 1, %s30
    $region7: #{tpu_custom_call.1} parent=1 // loop_footer_branch
      %29 = sbr.rel target = $region3
    $region8: #{tpu_custom_call.1} parent=1 // loop_exit
      _
    %5340 = vsyncpa [#allocation4], 1
    %s5341 = scalar_lea.sflag [#allocation4], 1
    %5342 = vsyncpa %s5341, 1

</llo_original>
